<compile_context>
chip_gen: v6e
topology: v6e:2x2x1
jax: 0.10.0
libtpu: 0.0.40
codegen_flags: <defaults>
</compile_context>

<pallas_src>
import functools
import math

import jax
import jax.numpy as jnp
from jax import lax
from jax.experimental import pallas as pl
from jax.experimental.pallas import tpu as pltpu


def _self_attention_kernel(x_ref, wqkv_ref, wo_ref, bo_ref, o_ref,
                           qkv_ref, ctx_ref, *, bb, t, heads, head_dim):
    # x_ref:    (bb*t, e)      bf16, a block of bb batch elements, rows flattened
    # wqkv_ref: (e, 3*h*e)     bf16, fused [K | Q(pre-scaled) | V] projection weights
    # wo_ref:   (h*e, e)       bf16, output projection (pre-transposed nn.Linear weight)
    # bo_ref:   (1, e)         f32,  output projection bias
    # o_ref:    (bb*t, e)      f32
    # qkv_ref:  (bb*t, 3*h*e)  bf16 VMEM scratch (fused QKV activations)
    # ctx_ref:  (bb*t, h*e)    bf16 VMEM scratch (per-head contexts, concatenated)
    h, d = heads, head_dim
    he = h * d

    # Fused QKV projection: one wide MXU pass (M = bb*t, N = 3*h*e), f32 accumulation,
    # stored once as bf16 so every per-head operand below is a free static ref slice.
    qkv_ref[...] = jnp.dot(
        x_ref[...], wqkv_ref[...], preferred_element_type=jnp.float32
    ).astype(jnp.bfloat16)

    # Per batch element / per head attention (tiny static loops, ref slices only).
    for j in range(bb):
        row = j * t
        for hi in range(h):
            k_h = qkv_ref[pl.ds(row, t), pl.ds(hi * d, d)]            # (t, d) bf16
            q_h = qkv_ref[pl.ds(row, t), pl.ds(he + hi * d, d)]       # (t, d) bf16 (already /sqrt(e))
            v_h = qkv_ref[pl.ds(row, t), pl.ds(2 * he + hi * d, d)]   # (t, d) bf16

            # scores = q_h @ k_h^T without materializing the transpose.
            scores = lax.dot_general(
                q_h, k_h,
                dimension_numbers=(((1,), (1,)), ((), ())),
                preferred_element_type=jnp.float32)                    # (t, t) f32

            # Numerically stable softmax over the key axis (f32 on VPU/EUP).
            scores = scores - jnp.max(scores, axis=-1, keepdims=True)
            p = jnp.exp(scores)
            attn = (p * pl.reciprocal(jnp.sum(p, axis=-1, keepdims=True),
                                      approx=True)).astype(jnp.bfloat16)

            # Context for this (batch, head) goes straight into the ctx scratch at a
            # lane-aligned column offset; the out-projection is then ONE K=h*e matmul.
            ctx_ref[pl.ds(row, t), pl.ds(hi * d, d)] = jnp.dot(
                attn, v_h, preferred_element_type=jnp.float32
            ).astype(jnp.bfloat16)

    # Single fused output projection: (bb*t, h*e) @ (h*e, e), full contraction depth.
    out = jnp.dot(ctx_ref[...], wo_ref[...], preferred_element_type=jnp.float32)
    o_ref[...] = (out + bo_ref[...]).astype(o_ref.dtype)


def _pick_batch_block(b, t, target_rows=512):
    """Largest divisor of b such that bb*t <= target_rows rows per grid step
    (fills the MXU M dimension without blowing up VMEM); 1 for long sequences."""
    bb = 1
    for cand in range(1, b + 1):
        if b % cand == 0 and cand * t <= target_rows:
            bb = cand
    return bb


def _vmem_limit_bytes(m, t, e, heads):
    """Scoped-VMEM budget derived from block/scratch sizes, with headroom."""
    he = heads * e
    bf16, f32 = 2, 4
    total = (
        m * e * bf16 * 2          # x block (double-buffered)
        + e * 3 * he * bf16       # W_qkv (single-buffered, constant index)
        + he * e * bf16           # W_out (single-buffered)
        + 8 * 128 * f32           # bias tile (padded)
        + m * e * f32 * 2         # output block (double-buffered)
        + m * 3 * he * bf16       # qkv scratch
        + m * he * bf16           # ctx scratch
        + m * 3 * he * f32        # f32 qkv matmul result before bf16 cast
        + 4 * t * t * f32         # per-head score / softmax temporaries
        + m * e * f32             # out-projection f32 result
    )
    # Generous compiler-scratch headroom; capped at v7x's 64 MiB physical VMEM.
    return min(int(total * 1.5) + (8 << 20), 64 << 20)


def self_attention(x, w_keys, w_queries, w_values, w_out, b_out, *, heads):
    """x: [b, t, e]; w_keys/w_queries/w_values: [e, h*e]; w_out: [h*e, e]; b_out: [e].

    Weight matrices are pre-transposed nn.Linear weights (kernel computes x @ W).
    """
    b, t, e = x.shape
    he = heads * e
    assert w_keys.shape == (e, he) and w_queries.shape == (e, he) and w_values.shape == (e, he)
    assert w_out.shape == (he, e) and b_out.shape == (e,)

    # One-time parameter transforms:
    #  * fold the 1/sqrt(e) query scale into the Q weight block,
    #  * fuse [K | Q | V] into one (e, 3*h*e) weight,
    #  * cast all MXU operands to bf16 (halves weight/activation DMA bytes too).
    scale = 1.0 / math.sqrt(e)
    w_qkv = jnp.concatenate([w_keys, w_queries * scale, w_values], axis=1)  # (e, 3*h*e)

    bb = _pick_batch_block(b, t)
    m = bb * t

    # Flatten batch into rows so each grid step feeds a tall (bb*t, e) slab to the MXU.
    x2 = x.reshape(b * t, e).astype(jnp.bfloat16)
    w_qkv_bf = w_qkv.astype(jnp.bfloat16)
    w_out_bf = w_out.astype(jnp.bfloat16)
    b_out_2d = b_out.reshape(1, e).astype(jnp.float32)

    kernel = functools.partial(_self_attention_kernel,
                               bb=bb, t=t, heads=heads, head_dim=e)

    # Output kept in x.dtype (f32) to match the PyTorch module exactly.
    out2 = pl.pallas_call(
        kernel,
        out_shape=jax.ShapeDtypeStruct((b * t, e), x.dtype),
        grid_spec=pltpu.PrefetchScalarGridSpec(
            num_scalar_prefetch=0,
            grid=(b // bb,),
            in_specs=[
                pl.BlockSpec((m, e), lambda i: (i, 0)),                    # x rows block
                pl.BlockSpec((e, 3 * he), lambda i: (0, 0),
                             pipeline_mode=pl.Buffered(1)),                # W_qkv (resident)
                pl.BlockSpec((he, e), lambda i: (0, 0),
                             pipeline_mode=pl.Buffered(1)),                # W_out (resident)
                pl.BlockSpec((1, e), lambda i: (0, 0),
                             pipeline_mode=pl.Buffered(1)),                # output bias
            ],
            out_specs=pl.BlockSpec((m, e), lambda i: (i, 0)),              # lane-dense (e=128)
            scratch_shapes=[
                pltpu.VMEM((m, 3 * he), jnp.bfloat16),                     # fused QKV activations
                pltpu.VMEM((m, he), jnp.bfloat16),                         # concatenated contexts
            ],
        ),
        compiler_params=pltpu.CompilerParams(
            dimension_semantics=("parallel",),
            vmem_limit_bytes=_vmem_limit_bytes(m, t, e, heads),
        ),
    )(x2, w_qkv_bf, w_out_bf, b_out_2d)

    return out2.reshape(b, t, e)


def _reference(x, w_keys, w_queries, w_values, w_out, b_out, *, heads):
    """Pure-JAX f32 reference matching the PyTorch module (mask=None path)."""
    b, t, e = x.shape
    h = heads
    k = (x @ w_keys).reshape(b, t, h, e).transpose(0, 2, 1, 3)
    q = (x @ w_queries).reshape(b, t, h, e).transpose(0, 2, 1, 3) / math.sqrt(e)
    v = (x @ w_values).reshape(b, t, h, e).transpose(0, 2, 1, 3)
    dot = jnp.einsum("bhtd,bhsd->bhts", q, k)
    attn = jax.nn.softmax(dot, axis=-1)
    ctx = jnp.einsum("bhts,bhsd->bhtd", attn, v)
    ctx = jnp.transpose(ctx, (0, 2, 1, 3)).reshape(b, t, h * e)
    return ctx @ w_out + b_out


if __name__ == "__main__":
    # Small shapes consistent with the module defaults: emb_size=128, heads=6.
    b, t, e, heads = 2, 8, 128, 6
    he = heads * e

    key = jax.random.PRNGKey(0)
    kx, kk, kq, kv, ko, kb = jax.random.split(key, 6)

    x = jax.random.normal(kx, (b, t, e), dtype=jnp.float32)

    # Deterministic init mimicking nn.Linear (uniform in [-1/sqrt(fan_in), 1/sqrt(fan_in)]),
    # stored pre-transposed as [in, out].
    bound = 1.0 / math.sqrt(e)
    w_keys = jax.random.uniform(kk, (e, he), jnp.float32, -bound, bound)
    w_queries = jax.random.uniform(kq, (e, he), jnp.float32, -bound, bound)
    w_values = jax.random.uniform(kv, (e, he), jnp.float32, -bound, bound)
    obound = 1.0 / math.sqrt(he)
    w_out = jax.random.uniform(ko, (he, e), jnp.float32, -obound, obound)
    b_out = jax.random.uniform(kb, (e,), jnp.float32, -obound, obound)

    out = self_attention(x, w_keys, w_queries, w_values, w_out, b_out, heads=heads)
    out = jax.block_until_ready(out)

    ref = _reference(x, w_keys, w_queries, w_values, w_out, b_out, heads=heads)
    assert out.shape == (b, t, e), out.shape
    # bf16 MXU operands (f32 accumulation) + approx reciprocal => relaxed tolerance vs f32 ref.
    assert jnp.allclose(out, ref, atol=3e-2, rtol=3e-2), "mismatch vs reference"

    print("KERNEL_OK")
</pallas_src>

<mosaic_0001>
module attributes {stable_mosaic.version = 11 : i64} {
  func.func @_self_attention_kernel(%arg0: i32, %arg1: memref<16x128xbf16, #tpu.memory_space<vmem>>, %arg2: memref<128x2304xbf16, #tpu.memory_space<vmem>>, %arg3: memref<768x128xbf16, #tpu.memory_space<vmem>>, %arg4: memref<1x128xf32, #tpu.memory_space<vmem>>, %arg5: memref<16x128xf32, #tpu.memory_space<vmem>>, %arg6: memref<16x2304xbf16, #tpu.memory_space<vmem>>, %arg7: memref<16x768xbf16, #tpu.memory_space<vmem>>) attributes {dimension_semantics = [#tpu.dimension_semantics<parallel>], iteration_bounds = array<i64: 1>, scalar_prefetch = 0 : i64, scratch_operands = 2 : i64, tpu.core_type = #tpu.core_type<tc>, window_params = [{transform_indices = @transform_0, window_bounds = array<i64: 16, 128>}, {pipeline_mode = #tpu.pipeline_mode<synchronous>, transform_indices = @transform_1, window_bounds = array<i64: 128, 2304>}, {pipeline_mode = #tpu.pipeline_mode<synchronous>, transform_indices = @transform_2, window_bounds = array<i64: 768, 128>}, {pipeline_mode = #tpu.pipeline_mode<synchronous>, transform_indices = @transform_3, window_bounds = array<i64: 1, 128>}, {transform_indices = @transform_4, window_bounds = array<i64: 16, 128>}]} {
    %c0 = arith.constant 0 : index
    %c0_0 = arith.constant 0 : index
    %0 = vector.load %arg1[%c0, %c0_0] : memref<16x128xbf16, #tpu.memory_space<vmem>>, vector<16x128xbf16>
    %c0_1 = arith.constant 0 : index
    %c0_2 = arith.constant 0 : index
    %1 = vector.load %arg2[%c0_1, %c0_2] : memref<128x2304xbf16, #tpu.memory_space<vmem>>, vector<128x2304xbf16>
    %cst = arith.constant dense<0.000000e+00> : vector<16x2304xf32>
    %2 = tpu.matmul %0, %1, %cst {dimension_numbers = #tpu.dot_dimension_numbers<[1], [0], [0], [1], [0, 0, 1, 1], [], []>} : vector<16x128xbf16>, vector<128x2304xbf16>, vector<16x2304xf32> -> vector<16x2304xf32>
    %3 = arith.truncf %2 : vector<16x2304xf32> to vector<16x2304xbf16>
    %c0_3 = arith.constant 0 : index
    %c0_4 = arith.constant 0 : index
    %4 = vector.load %arg6[%c0_3, %c0_4] : memref<16x2304xbf16, #tpu.memory_space<vmem>>, vector<16x2304xbf16>
    tpu.vector_store %arg6[%c0_3, %c0_4], %3 {strides = array<i32>} : memref<16x2304xbf16, #tpu.memory_space<vmem>>, vector<16x2304xbf16>,
    %c0_5 = arith.constant 0 : index
    %c0_6 = arith.constant 0 : index
    %5 = vector.load %arg6[%c0_5, %c0_6] : memref<16x2304xbf16, #tpu.memory_space<vmem>>, vector<8x128xbf16>
    %c0_7 = arith.constant 0 : index
    %c768 = arith.constant 768 : index
    %6 = vector.load %arg6[%c0_7, %c768] : memref<16x2304xbf16, #tpu.memory_space<vmem>>, vector<8x128xbf16>
    %c0_8 = arith.constant 0 : index
    %c1536 = arith.constant 1536 : index
    %7 = vector.load %arg6[%c0_8, %c1536] : memref<16x2304xbf16, #tpu.memory_space<vmem>>, vector<8x128xbf16>
    %cst_9 = arith.constant dense<0.000000e+00> : vector<8x8xf32>
    %8 = tpu.matmul %6, %5, %cst_9 {dimension_numbers = #tpu.dot_dimension_numbers<[1], [1], [0], [0], [0, 0, 1, 0], [], []>} : vector<8x128xbf16>, vector<8x128xbf16>, vector<8x8xf32> -> vector<8x8xf32>
    %cst_10 = arith.constant dense<0xFF800000> : vector<8xf32>
    %9 = vector.multi_reduction <maximumf>, %8, %cst_10 [1] : vector<8x8xf32> to vector<8xf32>
    %10 = vector.shape_cast %9 : vector<8xf32> to vector<8x1xf32>
    %11 = vector.broadcast %10 : vector<8x1xf32> to vector<8x8xf32>
    %12 = arith.subf %8, %11 : vector<8x8xf32>
    %13 = math.exp %12 : vector<8x8xf32>
    %cst_11 = arith.constant dense<0.000000e+00> : vector<8xf32>
    %14 = vector.multi_reduction <add>, %13, %cst_11 [1] : vector<8x8xf32> to vector<8xf32>
    %15 = vector.shape_cast %14 : vector<8xf32> to vector<8x1xf32>
    %16 = tpu.reciprocal %15 {approx = true} : vector<8x1xf32> -> vector<8x1xf32>
    %17 = vector.broadcast %16 : vector<8x1xf32> to vector<8x8xf32>
    %18 = arith.mulf %13, %17 : vector<8x8xf32>
    %19 = arith.truncf %18 : vector<8x8xf32> to vector<8x8xbf16>
    %cst_12 = arith.constant dense<0.000000e+00> : vector<8x128xf32>
    %20 = tpu.matmul %19, %7, %cst_12 {dimension_numbers = #tpu.dot_dimension_numbers<[1], [0], [0], [1], [0, 0, 1, 1], [], []>} : vector<8x8xbf16>, vector<8x128xbf16>, vector<8x128xf32> -> vector<8x128xf32>
    %21 = arith.truncf %20 : vector<8x128xf32> to vector<8x128xbf16>
    %c0_13 = arith.constant 0 : index
    %c0_14 = arith.constant 0 : index
    %22 = vector.load %arg7[%c0_13, %c0_14] : memref<16x768xbf16, #tpu.memory_space<vmem>>, vector<8x128xbf16>
    tpu.vector_store %arg7[%c0_13, %c0_14], %21 {strides = array<i32>} : memref<16x768xbf16, #tpu.memory_space<vmem>>, vector<8x128xbf16>,
    %c0_15 = arith.constant 0 : index
    %c128 = arith.constant 128 : index
    %23 = vector.load %arg6[%c0_15, %c128] : memref<16x2304xbf16, #tpu.memory_space<vmem>>, vector<8x128xbf16>
    %c0_16 = arith.constant 0 : index
    %c896 = arith.constant 896 : index
    %24 = vector.load %arg6[%c0_16, %c896] : memref<16x2304xbf16, #tpu.memory_space<vmem>>, vector<8x128xbf16>
    %c0_17 = arith.constant 0 : index
    %c1664 = arith.constant 1664 : index
    %25 = vector.load %arg6[%c0_17, %c1664] : memref<16x2304xbf16, #tpu.memory_space<vmem>>, vector<8x128xbf16>
    %cst_18 = arith.constant dense<0.000000e+00> : vector<8x8xf32>
    %26 = tpu.matmul %24, %23, %cst_18 {dimension_numbers = #tpu.dot_dimension_numbers<[1], [1], [0], [0], [0, 0, 1, 0], [], []>} : vector<8x128xbf16>, vector<8x128xbf16>, vector<8x8xf32> -> vector<8x8xf32>
    %cst_19 = arith.constant dense<0xFF800000> : vector<8xf32>
    %27 = vector.multi_reduction <maximumf>, %26, %cst_19 [1] : vector<8x8xf32> to vector<8xf32>
    %28 = vector.shape_cast %27 : vector<8xf32> to vector<8x1xf32>
    %29 = vector.broadcast %28 : vector<8x1xf32> to vector<8x8xf32>
    %30 = arith.subf %26, %29 : vector<8x8xf32>
    %31 = math.exp %30 : vector<8x8xf32>
    %cst_20 = arith.constant dense<0.000000e+00> : vector<8xf32>
    %32 = vector.multi_reduction <add>, %31, %cst_20 [1] : vector<8x8xf32> to vector<8xf32>
    %33 = vector.shape_cast %32 : vector<8xf32> to vector<8x1xf32>
    %34 = tpu.reciprocal %33 {approx = true} : vector<8x1xf32> -> vector<8x1xf32>
    %35 = vector.broadcast %34 : vector<8x1xf32> to vector<8x8xf32>
    %36 = arith.mulf %31, %35 : vector<8x8xf32>
    %37 = arith.truncf %36 : vector<8x8xf32> to vector<8x8xbf16>
    %cst_21 = arith.constant dense<0.000000e+00> : vector<8x128xf32>
    %38 = tpu.matmul %37, %25, %cst_21 {dimension_numbers = #tpu.dot_dimension_numbers<[1], [0], [0], [1], [0, 0, 1, 1], [], []>} : vector<8x8xbf16>, vector<8x128xbf16>, vector<8x128xf32> -> vector<8x128xf32>
    %39 = arith.truncf %38 : vector<8x128xf32> to vector<8x128xbf16>
    %c0_22 = arith.constant 0 : index
    %c128_23 = arith.constant 128 : index
    %40 = vector.load %arg7[%c0_22, %c128_23] : memref<16x768xbf16, #tpu.memory_space<vmem>>, vector<8x128xbf16>
    tpu.vector_store %arg7[%c0_22, %c128_23], %39 {strides = array<i32>} : memref<16x768xbf16, #tpu.memory_space<vmem>>, vector<8x128xbf16>,
    %c0_24 = arith.constant 0 : index
    %c256 = arith.constant 256 : index
    %41 = vector.load %arg6[%c0_24, %c256] : memref<16x2304xbf16, #tpu.memory_space<vmem>>, vector<8x128xbf16>
    %c0_25 = arith.constant 0 : index
    %c1024 = arith.constant 1024 : index
    %42 = vector.load %arg6[%c0_25, %c1024] : memref<16x2304xbf16, #tpu.memory_space<vmem>>, vector<8x128xbf16>
    %c0_26 = arith.constant 0 : index
    %c1792 = arith.constant 1792 : index
    %43 = vector.load %arg6[%c0_26, %c1792] : memref<16x2304xbf16, #tpu.memory_space<vmem>>, vector<8x128xbf16>
    %cst_27 = arith.constant dense<0.000000e+00> : vector<8x8xf32>
    %44 = tpu.matmul %42, %41, %cst_27 {dimension_numbers = #tpu.dot_dimension_numbers<[1], [1], [0], [0], [0, 0, 1, 0], [], []>} : vector<8x128xbf16>, vector<8x128xbf16>, vector<8x8xf32> -> vector<8x8xf32>
    %cst_28 = arith.constant dense<0xFF800000> : vector<8xf32>
    %45 = vector.multi_reduction <maximumf>, %44, %cst_28 [1] : vector<8x8xf32> to vector<8xf32>
    %46 = vector.shape_cast %45 : vector<8xf32> to vector<8x1xf32>
    %47 = vector.broadcast %46 : vector<8x1xf32> to vector<8x8xf32>
    %48 = arith.subf %44, %47 : vector<8x8xf32>
    %49 = math.exp %48 : vector<8x8xf32>
    %cst_29 = arith.constant dense<0.000000e+00> : vector<8xf32>
    %50 = vector.multi_reduction <add>, %49, %cst_29 [1] : vector<8x8xf32> to vector<8xf32>
    %51 = vector.shape_cast %50 : vector<8xf32> to vector<8x1xf32>
    %52 = tpu.reciprocal %51 {approx = true} : vector<8x1xf32> -> vector<8x1xf32>
    %53 = vector.broadcast %52 : vector<8x1xf32> to vector<8x8xf32>
    %54 = arith.mulf %49, %53 : vector<8x8xf32>
    %55 = arith.truncf %54 : vector<8x8xf32> to vector<8x8xbf16>
    %cst_30 = arith.constant dense<0.000000e+00> : vector<8x128xf32>
    %56 = tpu.matmul %55, %43, %cst_30 {dimension_numbers = #tpu.dot_dimension_numbers<[1], [0], [0], [1], [0, 0, 1, 1], [], []>} : vector<8x8xbf16>, vector<8x128xbf16>, vector<8x128xf32> -> vector<8x128xf32>
    %57 = arith.truncf %56 : vector<8x128xf32> to vector<8x128xbf16>
    %c0_31 = arith.constant 0 : index
    %c256_32 = arith.constant 256 : index
    %58 = vector.load %arg7[%c0_31, %c256_32] : memref<16x768xbf16, #tpu.memory_space<vmem>>, vector<8x128xbf16>
    tpu.vector_store %arg7[%c0_31, %c256_32], %57 {strides = array<i32>} : memref<16x768xbf16, #tpu.memory_space<vmem>>, vector<8x128xbf16>,
    %c0_33 = arith.constant 0 : index
    %c384 = arith.constant 384 : index
    %59 = vector.load %arg6[%c0_33, %c384] : memref<16x2304xbf16, #tpu.memory_space<vmem>>, vector<8x128xbf16>
    %c0_34 = arith.constant 0 : index
    %c1152 = arith.constant 1152 : index
    %60 = vector.load %arg6[%c0_34, %c1152] : memref<16x2304xbf16, #tpu.memory_space<vmem>>, vector<8x128xbf16>
    %c0_35 = arith.constant 0 : index
    %c1920 = arith.constant 1920 : index
    %61 = vector.load %arg6[%c0_35, %c1920] : memref<16x2304xbf16, #tpu.memory_space<vmem>>, vector<8x128xbf16>
    %cst_36 = arith.constant dense<0.000000e+00> : vector<8x8xf32>
    %62 = tpu.matmul %60, %59, %cst_36 {dimension_numbers = #tpu.dot_dimension_numbers<[1], [1], [0], [0], [0, 0, 1, 0], [], []>} : vector<8x128xbf16>, vector<8x128xbf16>, vector<8x8xf32> -> vector<8x8xf32>
    %cst_37 = arith.constant dense<0xFF800000> : vector<8xf32>
    %63 = vector.multi_reduction <maximumf>, %62, %cst_37 [1] : vector<8x8xf32> to vector<8xf32>
    %64 = vector.shape_cast %63 : vector<8xf32> to vector<8x1xf32>
    %65 = vector.broadcast %64 : vector<8x1xf32> to vector<8x8xf32>
    %66 = arith.subf %62, %65 : vector<8x8xf32>
    %67 = math.exp %66 : vector<8x8xf32>
    %cst_38 = arith.constant dense<0.000000e+00> : vector<8xf32>
    %68 = vector.multi_reduction <add>, %67, %cst_38 [1] : vector<8x8xf32> to vector<8xf32>
    %69 = vector.shape_cast %68 : vector<8xf32> to vector<8x1xf32>
    %70 = tpu.reciprocal %69 {approx = true} : vector<8x1xf32> -> vector<8x1xf32>
    %71 = vector.broadcast %70 : vector<8x1xf32> to vector<8x8xf32>
    %72 = arith.mulf %67, %71 : vector<8x8xf32>
    %73 = arith.truncf %72 : vector<8x8xf32> to vector<8x8xbf16>
    %cst_39 = arith.constant dense<0.000000e+00> : vector<8x128xf32>
    %74 = tpu.matmul %73, %61, %cst_39 {dimension_numbers = #tpu.dot_dimension_numbers<[1], [0], [0], [1], [0, 0, 1, 1], [], []>} : vector<8x8xbf16>, vector<8x128xbf16>, vector<8x128xf32> -> vector<8x128xf32>
    %75 = arith.truncf %74 : vector<8x128xf32> to vector<8x128xbf16>
    %c0_40 = arith.constant 0 : index
    %c384_41 = arith.constant 384 : index
    %76 = vector.load %arg7[%c0_40, %c384_41] : memref<16x768xbf16, #tpu.memory_space<vmem>>, vector<8x128xbf16>
    tpu.vector_store %arg7[%c0_40, %c384_41], %75 {strides = array<i32>} : memref<16x768xbf16, #tpu.memory_space<vmem>>, vector<8x128xbf16>,
    %c0_42 = arith.constant 0 : index
    %c512 = arith.constant 512 : index
    %77 = vector.load %arg6[%c0_42, %c512] : memref<16x2304xbf16, #tpu.memory_space<vmem>>, vector<8x128xbf16>
    %c0_43 = arith.constant 0 : index
    %c1280 = arith.constant 1280 : index
    %78 = vector.load %arg6[%c0_43, %c1280] : memref<16x2304xbf16, #tpu.memory_space<vmem>>, vector<8x128xbf16>
    %c0_44 = arith.constant 0 : index
    %c2048 = arith.constant 2048 : index
    %79 = vector.load %arg6[%c0_44, %c2048] : memref<16x2304xbf16, #tpu.memory_space<vmem>>, vector<8x128xbf16>
    %cst_45 = arith.constant dense<0.000000e+00> : vector<8x8xf32>
    %80 = tpu.matmul %78, %77, %cst_45 {dimension_numbers = #tpu.dot_dimension_numbers<[1], [1], [0], [0], [0, 0, 1, 0], [], []>} : vector<8x128xbf16>, vector<8x128xbf16>, vector<8x8xf32> -> vector<8x8xf32>
    %cst_46 = arith.constant dense<0xFF800000> : vector<8xf32>
    %81 = vector.multi_reduction <maximumf>, %80, %cst_46 [1] : vector<8x8xf32> to vector<8xf32>
    %82 = vector.shape_cast %81 : vector<8xf32> to vector<8x1xf32>
    %83 = vector.broadcast %82 : vector<8x1xf32> to vector<8x8xf32>
    %84 = arith.subf %80, %83 : vector<8x8xf32>
    %85 = math.exp %84 : vector<8x8xf32>
    %cst_47 = arith.constant dense<0.000000e+00> : vector<8xf32>
    %86 = vector.multi_reduction <add>, %85, %cst_47 [1] : vector<8x8xf32> to vector<8xf32>
    %87 = vector.shape_cast %86 : vector<8xf32> to vector<8x1xf32>
    %88 = tpu.reciprocal %87 {approx = true} : vector<8x1xf32> -> vector<8x1xf32>
    %89 = vector.broadcast %88 : vector<8x1xf32> to vector<8x8xf32>
    %90 = arith.mulf %85, %89 : vector<8x8xf32>
    %91 = arith.truncf %90 : vector<8x8xf32> to vector<8x8xbf16>
    %cst_48 = arith.constant dense<0.000000e+00> : vector<8x128xf32>
    %92 = tpu.matmul %91, %79, %cst_48 {dimension_numbers = #tpu.dot_dimension_numbers<[1], [0], [0], [1], [0, 0, 1, 1], [], []>} : vector<8x8xbf16>, vector<8x128xbf16>, vector<8x128xf32> -> vector<8x128xf32>
    %93 = arith.truncf %92 : vector<8x128xf32> to vector<8x128xbf16>
    %c0_49 = arith.constant 0 : index
    %c512_50 = arith.constant 512 : index
    %94 = vector.load %arg7[%c0_49, %c512_50] : memref<16x768xbf16, #tpu.memory_space<vmem>>, vector<8x128xbf16>
    tpu.vector_store %arg7[%c0_49, %c512_50], %93 {strides = array<i32>} : memref<16x768xbf16, #tpu.memory_space<vmem>>, vector<8x128xbf16>,
    %c0_51 = arith.constant 0 : index
    %c640 = arith.constant 640 : index
    %95 = vector.load %arg6[%c0_51, %c640] : memref<16x2304xbf16, #tpu.memory_space<vmem>>, vector<8x128xbf16>
    %c0_52 = arith.constant 0 : index
    %c1408 = arith.constant 1408 : index
    %96 = vector.load %arg6[%c0_52, %c1408] : memref<16x2304xbf16, #tpu.memory_space<vmem>>, vector<8x128xbf16>
    %c0_53 = arith.constant 0 : index
    %c2176 = arith.constant 2176 : index
    %97 = vector.load %arg6[%c0_53, %c2176] : memref<16x2304xbf16, #tpu.memory_space<vmem>>, vector<8x128xbf16>
    %cst_54 = arith.constant dense<0.000000e+00> : vector<8x8xf32>
    %98 = tpu.matmul %96, %95, %cst_54 {dimension_numbers = #tpu.dot_dimension_numbers<[1], [1], [0], [0], [0, 0, 1, 0], [], []>} : vector<8x128xbf16>, vector<8x128xbf16>, vector<8x8xf32> -> vector<8x8xf32>
    %cst_55 = arith.constant dense<0xFF800000> : vector<8xf32>
    %99 = vector.multi_reduction <maximumf>, %98, %cst_55 [1] : vector<8x8xf32> to vector<8xf32>
    %100 = vector.shape_cast %99 : vector<8xf32> to vector<8x1xf32>
    %101 = vector.broadcast %100 : vector<8x1xf32> to vector<8x8xf32>
    %102 = arith.subf %98, %101 : vector<8x8xf32>
    %103 = math.exp %102 : vector<8x8xf32>
    %cst_56 = arith.constant dense<0.000000e+00> : vector<8xf32>
    %104 = vector.multi_reduction <add>, %103, %cst_56 [1] : vector<8x8xf32> to vector<8xf32>
    %105 = vector.shape_cast %104 : vector<8xf32> to vector<8x1xf32>
    %106 = tpu.reciprocal %105 {approx = true} : vector<8x1xf32> -> vector<8x1xf32>
    %107 = vector.broadcast %106 : vector<8x1xf32> to vector<8x8xf32>
    %108 = arith.mulf %103, %107 : vector<8x8xf32>
    %109 = arith.truncf %108 : vector<8x8xf32> to vector<8x8xbf16>
    %cst_57 = arith.constant dense<0.000000e+00> : vector<8x128xf32>
    %110 = tpu.matmul %109, %97, %cst_57 {dimension_numbers = #tpu.dot_dimension_numbers<[1], [0], [0], [1], [0, 0, 1, 1], [], []>} : vector<8x8xbf16>, vector<8x128xbf16>, vector<8x128xf32> -> vector<8x128xf32>
    %111 = arith.truncf %110 : vector<8x128xf32> to vector<8x128xbf16>
    %c0_58 = arith.constant 0 : index
    %c640_59 = arith.constant 640 : index
    %112 = vector.load %arg7[%c0_58, %c640_59] : memref<16x768xbf16, #tpu.memory_space<vmem>>, vector<8x128xbf16>
    tpu.vector_store %arg7[%c0_58, %c640_59], %111 {strides = array<i32>} : memref<16x768xbf16, #tpu.memory_space<vmem>>, vector<8x128xbf16>,
    %c8 = arith.constant 8 : index
    %c0_60 = arith.constant 0 : index
    %113 = vector.load %arg6[%c8, %c0_60] : memref<16x2304xbf16, #tpu.memory_space<vmem>>, vector<8x128xbf16>
    %c8_61 = arith.constant 8 : index
    %c768_62 = arith.constant 768 : index
    %114 = vector.load %arg6[%c8_61, %c768_62] : memref<16x2304xbf16, #tpu.memory_space<vmem>>, vector<8x128xbf16>
    %c8_63 = arith.constant 8 : index
    %c1536_64 = arith.constant 1536 : index
    %115 = vector.load %arg6[%c8_63, %c1536_64] : memref<16x2304xbf16, #tpu.memory_space<vmem>>, vector<8x128xbf16>
    %cst_65 = arith.constant dense<0.000000e+00> : vector<8x8xf32>
    %116 = tpu.matmul %114, %113, %cst_65 {dimension_numbers = #tpu.dot_dimension_numbers<[1], [1], [0], [0], [0, 0, 1, 0], [], []>} : vector<8x128xbf16>, vector<8x128xbf16>, vector<8x8xf32> -> vector<8x8xf32>
    %cst_66 = arith.constant dense<0xFF800000> : vector<8xf32>
    %117 = vector.multi_reduction <maximumf>, %116, %cst_66 [1] : vector<8x8xf32> to vector<8xf32>
    %118 = vector.shape_cast %117 : vector<8xf32> to vector<8x1xf32>
    %119 = vector.broadcast %118 : vector<8x1xf32> to vector<8x8xf32>
    %120 = arith.subf %116, %119 : vector<8x8xf32>
    %121 = math.exp %120 : vector<8x8xf32>
    %cst_67 = arith.constant dense<0.000000e+00> : vector<8xf32>
    %122 = vector.multi_reduction <add>, %121, %cst_67 [1] : vector<8x8xf32> to vector<8xf32>
    %123 = vector.shape_cast %122 : vector<8xf32> to vector<8x1xf32>
    %124 = tpu.reciprocal %123 {approx = true} : vector<8x1xf32> -> vector<8x1xf32>
    %125 = vector.broadcast %124 : vector<8x1xf32> to vector<8x8xf32>
    %126 = arith.mulf %121, %125 : vector<8x8xf32>
    %127 = arith.truncf %126 : vector<8x8xf32> to vector<8x8xbf16>
    %cst_68 = arith.constant dense<0.000000e+00> : vector<8x128xf32>
    %128 = tpu.matmul %127, %115, %cst_68 {dimension_numbers = #tpu.dot_dimension_numbers<[1], [0], [0], [1], [0, 0, 1, 1], [], []>} : vector<8x8xbf16>, vector<8x128xbf16>, vector<8x128xf32> -> vector<8x128xf32>
    %129 = arith.truncf %128 : vector<8x128xf32> to vector<8x128xbf16>
    %c8_69 = arith.constant 8 : index
    %c0_70 = arith.constant 0 : index
    %130 = vector.load %arg7[%c8_69, %c0_70] : memref<16x768xbf16, #tpu.memory_space<vmem>>, vector<8x128xbf16>
    tpu.vector_store %arg7[%c8_69, %c0_70], %129 {strides = array<i32>} : memref<16x768xbf16, #tpu.memory_space<vmem>>, vector<8x128xbf16>,
    %c8_71 = arith.constant 8 : index
    %c128_72 = arith.constant 128 : index
    %131 = vector.load %arg6[%c8_71, %c128_72] : memref<16x2304xbf16, #tpu.memory_space<vmem>>, vector<8x128xbf16>
    %c8_73 = arith.constant 8 : index
    %c896_74 = arith.constant 896 : index
    %132 = vector.load %arg6[%c8_73, %c896_74] : memref<16x2304xbf16, #tpu.memory_space<vmem>>, vector<8x128xbf16>
    %c8_75 = arith.constant 8 : index
    %c1664_76 = arith.constant 1664 : index
    %133 = vector.load %arg6[%c8_75, %c1664_76] : memref<16x2304xbf16, #tpu.memory_space<vmem>>, vector<8x128xbf16>
    %cst_77 = arith.constant dense<0.000000e+00> : vector<8x8xf32>
    %134 = tpu.matmul %132, %131, %cst_77 {dimension_numbers = #tpu.dot_dimension_numbers<[1], [1], [0], [0], [0, 0, 1, 0], [], []>} : vector<8x128xbf16>, vector<8x128xbf16>, vector<8x8xf32> -> vector<8x8xf32>
    %cst_78 = arith.constant dense<0xFF800000> : vector<8xf32>
    %135 = vector.multi_reduction <maximumf>, %134, %cst_78 [1] : vector<8x8xf32> to vector<8xf32>
    %136 = vector.shape_cast %135 : vector<8xf32> to vector<8x1xf32>
    %137 = vector.broadcast %136 : vector<8x1xf32> to vector<8x8xf32>
    %138 = arith.subf %134, %137 : vector<8x8xf32>
    %139 = math.exp %138 : vector<8x8xf32>
    %cst_79 = arith.constant dense<0.000000e+00> : vector<8xf32>
    %140 = vector.multi_reduction <add>, %139, %cst_79 [1] : vector<8x8xf32> to vector<8xf32>
    %141 = vector.shape_cast %140 : vector<8xf32> to vector<8x1xf32>
    %142 = tpu.reciprocal %141 {approx = true} : vector<8x1xf32> -> vector<8x1xf32>
    %143 = vector.broadcast %142 : vector<8x1xf32> to vector<8x8xf32>
    %144 = arith.mulf %139, %143 : vector<8x8xf32>
    %145 = arith.truncf %144 : vector<8x8xf32> to vector<8x8xbf16>
    %cst_80 = arith.constant dense<0.000000e+00> : vector<8x128xf32>
    %146 = tpu.matmul %145, %133, %cst_80 {dimension_numbers = #tpu.dot_dimension_numbers<[1], [0], [0], [1], [0, 0, 1, 1], [], []>} : vector<8x8xbf16>, vector<8x128xbf16>, vector<8x128xf32> -> vector<8x128xf32>
    %147 = arith.truncf %146 : vector<8x128xf32> to vector<8x128xbf16>
    %c8_81 = arith.constant 8 : index
    %c128_82 = arith.constant 128 : index
    %148 = vector.load %arg7[%c8_81, %c128_82] : memref<16x768xbf16, #tpu.memory_space<vmem>>, vector<8x128xbf16>
    tpu.vector_store %arg7[%c8_81, %c128_82], %147 {strides = array<i32>} : memref<16x768xbf16, #tpu.memory_space<vmem>>, vector<8x128xbf16>,
    %c8_83 = arith.constant 8 : index
    %c256_84 = arith.constant 256 : index
    %149 = vector.load %arg6[%c8_83, %c256_84] : memref<16x2304xbf16, #tpu.memory_space<vmem>>, vector<8x128xbf16>
    %c8_85 = arith.constant 8 : index
    %c1024_86 = arith.constant 1024 : index
    %150 = vector.load %arg6[%c8_85, %c1024_86] : memref<16x2304xbf16, #tpu.memory_space<vmem>>, vector<8x128xbf16>
    %c8_87 = arith.constant 8 : index
    %c1792_88 = arith.constant 1792 : index
    %151 = vector.load %arg6[%c8_87, %c1792_88] : memref<16x2304xbf16, #tpu.memory_space<vmem>>, vector<8x128xbf16>
    %cst_89 = arith.constant dense<0.000000e+00> : vector<8x8xf32>
    %152 = tpu.matmul %150, %149, %cst_89 {dimension_numbers = #tpu.dot_dimension_numbers<[1], [1], [0], [0], [0, 0, 1, 0], [], []>} : vector<8x128xbf16>, vector<8x128xbf16>, vector<8x8xf32> -> vector<8x8xf32>
    %cst_90 = arith.constant dense<0xFF800000> : vector<8xf32>
    %153 = vector.multi_reduction <maximumf>, %152, %cst_90 [1] : vector<8x8xf32> to vector<8xf32>
    %154 = vector.shape_cast %153 : vector<8xf32> to vector<8x1xf32>
    %155 = vector.broadcast %154 : vector<8x1xf32> to vector<8x8xf32>
    %156 = arith.subf %152, %155 : vector<8x8xf32>
    %157 = math.exp %156 : vector<8x8xf32>
    %cst_91 = arith.constant dense<0.000000e+00> : vector<8xf32>
    %158 = vector.multi_reduction <add>, %157, %cst_91 [1] : vector<8x8xf32> to vector<8xf32>
    %159 = vector.shape_cast %158 : vector<8xf32> to vector<8x1xf32>
    %160 = tpu.reciprocal %159 {approx = true} : vector<8x1xf32> -> vector<8x1xf32>
    %161 = vector.broadcast %160 : vector<8x1xf32> to vector<8x8xf32>
    %162 = arith.mulf %157, %161 : vector<8x8xf32>
    %163 = arith.truncf %162 : vector<8x8xf32> to vector<8x8xbf16>
    %cst_92 = arith.constant dense<0.000000e+00> : vector<8x128xf32>
    %164 = tpu.matmul %163, %151, %cst_92 {dimension_numbers = #tpu.dot_dimension_numbers<[1], [0], [0], [1], [0, 0, 1, 1], [], []>} : vector<8x8xbf16>, vector<8x128xbf16>, vector<8x128xf32> -> vector<8x128xf32>
    %165 = arith.truncf %164 : vector<8x128xf32> to vector<8x128xbf16>
    %c8_93 = arith.constant 8 : index
    %c256_94 = arith.constant 256 : index
    %166 = vector.load %arg7[%c8_93, %c256_94] : memref<16x768xbf16, #tpu.memory_space<vmem>>, vector<8x128xbf16>
    tpu.vector_store %arg7[%c8_93, %c256_94], %165 {strides = array<i32>} : memref<16x768xbf16, #tpu.memory_space<vmem>>, vector<8x128xbf16>,
    %c8_95 = arith.constant 8 : index
    %c384_96 = arith.constant 384 : index
    %167 = vector.load %arg6[%c8_95, %c384_96] : memref<16x2304xbf16, #tpu.memory_space<vmem>>, vector<8x128xbf16>
    %c8_97 = arith.constant 8 : index
    %c1152_98 = arith.constant 1152 : index
    %168 = vector.load %arg6[%c8_97, %c1152_98] : memref<16x2304xbf16, #tpu.memory_space<vmem>>, vector<8x128xbf16>
    %c8_99 = arith.constant 8 : index
    %c1920_100 = arith.constant 1920 : index
    %169 = vector.load %arg6[%c8_99, %c1920_100] : memref<16x2304xbf16, #tpu.memory_space<vmem>>, vector<8x128xbf16>
    %cst_101 = arith.constant dense<0.000000e+00> : vector<8x8xf32>
    %170 = tpu.matmul %168, %167, %cst_101 {dimension_numbers = #tpu.dot_dimension_numbers<[1], [1], [0], [0], [0, 0, 1, 0], [], []>} : vector<8x128xbf16>, vector<8x128xbf16>, vector<8x8xf32> -> vector<8x8xf32>
    %cst_102 = arith.constant dense<0xFF800000> : vector<8xf32>
    %171 = vector.multi_reduction <maximumf>, %170, %cst_102 [1] : vector<8x8xf32> to vector<8xf32>
    %172 = vector.shape_cast %171 : vector<8xf32> to vector<8x1xf32>
    %173 = vector.broadcast %172 : vector<8x1xf32> to vector<8x8xf32>
    %174 = arith.subf %170, %173 : vector<8x8xf32>
    %175 = math.exp %174 : vector<8x8xf32>
    %cst_103 = arith.constant dense<0.000000e+00> : vector<8xf32>
    %176 = vector.multi_reduction <add>, %175, %cst_103 [1] : vector<8x8xf32> to vector<8xf32>
    %177 = vector.shape_cast %176 : vector<8xf32> to vector<8x1xf32>
    %178 = tpu.reciprocal %177 {approx = true} : vector<8x1xf32> -> vector<8x1xf32>
    %179 = vector.broadcast %178 : vector<8x1xf32> to vector<8x8xf32>
    %180 = arith.mulf %175, %179 : vector<8x8xf32>
    %181 = arith.truncf %180 : vector<8x8xf32> to vector<8x8xbf16>
    %cst_104 = arith.constant dense<0.000000e+00> : vector<8x128xf32>
    %182 = tpu.matmul %181, %169, %cst_104 {dimension_numbers = #tpu.dot_dimension_numbers<[1], [0], [0], [1], [0, 0, 1, 1], [], []>} : vector<8x8xbf16>, vector<8x128xbf16>, vector<8x128xf32> -> vector<8x128xf32>
    %183 = arith.truncf %182 : vector<8x128xf32> to vector<8x128xbf16>
    %c8_105 = arith.constant 8 : index
    %c384_106 = arith.constant 384 : index
    %184 = vector.load %arg7[%c8_105, %c384_106] : memref<16x768xbf16, #tpu.memory_space<vmem>>, vector<8x128xbf16>
    tpu.vector_store %arg7[%c8_105, %c384_106], %183 {strides = array<i32>} : memref<16x768xbf16, #tpu.memory_space<vmem>>, vector<8x128xbf16>,
    %c8_107 = arith.constant 8 : index
    %c512_108 = arith.constant 512 : index
    %185 = vector.load %arg6[%c8_107, %c512_108] : memref<16x2304xbf16, #tpu.memory_space<vmem>>, vector<8x128xbf16>
    %c8_109 = arith.constant 8 : index
    %c1280_110 = arith.constant 1280 : index
    %186 = vector.load %arg6[%c8_109, %c1280_110] : memref<16x2304xbf16, #tpu.memory_space<vmem>>, vector<8x128xbf16>
    %c8_111 = arith.constant 8 : index
    %c2048_112 = arith.constant 2048 : index
    %187 = vector.load %arg6[%c8_111, %c2048_112] : memref<16x2304xbf16, #tpu.memory_space<vmem>>, vector<8x128xbf16>
    %cst_113 = arith.constant dense<0.000000e+00> : vector<8x8xf32>
    %188 = tpu.matmul %186, %185, %cst_113 {dimension_numbers = #tpu.dot_dimension_numbers<[1], [1], [0], [0], [0, 0, 1, 0], [], []>} : vector<8x128xbf16>, vector<8x128xbf16>, vector<8x8xf32> -> vector<8x8xf32>
    %cst_114 = arith.constant dense<0xFF800000> : vector<8xf32>
    %189 = vector.multi_reduction <maximumf>, %188, %cst_114 [1] : vector<8x8xf32> to vector<8xf32>
    %190 = vector.shape_cast %189 : vector<8xf32> to vector<8x1xf32>
    %191 = vector.broadcast %190 : vector<8x1xf32> to vector<8x8xf32>
    %192 = arith.subf %188, %191 : vector<8x8xf32>
    %193 = math.exp %192 : vector<8x8xf32>
    %cst_115 = arith.constant dense<0.000000e+00> : vector<8xf32>
    %194 = vector.multi_reduction <add>, %193, %cst_115 [1] : vector<8x8xf32> to vector<8xf32>
    %195 = vector.shape_cast %194 : vector<8xf32> to vector<8x1xf32>
    %196 = tpu.reciprocal %195 {approx = true} : vector<8x1xf32> -> vector<8x1xf32>
    %197 = vector.broadcast %196 : vector<8x1xf32> to vector<8x8xf32>
    %198 = arith.mulf %193, %197 : vector<8x8xf32>
    %199 = arith.truncf %198 : vector<8x8xf32> to vector<8x8xbf16>
    %cst_116 = arith.constant dense<0.000000e+00> : vector<8x128xf32>
    %200 = tpu.matmul %199, %187, %cst_116 {dimension_numbers = #tpu.dot_dimension_numbers<[1], [0], [0], [1], [0, 0, 1, 1], [], []>} : vector<8x8xbf16>, vector<8x128xbf16>, vector<8x128xf32> -> vector<8x128xf32>
    %201 = arith.truncf %200 : vector<8x128xf32> to vector<8x128xbf16>
    %c8_117 = arith.constant 8 : index
    %c512_118 = arith.constant 512 : index
    %202 = vector.load %arg7[%c8_117, %c512_118] : memref<16x768xbf16, #tpu.memory_space<vmem>>, vector<8x128xbf16>
    tpu.vector_store %arg7[%c8_117, %c512_118], %201 {strides = array<i32>} : memref<16x768xbf16, #tpu.memory_space<vmem>>, vector<8x128xbf16>,
    %c8_119 = arith.constant 8 : index
    %c640_120 = arith.constant 640 : index
    %203 = vector.load %arg6[%c8_119, %c640_120] : memref<16x2304xbf16, #tpu.memory_space<vmem>>, vector<8x128xbf16>
    %c8_121 = arith.constant 8 : index
    %c1408_122 = arith.constant 1408 : index
    %204 = vector.load %arg6[%c8_121, %c1408_122] : memref<16x2304xbf16, #tpu.memory_space<vmem>>, vector<8x128xbf16>
    %c8_123 = arith.constant 8 : index
    %c2176_124 = arith.constant 2176 : index
    %205 = vector.load %arg6[%c8_123, %c2176_124] : memref<16x2304xbf16, #tpu.memory_space<vmem>>, vector<8x128xbf16>
    %cst_125 = arith.constant dense<0.000000e+00> : vector<8x8xf32>
    %206 = tpu.matmul %204, %203, %cst_125 {dimension_numbers = #tpu.dot_dimension_numbers<[1], [1], [0], [0], [0, 0, 1, 0], [], []>} : vector<8x128xbf16>, vector<8x128xbf16>, vector<8x8xf32> -> vector<8x8xf32>
    %cst_126 = arith.constant dense<0xFF800000> : vector<8xf32>
    %207 = vector.multi_reduction <maximumf>, %206, %cst_126 [1] : vector<8x8xf32> to vector<8xf32>
    %208 = vector.shape_cast %207 : vector<8xf32> to vector<8x1xf32>
    %209 = vector.broadcast %208 : vector<8x1xf32> to vector<8x8xf32>
    %210 = arith.subf %206, %209 : vector<8x8xf32>
    %211 = math.exp %210 : vector<8x8xf32>
    %cst_127 = arith.constant dense<0.000000e+00> : vector<8xf32>
    %212 = vector.multi_reduction <add>, %211, %cst_127 [1] : vector<8x8xf32> to vector<8xf32>
    %213 = vector.shape_cast %212 : vector<8xf32> to vector<8x1xf32>
    %214 = tpu.reciprocal %213 {approx = true} : vector<8x1xf32> -> vector<8x1xf32>
    %215 = vector.broadcast %214 : vector<8x1xf32> to vector<8x8xf32>
    %216 = arith.mulf %211, %215 : vector<8x8xf32>
    %217 = arith.truncf %216 : vector<8x8xf32> to vector<8x8xbf16>
    %cst_128 = arith.constant dense<0.000000e+00> : vector<8x128xf32>
    %218 = tpu.matmul %217, %205, %cst_128 {dimension_numbers = #tpu.dot_dimension_numbers<[1], [0], [0], [1], [0, 0, 1, 1], [], []>} : vector<8x8xbf16>, vector<8x128xbf16>, vector<8x128xf32> -> vector<8x128xf32>
    %219 = arith.truncf %218 : vector<8x128xf32> to vector<8x128xbf16>
    %c8_129 = arith.constant 8 : index
    %c640_130 = arith.constant 640 : index
    %220 = vector.load %arg7[%c8_129, %c640_130] : memref<16x768xbf16, #tpu.memory_space<vmem>>, vector<8x128xbf16>
    tpu.vector_store %arg7[%c8_129, %c640_130], %219 {strides = array<i32>} : memref<16x768xbf16, #tpu.memory_space<vmem>>, vector<8x128xbf16>,
    %c0_131 = arith.constant 0 : index
    %c0_132 = arith.constant 0 : index
    %221 = vector.load %arg7[%c0_131, %c0_132] : memref<16x768xbf16, #tpu.memory_space<vmem>>, vector<16x768xbf16>
    %c0_133 = arith.constant 0 : index
    %c0_134 = arith.constant 0 : index
    %222 = vector.load %arg3[%c0_133, %c0_134] : memref<768x128xbf16, #tpu.memory_space<vmem>>, vector<768x128xbf16>
    %cst_135 = arith.constant dense<0.000000e+00> : vector<16x128xf32>
    %223 = tpu.matmul %221, %222, %cst_135 {dimension_numbers = #tpu.dot_dimension_numbers<[1], [0], [0], [1], [0, 0, 1, 1], [], []>} : vector<16x768xbf16>, vector<768x128xbf16>, vector<16x128xf32> -> vector<16x128xf32>
    %c0_136 = arith.constant 0 : index
    %c0_137 = arith.constant 0 : index
    %224 = vector.load %arg4[%c0_136, %c0_137] : memref<1x128xf32, #tpu.memory_space<vmem>>, vector<1x128xf32>
    %225 = vector.broadcast %224 : vector<1x128xf32> to vector<16x128xf32>
    %226 = arith.addf %223, %225 : vector<16x128xf32>
    %c0_138 = arith.constant 0 : index
    %c0_139 = arith.constant 0 : index
    %227 = vector.load %arg5[%c0_138, %c0_139] : memref<16x128xf32, #tpu.memory_space<vmem>>, vector<16x128xf32>
    tpu.vector_store %arg5[%c0_138, %c0_139], %226 {strides = array<i32>} : memref<16x128xf32, #tpu.memory_space<vmem>>, vector<16x128xf32>,
    return
  }
  func.func @transform_0(%arg0: i32) -> (i32, i32) {
    %c0_i32 = arith.constant 0 : i32
    %c0_i32_0 = arith.constant 0 : i32
    return %arg0, %c0_i32 : i32, i32
  }
  func.func @transform_1(%arg0: i32) -> (i32, i32) {
    %c0_i32 = arith.constant 0 : i32
    %c0_i32_0 = arith.constant 0 : i32
    %c0_i32_1 = arith.constant 0 : i32
    return %c0_i32, %c0_i32_0 : i32, i32
  }
  func.func @transform_2(%arg0: i32) -> (i32, i32) {
    %c0_i32 = arith.constant 0 : i32
    %c0_i32_0 = arith.constant 0 : i32
    %c0_i32_1 = arith.constant 0 : i32
    return %c0_i32, %c0_i32_0 : i32, i32
  }
  func.func @transform_3(%arg0: i32) -> (i32, i32) {
    %c0_i32 = arith.constant 0 : i32
    %c0_i32_0 = arith.constant 0 : i32
    %c0_i32_1 = arith.constant 0 : i32
    return %c0_i32, %c0_i32_0 : i32, i32
  }
  func.func @transform_4(%arg0: i32) -> (i32, i32) {
    %c0_i32 = arith.constant 0 : i32
    %c0_i32_0 = arith.constant 0 : i32
    return %arg0, %c0_i32 : i32, i32
  }
}

</mosaic_0001>

<llo_original>
// kernel: tpu_custom_call.1
$region0: #{tpu_custom_call.1}
  #allocation0 [shape = 'u32[]', space=smem, size = 0x4, offset = 0x4, fixed_abs, tag = 'smem constant byte address 0x4 - core index']
  #allocation1 [shape = 'u32[144,128]{1,0:T(1,128)}', space=vmem, size = 0x12000, scoped, tag = 'internal scratch']
  #allocation2 [shape = 'bf16[16,2304]{1,0:T(8,128)(2,1)}', space=vmem, size = 0x12000, scoped, tag = 'scratch operand']
  #allocation3 [shape = 'bf16[16,768]{1,0:T(8,128)(2,1)}', space=vmem, size = 0x6000, scoped, tag = 'scratch operand']
  %s0 = inlined_call_operand.hbm [shape: bf16[16,128], index: 0, kind: input, shape index: {}]
  %s1 = inlined_call_operand.hbm [shape: bf16[128,2304], index: 1, kind: input, shape index: {}]
  %s2 = inlined_call_operand.hbm [shape: bf16[768,128], index: 2, kind: input, shape index: {}]
  %s3 = inlined_call_operand.vmem [shape: f32[1,128], index: 3, kind: input, shape index: {}]
  %s4 = inlined_call_operand.hbm [shape: f32[16,128], index: 4, kind: output, shape index: {}]
  %s5 = sld [smem:[#allocation0]]
  $region38: #{tpu_custom_call.1} parent=0
    _
  %s7 = ssub.s32 1, %s5
  %s8 = scalar_select 0, %s7, %s5
  $region1: #{tpu_custom_call.1} parent=0
    #allocation4 [shape = 'u8[4096]{0}', space=vmem, size = 0x1000, scoped, tag = 'input window, operand 0, single buffered']
    #allocation5 [shape = 's32[1]{0}', space=sflag, size = 0x4, scoped, tag = 'scoped memory for tpu_custom_call.1']
    #allocation6 [shape = 's32[1]{0}', space=sflag, size = 0x4, scoped, tag = 'scoped memory for tpu_custom_call.1']
    #allocation7 [shape = 'u8[589824]{0}', space=vmem, size = 0x90000, scoped, tag = 'input window, operand 1, single buffered']
    #allocation8 [shape = 's32[1]{0}', space=sflag, size = 0x4, scoped, tag = 'scoped memory for tpu_custom_call.1']
    #allocation9 [shape = 'u8[196608]{0}', space=vmem, size = 0x30000, scoped, tag = 'input window, operand 2, single buffered']
    #allocation10 [shape = 'u8[8192]{0}', space=vmem, size = 0x2000, scoped, tag = 'output window, operand 0, single buffered']
    %9 = vsyncpa [#allocation5], 0
    %10 = vsyncpa [#allocation8], 0
    %11 = vsyncpa [#allocation6], 0
    // Predicated region
    $region2: #{tpu_custom_call.1} parent=1 // pred_check
      _
    $region3: #{tpu_custom_call.1} parent=1 // pred_check_branch
      %13 = sbr.rel (0) target = $region5
    $region4: #{tpu_custom_call.1} parent=1 // pred_region
      %s15 = ssub.s32 128, 128
      %16 = vsyncadd [#allocation5], %s15
      %s17 = sshll.u32 [#allocation4], 4
      %s18 = int_to_ptr.vmem [resolvable:$true] %s17
      %23 = dma.hbm_to_vmem [thread:$0]  %s0, 128, %s18, [#allocation5], 64, 64, 4
    $region5: #{tpu_custom_call.1} parent=1 // pred_fallthru
      _
    // Predicated region
    $region6: #{tpu_custom_call.1} parent=1 // pred_check
      _
    $region7: #{tpu_custom_call.1} parent=1 // pred_check_branch
      %25 = sbr.rel (0) target = $region9
    $region8: #{tpu_custom_call.1} parent=1 // pred_region
      %s27 = ssub.s32 18432, 18432
      %28 = vsyncadd [#allocation8], %s27
      %s29 = sshll.u32 [#allocation7], 4
      %s30 = int_to_ptr.vmem [resolvable:$true] %s29
      %35 = dma.hbm_to_vmem [thread:$0]  %s1, 18432, %s30, [#allocation8], 1152, 1152, 72
    $region9: #{tpu_custom_call.1} parent=1 // pred_fallthru
      _
    // Predicated region
    $region10: #{tpu_custom_call.1} parent=1 // pred_check
      _
    $region11: #{tpu_custom_call.1} parent=1 // pred_check_branch
      %37 = sbr.rel (0) target = $region13
    $region12: #{tpu_custom_call.1} parent=1 // pred_region
      %s39 = ssub.s32 6144, 6144
      %40 = vsyncadd [#allocation8], %s39
      %s41 = sshll.u32 [#allocation9], 4
      %s42 = int_to_ptr.vmem [resolvable:$true] %s41
      %47 = dma.hbm_to_vmem [thread:$0]  %s2, 6144, %s42, [#allocation8], 64, 64, 4
    $region13: #{tpu_custom_call.1} parent=1 // pred_fallthru
      _
    // Predicated region
    $region14: #{tpu_custom_call.1} parent=1 // pred_check
      _
    $region15: #{tpu_custom_call.1} parent=1 // pred_check_branch
      %49 = sbr.rel (0) target = $region17
    $region16: #{tpu_custom_call.1} parent=1 // pred_region
      _
    $region17: #{tpu_custom_call.1} parent=1 // pred_fallthru
      _
    // Predicated region
    $region18: #{tpu_custom_call.1} parent=1 // pred_check
      _
    $region19: #{tpu_custom_call.1} parent=1 // pred_check_branch
      %51 = sbr.rel (0) target = $region21
    $region20: #{tpu_custom_call.1} parent=1 // pred_region
      %52 = dma.done [#allocation5], 128
    $region21: #{tpu_custom_call.1} parent=1 // pred_fallthru
      _
    // Predicated region
    $region22: #{tpu_custom_call.1} parent=1 // pred_check
      _
    $region23: #{tpu_custom_call.1} parent=1 // pred_check_branch
      %54 = sbr.rel (0) target = $region25
    $region24: #{tpu_custom_call.1} parent=1 // pred_region
      %55 = dma.done [#allocation8], 18432
    $region25: #{tpu_custom_call.1} parent=1 // pred_fallthru
      _
    // Predicated region
    $region26: #{tpu_custom_call.1} parent=1 // pred_check
      _
    $region27: #{tpu_custom_call.1} parent=1 // pred_check_branch
      %57 = sbr.rel (0) target = $region29
    $region28: #{tpu_custom_call.1} parent=1 // pred_region
      %58 = dma.done [#allocation8], 6144
    $region29: #{tpu_custom_call.1} parent=1 // pred_fallthru
      _
    %v60 = vld [vmem:[#allocation4] sm:$0xf]
    %v61 = vld [vmem:[#allocation4 + $0x4] sm:$0xf]
    %v62 = vld [vmem:[#allocation7] sm:$0xff]
    %v63 = vld [vmem:[#allocation7 + $0x8] sm:$0xff]
    %v64 = vld [vmem:[#allocation7 + $0x10] sm:$0xff]
    %v65 = vld [vmem:[#allocation7 + $0x18] sm:$0xff]
    %v66 = vld [vmem:[#allocation7 + $0x20] sm:$0xff]
    %v67 = vld [vmem:[#allocation7 + $0x28] sm:$0xff]
    %v68 = vld [vmem:[#allocation7 + $0x30] sm:$0xff]
    %v69 = vld [vmem:[#allocation7 + $0x38] sm:$0xff]
    %v70 = vld [vmem:[#allocation7 + $0x40] sm:$0xff]
    %v71 = vld [vmem:[#allocation7 + $0x48] sm:$0xff]
    %v72 = vld [vmem:[#allocation7 + $0x50] sm:$0xff]
    %v73 = vld [vmem:[#allocation7 + $0x58] sm:$0xff]
    %v74 = vld [vmem:[#allocation7 + $0x60] sm:$0xff]
    %v75 = vld [vmem:[#allocation7 + $0x68] sm:$0xff]
    %v76 = vld [vmem:[#allocation7 + $0x70] sm:$0xff]
    %v77 = vld [vmem:[#allocation7 + $0x78] sm:$0xff]
    %v78 = vld [vmem:[#allocation7 + $0x80] sm:$0xff]
    %v79 = vld [vmem:[#allocation7 + $0x88] sm:$0xff]
    %v80 = vld [vmem:[#allocation7 + $0x90] sm:$0xff]
    %v81 = vld [vmem:[#allocation7 + $0x98] sm:$0xff]
    %v82 = vld [vmem:[#allocation7 + $0xa0] sm:$0xff]
    %v83 = vld [vmem:[#allocation7 + $0xa8] sm:$0xff]
    %v84 = vld [vmem:[#allocation7 + $0xb0] sm:$0xff]
    %v85 = vld [vmem:[#allocation7 + $0xb8] sm:$0xff]
    %v86 = vld [vmem:[#allocation7 + $0xc0] sm:$0xff]
    %v87 = vld [vmem:[#allocation7 + $0xc8] sm:$0xff]
    %v88 = vld [vmem:[#allocation7 + $0xd0] sm:$0xff]
    %v89 = vld [vmem:[#allocation7 + $0xd8] sm:$0xff]
    %v90 = vld [vmem:[#allocation7 + $0xe0] sm:$0xff]
    %v91 = vld [vmem:[#allocation7 + $0xe8] sm:$0xff]
    %v92 = vld [vmem:[#allocation7 + $0xf0] sm:$0xff]
    %v93 = vld [vmem:[#allocation7 + $0xf8] sm:$0xff]
    %v94 = vld [vmem:[#allocation7 + $0x100] sm:$0xff]
    %v95 = vld [vmem:[#allocation7 + $0x108] sm:$0xff]
    %v96 = vld [vmem:[#allocation7 + $0x110] sm:$0xff]
    %v97 = vld [vmem:[#allocation7 + $0x118] sm:$0xff]
    %v98 = vld [vmem:[#allocation7 + $0x120] sm:$0xff]
    %v99 = vld [vmem:[#allocation7 + $0x128] sm:$0xff]
    %v100 = vld [vmem:[#allocation7 + $0x130] sm:$0xff]
    %v101 = vld [vmem:[#allocation7 + $0x138] sm:$0xff]
    %v102 = vld [vmem:[#allocation7 + $0x140] sm:$0xff]
    %v103 = vld [vmem:[#allocation7 + $0x148] sm:$0xff]
    %v104 = vld [vmem:[#allocation7 + $0x150] sm:$0xff]
    %v105 = vld [vmem:[#allocation7 + $0x158] sm:$0xff]
    %v106 = vld [vmem:[#allocation7 + $0x160] sm:$0xff]
    %v107 = vld [vmem:[#allocation7 + $0x168] sm:$0xff]
    %v108 = vld [vmem:[#allocation7 + $0x170] sm:$0xff]
    %v109 = vld [vmem:[#allocation7 + $0x178] sm:$0xff]
    %v110 = vld [vmem:[#allocation7 + $0x180] sm:$0xff]
    %v111 = vld [vmem:[#allocation7 + $0x188] sm:$0xff]
    %v112 = vld [vmem:[#allocation7 + $0x190] sm:$0xff]
    %v113 = vld [vmem:[#allocation7 + $0x198] sm:$0xff]
    %v114 = vld [vmem:[#allocation7 + $0x1a0] sm:$0xff]
    %v115 = vld [vmem:[#allocation7 + $0x1a8] sm:$0xff]
    %v116 = vld [vmem:[#allocation7 + $0x1b0] sm:$0xff]
    %v117 = vld [vmem:[#allocation7 + $0x1b8] sm:$0xff]
    %v118 = vld [vmem:[#allocation7 + $0x1c0] sm:$0xff]
    %v119 = vld [vmem:[#allocation7 + $0x1c8] sm:$0xff]
    %v120 = vld [vmem:[#allocation7 + $0x1d0] sm:$0xff]
    %v121 = vld [vmem:[#allocation7 + $0x1d8] sm:$0xff]
    %v122 = vld [vmem:[#allocation7 + $0x1e0] sm:$0xff]
    %v123 = vld [vmem:[#allocation7 + $0x1e8] sm:$0xff]
    %v124 = vld [vmem:[#allocation7 + $0x1f0] sm:$0xff]
    %v125 = vld [vmem:[#allocation7 + $0x1f8] sm:$0xff]
    %v126 = vld [vmem:[#allocation7 + $0x200] sm:$0xff]
    %v127 = vld [vmem:[#allocation7 + $0x208] sm:$0xff]
    %v128 = vld [vmem:[#allocation7 + $0x210] sm:$0xff]
    %v129 = vld [vmem:[#allocation7 + $0x218] sm:$0xff]
    %v130 = vld [vmem:[#allocation7 + $0x220] sm:$0xff]
    %v131 = vld [vmem:[#allocation7 + $0x228] sm:$0xff]
    %v132 = vld [vmem:[#allocation7 + $0x230] sm:$0xff]
    %v133 = vld [vmem:[#allocation7 + $0x238] sm:$0xff]
    %v134 = vld [vmem:[#allocation7 + $0x240] sm:$0xff]
    %v135 = vld [vmem:[#allocation7 + $0x248] sm:$0xff]
    %v136 = vld [vmem:[#allocation7 + $0x250] sm:$0xff]
    %v137 = vld [vmem:[#allocation7 + $0x258] sm:$0xff]
    %v138 = vld [vmem:[#allocation7 + $0x260] sm:$0xff]
    %v139 = vld [vmem:[#allocation7 + $0x268] sm:$0xff]
    %v140 = vld [vmem:[#allocation7 + $0x270] sm:$0xff]
    %v141 = vld [vmem:[#allocation7 + $0x278] sm:$0xff]
    %v142 = vld [vmem:[#allocation7 + $0x280] sm:$0xff]
    %v143 = vld [vmem:[#allocation7 + $0x288] sm:$0xff]
    %v144 = vld [vmem:[#allocation7 + $0x290] sm:$0xff]
    %v145 = vld [vmem:[#allocation7 + $0x298] sm:$0xff]
    %v146 = vld [vmem:[#allocation7 + $0x2a0] sm:$0xff]
    %v147 = vld [vmem:[#allocation7 + $0x2a8] sm:$0xff]
    %v148 = vld [vmem:[#allocation7 + $0x2b0] sm:$0xff]
    %v149 = vld [vmem:[#allocation7 + $0x2b8] sm:$0xff]
    %v150 = vld [vmem:[#allocation7 + $0x2c0] sm:$0xff]
    %v151 = vld [vmem:[#allocation7 + $0x2c8] sm:$0xff]
    %v152 = vld [vmem:[#allocation7 + $0x2d0] sm:$0xff]
    %v153 = vld [vmem:[#allocation7 + $0x2d8] sm:$0xff]
    %v154 = vld [vmem:[#allocation7 + $0x2e0] sm:$0xff]
    %v155 = vld [vmem:[#allocation7 + $0x2e8] sm:$0xff]
    %v156 = vld [vmem:[#allocation7 + $0x2f0] sm:$0xff]
    %v157 = vld [vmem:[#allocation7 + $0x2f8] sm:$0xff]
    %v158 = vld [vmem:[#allocation7 + $0x300] sm:$0xff]
    %v159 = vld [vmem:[#allocation7 + $0x308] sm:$0xff]
    %v160 = vld [vmem:[#allocation7 + $0x310] sm:$0xff]
    %v161 = vld [vmem:[#allocation7 + $0x318] sm:$0xff]
    %v162 = vld [vmem:[#allocation7 + $0x320] sm:$0xff]
    %v163 = vld [vmem:[#allocation7 + $0x328] sm:$0xff]
    %v164 = vld [vmem:[#allocation7 + $0x330] sm:$0xff]
    %v165 = vld [vmem:[#allocation7 + $0x338] sm:$0xff]
    %v166 = vld [vmem:[#allocation7 + $0x340] sm:$0xff]
    %v167 = vld [vmem:[#allocation7 + $0x348] sm:$0xff]
    %v168 = vld [vmem:[#allocation7 + $0x350] sm:$0xff]
    %v169 = vld [vmem:[#allocation7 + $0x358] sm:$0xff]
    %v170 = vld [vmem:[#allocation7 + $0x360] sm:$0xff]
    %v171 = vld [vmem:[#allocation7 + $0x368] sm:$0xff]
    %v172 = vld [vmem:[#allocation7 + $0x370] sm:$0xff]
    %v173 = vld [vmem:[#allocation7 + $0x378] sm:$0xff]
    %v174 = vld [vmem:[#allocation7 + $0x380] sm:$0xff]
    %v175 = vld [vmem:[#allocation7 + $0x388] sm:$0xff]
    %v176 = vld [vmem:[#allocation7 + $0x390] sm:$0xff]
    %v177 = vld [vmem:[#allocation7 + $0x398] sm:$0xff]
    %v178 = vld [vmem:[#allocation7 + $0x3a0] sm:$0xff]
    %v179 = vld [vmem:[#allocation7 + $0x3a8] sm:$0xff]
    %v180 = vld [vmem:[#allocation7 + $0x3b0] sm:$0xff]
    %v181 = vld [vmem:[#allocation7 + $0x3b8] sm:$0xff]
    %v182 = vld [vmem:[#allocation7 + $0x3c0] sm:$0xff]
    %v183 = vld [vmem:[#allocation7 + $0x3c8] sm:$0xff]
    %v184 = vld [vmem:[#allocation7 + $0x3d0] sm:$0xff]
    %v185 = vld [vmem:[#allocation7 + $0x3d8] sm:$0xff]
    %v186 = vld [vmem:[#allocation7 + $0x3e0] sm:$0xff]
    %v187 = vld [vmem:[#allocation7 + $0x3e8] sm:$0xff]
    %v188 = vld [vmem:[#allocation7 + $0x3f0] sm:$0xff]
    %v189 = vld [vmem:[#allocation7 + $0x3f8] sm:$0xff]
    %v190 = vld [vmem:[#allocation7 + $0x400] sm:$0xff]
    %v191 = vld [vmem:[#allocation7 + $0x408] sm:$0xff]
    %v192 = vld [vmem:[#allocation7 + $0x410] sm:$0xff]
    %v193 = vld [vmem:[#allocation7 + $0x418] sm:$0xff]
    %v194 = vld [vmem:[#allocation7 + $0x420] sm:$0xff]
    %v195 = vld [vmem:[#allocation7 + $0x428] sm:$0xff]
    %v196 = vld [vmem:[#allocation7 + $0x430] sm:$0xff]
    %v197 = vld [vmem:[#allocation7 + $0x438] sm:$0xff]
    %v198 = vld [vmem:[#allocation7 + $0x440] sm:$0xff]
    %v199 = vld [vmem:[#allocation7 + $0x448] sm:$0xff]
    %v200 = vld [vmem:[#allocation7 + $0x450] sm:$0xff]
    %v201 = vld [vmem:[#allocation7 + $0x458] sm:$0xff]
    %v202 = vld [vmem:[#allocation7 + $0x460] sm:$0xff]
    %v203 = vld [vmem:[#allocation7 + $0x468] sm:$0xff]
    %v204 = vld [vmem:[#allocation7 + $0x470] sm:$0xff]
    %v205 = vld [vmem:[#allocation7 + $0x478] sm:$0xff]
    %v208 = vunpack.c.l.b16 %v60
    %v209 = vunpack.c.l.b16 %v61
    %v210 = vpack.c.b16 %v209, %v208
    %v356 = vunpack.c.l.b16 %v62
    %v357 = vunpack.c.h.b16 %v62
    %v358 = vunpack.c.l.b16 %v63
    %v359 = vunpack.c.h.b16 %v63
    %v360 = vunpack.c.l.b16 %v64
    %v361 = vunpack.c.h.b16 %v64
    %v362 = vunpack.c.l.b16 %v65
    %v363 = vunpack.c.h.b16 %v65
    %v364 = vunpack.c.l.b16 %v66
    %v365 = vunpack.c.h.b16 %v66
    %v366 = vunpack.c.l.b16 %v67
    %v367 = vunpack.c.h.b16 %v67
    %v368 = vunpack.c.l.b16 %v68
    %v369 = vunpack.c.h.b16 %v68
    %v370 = vunpack.c.l.b16 %v69
    %v371 = vunpack.c.h.b16 %v69
    %v372 = vunpack.c.l.b16 %v70
    %v373 = vunpack.c.h.b16 %v70
    %v374 = vunpack.c.l.b16 %v71
    %v375 = vunpack.c.h.b16 %v71
    %v376 = vunpack.c.l.b16 %v72
    %v377 = vunpack.c.h.b16 %v72
    %v378 = vunpack.c.l.b16 %v73
    %v379 = vunpack.c.h.b16 %v73
    %v380 = vunpack.c.l.b16 %v74
    %v381 = vunpack.c.h.b16 %v74
    %v382 = vunpack.c.l.b16 %v75
    %v383 = vunpack.c.h.b16 %v75
    %v384 = vunpack.c.l.b16 %v76
    %v385 = vunpack.c.h.b16 %v76
    %v386 = vunpack.c.l.b16 %v77
    %v387 = vunpack.c.h.b16 %v77
    %v388 = vunpack.c.l.b16 %v78
    %v389 = vunpack.c.h.b16 %v78
    %v390 = vunpack.c.l.b16 %v79
    %v391 = vunpack.c.h.b16 %v79
    %v392 = vunpack.c.l.b16 %v80
    %v393 = vunpack.c.h.b16 %v80
    %v394 = vunpack.c.l.b16 %v81
    %v395 = vunpack.c.h.b16 %v81
    %v396 = vunpack.c.l.b16 %v82
    %v397 = vunpack.c.h.b16 %v82
    %v398 = vunpack.c.l.b16 %v83
    %v399 = vunpack.c.h.b16 %v83
    %v400 = vunpack.c.l.b16 %v84
    %v401 = vunpack.c.h.b16 %v84
    %v402 = vunpack.c.l.b16 %v85
    %v403 = vunpack.c.h.b16 %v85
    %v404 = vunpack.c.l.b16 %v86
    %v405 = vunpack.c.h.b16 %v86
    %v406 = vunpack.c.l.b16 %v87
    %v407 = vunpack.c.h.b16 %v87
    %v408 = vunpack.c.l.b16 %v88
    %v409 = vunpack.c.h.b16 %v88
    %v410 = vunpack.c.l.b16 %v89
    %v411 = vunpack.c.h.b16 %v89
    %v412 = vunpack.c.l.b16 %v90
    %v413 = vunpack.c.h.b16 %v90
    %v414 = vunpack.c.l.b16 %v91
    %v415 = vunpack.c.h.b16 %v91
    %v416 = vunpack.c.l.b16 %v92
    %v417 = vunpack.c.h.b16 %v92
    %v418 = vunpack.c.l.b16 %v93
    %v419 = vunpack.c.h.b16 %v93
    %v420 = vunpack.c.l.b16 %v94
    %v421 = vunpack.c.h.b16 %v94
    %v422 = vunpack.c.l.b16 %v95
    %v423 = vunpack.c.h.b16 %v95
    %v424 = vunpack.c.l.b16 %v96
    %v425 = vunpack.c.h.b16 %v96
    %v426 = vunpack.c.l.b16 %v97
    %v427 = vunpack.c.h.b16 %v97
    %v428 = vunpack.c.l.b16 %v98
    %v429 = vunpack.c.h.b16 %v98
    %v430 = vunpack.c.l.b16 %v99
    %v431 = vunpack.c.h.b16 %v99
    %v432 = vunpack.c.l.b16 %v100
    %v433 = vunpack.c.h.b16 %v100
    %v434 = vunpack.c.l.b16 %v101
    %v435 = vunpack.c.h.b16 %v101
    %v436 = vunpack.c.l.b16 %v102
    %v437 = vunpack.c.h.b16 %v102
    %v438 = vunpack.c.l.b16 %v103
    %v439 = vunpack.c.h.b16 %v103
    %v440 = vunpack.c.l.b16 %v104
    %v441 = vunpack.c.h.b16 %v104
    %v442 = vunpack.c.l.b16 %v105
    %v443 = vunpack.c.h.b16 %v105
    %v444 = vunpack.c.l.b16 %v106
    %v445 = vunpack.c.h.b16 %v106
    %v446 = vunpack.c.l.b16 %v107
    %v447 = vunpack.c.h.b16 %v107
    %v448 = vunpack.c.l.b16 %v108
    %v449 = vunpack.c.h.b16 %v108
    %v450 = vunpack.c.l.b16 %v109
    %v451 = vunpack.c.h.b16 %v109
    %v452 = vunpack.c.l.b16 %v110
    %v453 = vunpack.c.h.b16 %v110
    %v454 = vunpack.c.l.b16 %v111
    %v455 = vunpack.c.h.b16 %v111
    %v456 = vunpack.c.l.b16 %v112
    %v457 = vunpack.c.h.b16 %v112
    %v458 = vunpack.c.l.b16 %v113
    %v459 = vunpack.c.h.b16 %v113
    %v460 = vunpack.c.l.b16 %v114
    %v461 = vunpack.c.h.b16 %v114
    %v462 = vunpack.c.l.b16 %v115
    %v463 = vunpack.c.h.b16 %v115
    %v464 = vunpack.c.l.b16 %v116
    %v465 = vunpack.c.h.b16 %v116
    %v466 = vunpack.c.l.b16 %v117
    %v467 = vunpack.c.h.b16 %v117
    %v468 = vunpack.c.l.b16 %v118
    %v469 = vunpack.c.h.b16 %v118
    %v470 = vunpack.c.l.b16 %v119
    %v471 = vunpack.c.h.b16 %v119
    %v472 = vunpack.c.l.b16 %v120
    %v473 = vunpack.c.h.b16 %v120
    %v474 = vunpack.c.l.b16 %v121
    %v475 = vunpack.c.h.b16 %v121
    %v476 = vunpack.c.l.b16 %v122
    %v477 = vunpack.c.h.b16 %v122
    %v478 = vunpack.c.l.b16 %v123
    %v479 = vunpack.c.h.b16 %v123
    %v480 = vunpack.c.l.b16 %v124
    %v481 = vunpack.c.h.b16 %v124
    %v482 = vunpack.c.l.b16 %v125
    %v483 = vunpack.c.h.b16 %v125
    %v484 = vunpack.c.l.b16 %v126
    %v485 = vunpack.c.h.b16 %v126
    %v486 = vunpack.c.l.b16 %v127
    %v487 = vunpack.c.h.b16 %v127
    %v488 = vunpack.c.l.b16 %v128
    %v489 = vunpack.c.h.b16 %v128
    %v490 = vunpack.c.l.b16 %v129
    %v491 = vunpack.c.h.b16 %v129
    %v492 = vunpack.c.l.b16 %v130
    %v493 = vunpack.c.h.b16 %v130
    %v494 = vunpack.c.l.b16 %v131
    %v495 = vunpack.c.h.b16 %v131
    %v496 = vunpack.c.l.b16 %v132
    %v497 = vunpack.c.h.b16 %v132
    %v498 = vunpack.c.l.b16 %v133
    %v499 = vunpack.c.h.b16 %v133
    %v500 = vunpack.c.l.b16 %v134
    %v501 = vunpack.c.h.b16 %v134
    %v502 = vunpack.c.l.b16 %v135
    %v503 = vunpack.c.h.b16 %v135
    %v504 = vunpack.c.l.b16 %v136
    %v505 = vunpack.c.h.b16 %v136
    %v506 = vunpack.c.l.b16 %v137
    %v507 = vunpack.c.h.b16 %v137
    %v508 = vunpack.c.l.b16 %v138
    %v509 = vunpack.c.h.b16 %v138
    %v510 = vunpack.c.l.b16 %v139
    %v511 = vunpack.c.h.b16 %v139
    %v512 = vunpack.c.l.b16 %v140
    %v513 = vunpack.c.h.b16 %v140
    %v514 = vunpack.c.l.b16 %v141
    %v515 = vunpack.c.h.b16 %v141
    %v516 = vunpack.c.l.b16 %v142
    %v517 = vunpack.c.h.b16 %v142
    %v518 = vunpack.c.l.b16 %v143
    %v519 = vunpack.c.h.b16 %v143
    %v520 = vunpack.c.l.b16 %v144
    %v521 = vunpack.c.h.b16 %v144
    %v522 = vunpack.c.l.b16 %v145
    %v523 = vunpack.c.h.b16 %v145
    %v524 = vunpack.c.l.b16 %v146
    %v525 = vunpack.c.h.b16 %v146
    %v526 = vunpack.c.l.b16 %v147
    %v527 = vunpack.c.h.b16 %v147
    %v528 = vunpack.c.l.b16 %v148
    %v529 = vunpack.c.h.b16 %v148
    %v530 = vunpack.c.l.b16 %v149
    %v531 = vunpack.c.h.b16 %v149
    %v532 = vunpack.c.l.b16 %v150
    %v533 = vunpack.c.h.b16 %v150
    %v534 = vunpack.c.l.b16 %v151
    %v535 = vunpack.c.h.b16 %v151
    %v536 = vunpack.c.l.b16 %v152
    %v537 = vunpack.c.h.b16 %v152
    %v538 = vunpack.c.l.b16 %v153
    %v539 = vunpack.c.h.b16 %v153
    %v540 = vunpack.c.l.b16 %v154
    %v541 = vunpack.c.h.b16 %v154
    %v542 = vunpack.c.l.b16 %v155
    %v543 = vunpack.c.h.b16 %v155
    %v544 = vunpack.c.l.b16 %v156
    %v545 = vunpack.c.h.b16 %v156
    %v546 = vunpack.c.l.b16 %v157
    %v547 = vunpack.c.h.b16 %v157
    %v548 = vunpack.c.l.b16 %v158
    %v549 = vunpack.c.h.b16 %v158
    %v550 = vunpack.c.l.b16 %v159
    %v551 = vunpack.c.h.b16 %v159
    %v552 = vunpack.c.l.b16 %v160
    %v553 = vunpack.c.h.b16 %v160
    %v554 = vunpack.c.l.b16 %v161
    %v555 = vunpack.c.h.b16 %v161
    %v556 = vunpack.c.l.b16 %v162
    %v557 = vunpack.c.h.b16 %v162
    %v558 = vunpack.c.l.b16 %v163
    %v559 = vunpack.c.h.b16 %v163
    %v560 = vunpack.c.l.b16 %v164
    %v561 = vunpack.c.h.b16 %v164
    %v562 = vunpack.c.l.b16 %v165
    %v563 = vunpack.c.h.b16 %v165
    %v564 = vunpack.c.l.b16 %v166
    %v565 = vunpack.c.h.b16 %v166
    %v566 = vunpack.c.l.b16 %v167
    %v567 = vunpack.c.h.b16 %v167
    %v568 = vunpack.c.l.b16 %v168
    %v569 = vunpack.c.h.b16 %v168
    %v570 = vunpack.c.l.b16 %v169
    %v571 = vunpack.c.h.b16 %v169
    %v572 = vunpack.c.l.b16 %v170
    %v573 = vunpack.c.h.b16 %v170
    %v574 = vunpack.c.l.b16 %v171
    %v575 = vunpack.c.h.b16 %v171
    %v576 = vunpack.c.l.b16 %v172
    %v577 = vunpack.c.h.b16 %v172
    %v578 = vunpack.c.l.b16 %v173
    %v579 = vunpack.c.h.b16 %v173
    %v580 = vunpack.c.l.b16 %v174
    %v581 = vunpack.c.h.b16 %v174
    %v582 = vunpack.c.l.b16 %v175
    %v583 = vunpack.c.h.b16 %v175
    %v584 = vunpack.c.l.b16 %v176
    %v585 = vunpack.c.h.b16 %v176
    %v586 = vunpack.c.l.b16 %v177
    %v587 = vunpack.c.h.b16 %v177
    %v588 = vunpack.c.l.b16 %v178
    %v589 = vunpack.c.h.b16 %v178
    %v590 = vunpack.c.l.b16 %v179
    %v591 = vunpack.c.h.b16 %v179
    %v592 = vunpack.c.l.b16 %v180
    %v593 = vunpack.c.h.b16 %v180
    %v594 = vunpack.c.l.b16 %v181
    %v595 = vunpack.c.h.b16 %v181
    %v596 = vunpack.c.l.b16 %v182
    %v597 = vunpack.c.h.b16 %v182
    %v598 = vunpack.c.l.b16 %v183
    %v599 = vunpack.c.h.b16 %v183
    %v600 = vunpack.c.l.b16 %v184
    %v601 = vunpack.c.h.b16 %v184
    %v602 = vunpack.c.l.b16 %v185
    %v603 = vunpack.c.h.b16 %v185
    %v604 = vunpack.c.l.b16 %v186
    %v605 = vunpack.c.h.b16 %v186
    %v606 = vunpack.c.l.b16 %v187
    %v607 = vunpack.c.h.b16 %v187
    %v608 = vunpack.c.l.b16 %v188
    %v609 = vunpack.c.h.b16 %v188
    %v610 = vunpack.c.l.b16 %v189
    %v611 = vunpack.c.h.b16 %v189
    %v612 = vunpack.c.l.b16 %v190
    %v613 = vunpack.c.h.b16 %v190
    %v614 = vunpack.c.l.b16 %v191
    %v615 = vunpack.c.h.b16 %v191
    %v616 = vunpack.c.l.b16 %v192
    %v617 = vunpack.c.h.b16 %v192
    %v618 = vunpack.c.l.b16 %v193
    %v619 = vunpack.c.h.b16 %v193
    %v620 = vunpack.c.l.b16 %v194
    %v621 = vunpack.c.h.b16 %v194
    %v622 = vunpack.c.l.b16 %v195
    %v623 = vunpack.c.h.b16 %v195
    %v624 = vunpack.c.l.b16 %v196
    %v625 = vunpack.c.h.b16 %v196
    %v626 = vunpack.c.l.b16 %v197
    %v627 = vunpack.c.h.b16 %v197
    %v628 = vunpack.c.l.b16 %v198
    %v629 = vunpack.c.h.b16 %v198
    %v630 = vunpack.c.l.b16 %v199
    %v631 = vunpack.c.h.b16 %v199
    %v632 = vunpack.c.l.b16 %v200
    %v633 = vunpack.c.h.b16 %v200
    %v634 = vunpack.c.l.b16 %v201
    %v635 = vunpack.c.h.b16 %v201
    %v636 = vunpack.c.l.b16 %v202
    %v637 = vunpack.c.h.b16 %v202
    %v638 = vunpack.c.l.b16 %v203
    %v639 = vunpack.c.h.b16 %v203
    %v640 = vunpack.c.l.b16 %v204
    %v641 = vunpack.c.h.b16 %v204
    %v642 = vunpack.c.l.b16 %v205
    %v643 = vunpack.c.h.b16 %v205
    %v644 = vpack.c.b16 %v374, %v356
    %v645 = vpack.c.b16 %v375, %v357
    %v646 = vpack.c.b16 %v376, %v358
    %v647 = vpack.c.b16 %v377, %v359
    %v648 = vpack.c.b16 %v378, %v360
    %v649 = vpack.c.b16 %v379, %v361
    %v650 = vpack.c.b16 %v380, %v362
    %v651 = vpack.c.b16 %v381, %v363
    %v652 = vpack.c.b16 %v382, %v364
    %v653 = vpack.c.b16 %v383, %v365
    %v654 = vpack.c.b16 %v384, %v366
    %v655 = vpack.c.b16 %v385, %v367
    %v656 = vpack.c.b16 %v386, %v368
    %v657 = vpack.c.b16 %v387, %v369
    %v658 = vpack.c.b16 %v388, %v370
    %v659 = vpack.c.b16 %v389, %v371
    %v660 = vpack.c.b16 %v390, %v372
    %v661 = vpack.c.b16 %v391, %v373
    %v662 = vpack.c.b16 %v410, %v392
    %v663 = vpack.c.b16 %v411, %v393
    %v664 = vpack.c.b16 %v412, %v394
    %v665 = vpack.c.b16 %v413, %v395
    %v666 = vpack.c.b16 %v414, %v396
    %v667 = vpack.c.b16 %v415, %v397
    %v668 = vpack.c.b16 %v416, %v398
    %v669 = vpack.c.b16 %v417, %v399
    %v670 = vpack.c.b16 %v418, %v400
    %v671 = vpack.c.b16 %v419, %v401
    %v672 = vpack.c.b16 %v420, %v402
    %v673 = vpack.c.b16 %v421, %v403
    %v674 = vpack.c.b16 %v422, %v404
    %v675 = vpack.c.b16 %v423, %v405
    %v676 = vpack.c.b16 %v424, %v406
    %v677 = vpack.c.b16 %v425, %v407
    %v678 = vpack.c.b16 %v426, %v408
    %v679 = vpack.c.b16 %v427, %v409
    %v680 = vpack.c.b16 %v446, %v428
    %v681 = vpack.c.b16 %v447, %v429
    %v682 = vpack.c.b16 %v448, %v430
    %v683 = vpack.c.b16 %v449, %v431
    %v684 = vpack.c.b16 %v450, %v432
    %v685 = vpack.c.b16 %v451, %v433
    %v686 = vpack.c.b16 %v452, %v434
    %v687 = vpack.c.b16 %v453, %v435
    %v688 = vpack.c.b16 %v454, %v436
    %v689 = vpack.c.b16 %v455, %v437
    %v690 = vpack.c.b16 %v456, %v438
    %v691 = vpack.c.b16 %v457, %v439
    %v692 = vpack.c.b16 %v458, %v440
    %v693 = vpack.c.b16 %v459, %v441
    %v694 = vpack.c.b16 %v460, %v442
    %v695 = vpack.c.b16 %v461, %v443
    %v696 = vpack.c.b16 %v462, %v444
    %v697 = vpack.c.b16 %v463, %v445
    %v698 = vpack.c.b16 %v482, %v464
    %v699 = vpack.c.b16 %v483, %v465
    %v700 = vpack.c.b16 %v484, %v466
    %v701 = vpack.c.b16 %v485, %v467
    %v702 = vpack.c.b16 %v486, %v468
    %v703 = vpack.c.b16 %v487, %v469
    %v704 = vpack.c.b16 %v488, %v470
    %v705 = vpack.c.b16 %v489, %v471
    %v706 = vpack.c.b16 %v490, %v472
    %v707 = vpack.c.b16 %v491, %v473
    %v708 = vpack.c.b16 %v492, %v474
    %v709 = vpack.c.b16 %v493, %v475
    %v710 = vpack.c.b16 %v494, %v476
    %v711 = vpack.c.b16 %v495, %v477
    %v712 = vpack.c.b16 %v496, %v478
    %v713 = vpack.c.b16 %v497, %v479
    %v714 = vpack.c.b16 %v498, %v480
    %v715 = vpack.c.b16 %v499, %v481
    %v716 = vpack.c.b16 %v518, %v500
    %v717 = vpack.c.b16 %v519, %v501
    %v718 = vpack.c.b16 %v520, %v502
    %v719 = vpack.c.b16 %v521, %v503
    %v720 = vpack.c.b16 %v522, %v504
    %v721 = vpack.c.b16 %v523, %v505
    %v722 = vpack.c.b16 %v524, %v506
    %v723 = vpack.c.b16 %v525, %v507
    %v724 = vpack.c.b16 %v526, %v508
    %v725 = vpack.c.b16 %v527, %v509
    %v726 = vpack.c.b16 %v528, %v510
    %v727 = vpack.c.b16 %v529, %v511
    %v728 = vpack.c.b16 %v530, %v512
    %v729 = vpack.c.b16 %v531, %v513
    %v730 = vpack.c.b16 %v532, %v514
    %v731 = vpack.c.b16 %v533, %v515
    %v732 = vpack.c.b16 %v534, %v516
    %v733 = vpack.c.b16 %v535, %v517
    %v734 = vpack.c.b16 %v554, %v536
    %v735 = vpack.c.b16 %v555, %v537
    %v736 = vpack.c.b16 %v556, %v538
    %v737 = vpack.c.b16 %v557, %v539
    %v738 = vpack.c.b16 %v558, %v540
    %v739 = vpack.c.b16 %v559, %v541
    %v740 = vpack.c.b16 %v560, %v542
    %v741 = vpack.c.b16 %v561, %v543
    %v742 = vpack.c.b16 %v562, %v544
    %v743 = vpack.c.b16 %v563, %v545
    %v744 = vpack.c.b16 %v564, %v546
    %v745 = vpack.c.b16 %v565, %v547
    %v746 = vpack.c.b16 %v566, %v548
    %v747 = vpack.c.b16 %v567, %v549
    %v748 = vpack.c.b16 %v568, %v550
    %v749 = vpack.c.b16 %v569, %v551
    %v750 = vpack.c.b16 %v570, %v552
    %v751 = vpack.c.b16 %v571, %v553
    %v752 = vpack.c.b16 %v590, %v572
    %v753 = vpack.c.b16 %v591, %v573
    %v754 = vpack.c.b16 %v592, %v574
    %v755 = vpack.c.b16 %v593, %v575
    %v756 = vpack.c.b16 %v594, %v576
    %v757 = vpack.c.b16 %v595, %v577
    %v758 = vpack.c.b16 %v596, %v578
    %v759 = vpack.c.b16 %v597, %v579
    %v760 = vpack.c.b16 %v598, %v580
    %v761 = vpack.c.b16 %v599, %v581
    %v762 = vpack.c.b16 %v600, %v582
    %v763 = vpack.c.b16 %v601, %v583
    %v764 = vpack.c.b16 %v602, %v584
    %v765 = vpack.c.b16 %v603, %v585
    %v766 = vpack.c.b16 %v604, %v586
    %v767 = vpack.c.b16 %v605, %v587
    %v768 = vpack.c.b16 %v606, %v588
    %v769 = vpack.c.b16 %v607, %v589
    %v770 = vpack.c.b16 %v626, %v608
    %v771 = vpack.c.b16 %v627, %v609
    %v772 = vpack.c.b16 %v628, %v610
    %v773 = vpack.c.b16 %v629, %v611
    %v774 = vpack.c.b16 %v630, %v612
    %v775 = vpack.c.b16 %v631, %v613
    %v776 = vpack.c.b16 %v632, %v614
    %v777 = vpack.c.b16 %v633, %v615
    %v778 = vpack.c.b16 %v634, %v616
    %v779 = vpack.c.b16 %v635, %v617
    %v780 = vpack.c.b16 %v636, %v618
    %v781 = vpack.c.b16 %v637, %v619
    %v782 = vpack.c.b16 %v638, %v620
    %v783 = vpack.c.b16 %v639, %v621
    %v784 = vpack.c.b16 %v640, %v622
    %v785 = vpack.c.b16 %v641, %v623
    %v786 = vpack.c.b16 %v642, %v624
    %v787 = vpack.c.b16 %v643, %v625
    %932 = vmatprep.subr.bf16.mxu0 %v771
    %933 = vmatpush1.bf16.msra.mxu0 %v770
    %934 = vmatprep.subr.bf16.mxu0 %v753
    %935 = vmatpush1.bf16.msra.mxu0 %v752
    %936 = vmatprep.subr.bf16.mxu0 %v735
    %937 = vmatpush1.bf16.msra.mxu0 %v734
    %938 = vmatprep.subr.bf16.mxu0 %v717
    %939 = vmatpush1.bf16.msra.mxu0 %v716
    %940 = vmatprep.subr.bf16.mxu0 %v699
    %941 = vmatpush1.bf16.msra.mxu0 %v698
    %942 = vmatprep.subr.bf16.mxu0 %v681
    %943 = vmatpush1.bf16.msra.mxu0 %v680
    %944 = vmatprep.subr.bf16.mxu0 %v663
    %945 = vmatpush1.bf16.msra.mxu0 %v662
    %946 = vmatprep.subr.bf16.mxu0 %v645
    %947 = vmatpush1.bf16.msra.mxu0 %v644
    %948 = vmatprep.subr.bf16.mxu0 0
    %949 = vmatpush2.bf16.msra.mxu0 0
    %950 = vmatprep.subr.bf16.mxu0 0
    %951 = vmatpush2.bf16.msra.mxu0 0
    %952 = vmatprep.subr.bf16.mxu0 0
    %953 = vmatpush2.bf16.msra.mxu0 0
    %954 = vmatprep.subr.bf16.mxu0 0
    %955 = vmatpush2.bf16.msra.mxu0 0
    %956 = vmatprep.subr.bf16.mxu0 0
    %957 = vmatpush2.bf16.msra.mxu0 0
    %958 = vmatprep.subr.bf16.mxu0 0
    %959 = vmatpush2.bf16.msra.mxu0 0
    %960 = vmatprep.subr.bf16.mxu0 0
    %961 = vmatpush2.bf16.msra.mxu0 0
    %962 = vmatprep.subr.bf16.mxu0 0
    %963 = vmatpush2.bf16.msra.mxu0 0
    %964 = vmatprep.mubr.bf16.mxu0 0
    %965 = vmatmul.mubr.bf16.gmra.mxu0 %v210
    %v966 = vpop.f32.mrf.mxu0
    %v967 = vadd.f32 0.0, %v966
    %v968 = vpop.f32.mrf.mxu0
    %v969 = vadd.f32 0.0, %v968
    %v970 = vpop.f32.mrf.mxu0
    %v971 = vadd.f32 0.0, %v970
    %v972 = vpop.f32.mrf.mxu0
    %v973 = vadd.f32 0.0, %v972
    %974 = vdwg.mxu0
    %975 = vmatprep.subr.bf16.mxu0 %v773
    %976 = vmatpush1.bf16.msra.mxu0 %v772
    %977 = vmatprep.subr.bf16.mxu0 %v755
    %978 = vmatpush1.bf16.msra.mxu0 %v754
    %979 = vmatprep.subr.bf16.mxu0 %v737
    %980 = vmatpush1.bf16.msra.mxu0 %v736
    %981 = vmatprep.subr.bf16.mxu0 %v719
    %982 = vmatpush1.bf16.msra.mxu0 %v718
    %983 = vmatprep.subr.bf16.mxu0 %v701
    %984 = vmatpush1.bf16.msra.mxu0 %v700
    %985 = vmatprep.subr.bf16.mxu0 %v683
    %986 = vmatpush1.bf16.msra.mxu0 %v682
    %987 = vmatprep.subr.bf16.mxu0 %v665
    %988 = vmatpush1.bf16.msra.mxu0 %v664
    %989 = vmatprep.subr.bf16.mxu0 %v647
    %990 = vmatpush1.bf16.msra.mxu0 %v646
    %991 = vmatprep.subr.bf16.mxu0 0
    %992 = vmatpush2.bf16.msra.mxu0 0
    %993 = vmatprep.subr.bf16.mxu0 0
    %994 = vmatpush2.bf16.msra.mxu0 0
    %995 = vmatprep.subr.bf16.mxu0 0
    %996 = vmatpush2.bf16.msra.mxu0 0
    %997 = vmatprep.subr.bf16.mxu0 0
    %998 = vmatpush2.bf16.msra.mxu0 0
    %999 = vmatprep.subr.bf16.mxu0 0
    %1000 = vmatpush2.bf16.msra.mxu0 0
    %1001 = vmatprep.subr.bf16.mxu0 0
    %1002 = vmatpush2.bf16.msra.mxu0 0
    %1003 = vmatprep.subr.bf16.mxu0 0
    %1004 = vmatpush2.bf16.msra.mxu0 0
    %1005 = vmatprep.subr.bf16.mxu0 0
    %1006 = vmatpush2.bf16.msra.mxu0 0
    %1007 = vmatprep.mubr.bf16.mxu0 0
    %1008 = vmatmul.mubr.bf16.gmra.mxu0 %v210
    %v1009 = vpop.f32.mrf.mxu0
    %v1010 = vadd.f32 0.0, %v1009
    %v1011 = vpop.f32.mrf.mxu0
    %v1012 = vadd.f32 0.0, %v1011
    %v1013 = vpop.f32.mrf.mxu0
    %v1014 = vadd.f32 0.0, %v1013
    %v1015 = vpop.f32.mrf.mxu0
    %v1016 = vadd.f32 0.0, %v1015
    %1017 = vdwg.mxu0
    %1018 = vmatprep.subr.bf16.mxu0 %v775
    %1019 = vmatpush1.bf16.msra.mxu0 %v774
    %1020 = vmatprep.subr.bf16.mxu0 %v757
    %1021 = vmatpush1.bf16.msra.mxu0 %v756
    %1022 = vmatprep.subr.bf16.mxu0 %v739
    %1023 = vmatpush1.bf16.msra.mxu0 %v738
    %1024 = vmatprep.subr.bf16.mxu0 %v721
    %1025 = vmatpush1.bf16.msra.mxu0 %v720
    %1026 = vmatprep.subr.bf16.mxu0 %v703
    %1027 = vmatpush1.bf16.msra.mxu0 %v702
    %1028 = vmatprep.subr.bf16.mxu0 %v685
    %1029 = vmatpush1.bf16.msra.mxu0 %v684
    %1030 = vmatprep.subr.bf16.mxu0 %v667
    %1031 = vmatpush1.bf16.msra.mxu0 %v666
    %1032 = vmatprep.subr.bf16.mxu0 %v649
    %1033 = vmatpush1.bf16.msra.mxu0 %v648
    %1034 = vmatprep.subr.bf16.mxu0 0
    %1035 = vmatpush2.bf16.msra.mxu0 0
    %1036 = vmatprep.subr.bf16.mxu0 0
    %1037 = vmatpush2.bf16.msra.mxu0 0
    %1038 = vmatprep.subr.bf16.mxu0 0
    %1039 = vmatpush2.bf16.msra.mxu0 0
    %1040 = vmatprep.subr.bf16.mxu0 0
    %1041 = vmatpush2.bf16.msra.mxu0 0
    %1042 = vmatprep.subr.bf16.mxu0 0
    %1043 = vmatpush2.bf16.msra.mxu0 0
    %1044 = vmatprep.subr.bf16.mxu0 0
    %1045 = vmatpush2.bf16.msra.mxu0 0
    %1046 = vmatprep.subr.bf16.mxu0 0
    %1047 = vmatpush2.bf16.msra.mxu0 0
    %1048 = vmatprep.subr.bf16.mxu0 0
    %1049 = vmatpush2.bf16.msra.mxu0 0
    %1050 = vmatprep.mubr.bf16.mxu0 0
    %1051 = vmatmul.mubr.bf16.gmra.mxu0 %v210
    %v1052 = vpop.f32.mrf.mxu0
    %v1053 = vadd.f32 0.0, %v1052
    %v1054 = vpop.f32.mrf.mxu0
    %v1055 = vadd.f32 0.0, %v1054
    %v1056 = vpop.f32.mrf.mxu0
    %v1057 = vadd.f32 0.0, %v1056
    %v1058 = vpop.f32.mrf.mxu0
    %v1059 = vadd.f32 0.0, %v1058
    %1060 = vdwg.mxu0
    %1061 = vmatprep.subr.bf16.mxu0 %v777
    %1062 = vmatpush1.bf16.msra.mxu0 %v776
    %1063 = vmatprep.subr.bf16.mxu0 %v759
    %1064 = vmatpush1.bf16.msra.mxu0 %v758
    %1065 = vmatprep.subr.bf16.mxu0 %v741
    %1066 = vmatpush1.bf16.msra.mxu0 %v740
    %1067 = vmatprep.subr.bf16.mxu0 %v723
    %1068 = vmatpush1.bf16.msra.mxu0 %v722
    %1069 = vmatprep.subr.bf16.mxu0 %v705
    %1070 = vmatpush1.bf16.msra.mxu0 %v704
    %1071 = vmatprep.subr.bf16.mxu0 %v687
    %1072 = vmatpush1.bf16.msra.mxu0 %v686
    %1073 = vmatprep.subr.bf16.mxu0 %v669
    %1074 = vmatpush1.bf16.msra.mxu0 %v668
    %1075 = vmatprep.subr.bf16.mxu0 %v651
    %1076 = vmatpush1.bf16.msra.mxu0 %v650
    %1077 = vmatprep.subr.bf16.mxu0 0
    %1078 = vmatpush2.bf16.msra.mxu0 0
    %1079 = vmatprep.subr.bf16.mxu0 0
    %1080 = vmatpush2.bf16.msra.mxu0 0
    %1081 = vmatprep.subr.bf16.mxu0 0
    %1082 = vmatpush2.bf16.msra.mxu0 0
    %1083 = vmatprep.subr.bf16.mxu0 0
    %1084 = vmatpush2.bf16.msra.mxu0 0
    %1085 = vmatprep.subr.bf16.mxu0 0
    %1086 = vmatpush2.bf16.msra.mxu0 0
    %1087 = vmatprep.subr.bf16.mxu0 0
    %1088 = vmatpush2.bf16.msra.mxu0 0
    %1089 = vmatprep.subr.bf16.mxu0 0
    %1090 = vmatpush2.bf16.msra.mxu0 0
    %1091 = vmatprep.subr.bf16.mxu0 0
    %1092 = vmatpush2.bf16.msra.mxu0 0
    %1093 = vmatprep.mubr.bf16.mxu0 0
    %1094 = vmatmul.mubr.bf16.gmra.mxu0 %v210
    %v1095 = vpop.f32.mrf.mxu0
    %v1096 = vadd.f32 0.0, %v1095
    %v1097 = vpop.f32.mrf.mxu0
    %v1098 = vadd.f32 0.0, %v1097
    %v1099 = vpop.f32.mrf.mxu0
    %v1100 = vadd.f32 0.0, %v1099
    %v1101 = vpop.f32.mrf.mxu0
    %v1102 = vadd.f32 0.0, %v1101
    %1103 = vdwg.mxu0
    %1104 = vmatprep.subr.bf16.mxu0 %v779
    %1105 = vmatpush1.bf16.msra.mxu0 %v778
    %1106 = vmatprep.subr.bf16.mxu0 %v761
    %1107 = vmatpush1.bf16.msra.mxu0 %v760
    %1108 = vmatprep.subr.bf16.mxu0 %v743
    %1109 = vmatpush1.bf16.msra.mxu0 %v742
    %1110 = vmatprep.subr.bf16.mxu0 %v725
    %1111 = vmatpush1.bf16.msra.mxu0 %v724
    %1112 = vmatprep.subr.bf16.mxu0 %v707
    %1113 = vmatpush1.bf16.msra.mxu0 %v706
    %1114 = vmatprep.subr.bf16.mxu0 %v689
    %1115 = vmatpush1.bf16.msra.mxu0 %v688
    %1116 = vmatprep.subr.bf16.mxu0 %v671
    %1117 = vmatpush1.bf16.msra.mxu0 %v670
    %1118 = vmatprep.subr.bf16.mxu0 %v653
    %1119 = vmatpush1.bf16.msra.mxu0 %v652
    %1120 = vmatprep.subr.bf16.mxu0 0
    %1121 = vmatpush2.bf16.msra.mxu0 0
    %1122 = vmatprep.subr.bf16.mxu0 0
    %1123 = vmatpush2.bf16.msra.mxu0 0
    %1124 = vmatprep.subr.bf16.mxu0 0
    %1125 = vmatpush2.bf16.msra.mxu0 0
    %1126 = vmatprep.subr.bf16.mxu0 0
    %1127 = vmatpush2.bf16.msra.mxu0 0
    %1128 = vmatprep.subr.bf16.mxu0 0
    %1129 = vmatpush2.bf16.msra.mxu0 0
    %1130 = vmatprep.subr.bf16.mxu0 0
    %1131 = vmatpush2.bf16.msra.mxu0 0
    %1132 = vmatprep.subr.bf16.mxu0 0
    %1133 = vmatpush2.bf16.msra.mxu0 0
    %1134 = vmatprep.subr.bf16.mxu0 0
    %1135 = vmatpush2.bf16.msra.mxu0 0
    %1136 = vmatprep.mubr.bf16.mxu0 0
    %1137 = vmatmul.mubr.bf16.gmra.mxu0 %v210
    %v1138 = vpop.f32.mrf.mxu0
    %v1139 = vadd.f32 0.0, %v1138
    %v1140 = vpop.f32.mrf.mxu0
    %v1141 = vadd.f32 0.0, %v1140
    %v1142 = vpop.f32.mrf.mxu0
    %v1143 = vadd.f32 0.0, %v1142
    %v1144 = vpop.f32.mrf.mxu0
    %v1145 = vadd.f32 0.0, %v1144
    %1146 = vdwg.mxu0
    %1147 = vmatprep.subr.bf16.mxu0 %v781
    %1148 = vmatpush1.bf16.msra.mxu0 %v780
    %1149 = vmatprep.subr.bf16.mxu0 %v763
    %1150 = vmatpush1.bf16.msra.mxu0 %v762
    %1151 = vmatprep.subr.bf16.mxu0 %v745
    %1152 = vmatpush1.bf16.msra.mxu0 %v744
    %1153 = vmatprep.subr.bf16.mxu0 %v727
    %1154 = vmatpush1.bf16.msra.mxu0 %v726
    %1155 = vmatprep.subr.bf16.mxu0 %v709
    %1156 = vmatpush1.bf16.msra.mxu0 %v708
    %1157 = vmatprep.subr.bf16.mxu0 %v691
    %1158 = vmatpush1.bf16.msra.mxu0 %v690
    %1159 = vmatprep.subr.bf16.mxu0 %v673
    %1160 = vmatpush1.bf16.msra.mxu0 %v672
    %1161 = vmatprep.subr.bf16.mxu0 %v655
    %1162 = vmatpush1.bf16.msra.mxu0 %v654
    %1163 = vmatprep.subr.bf16.mxu0 0
    %1164 = vmatpush2.bf16.msra.mxu0 0
    %1165 = vmatprep.subr.bf16.mxu0 0
    %1166 = vmatpush2.bf16.msra.mxu0 0
    %1167 = vmatprep.subr.bf16.mxu0 0
    %1168 = vmatpush2.bf16.msra.mxu0 0
    %1169 = vmatprep.subr.bf16.mxu0 0
    %1170 = vmatpush2.bf16.msra.mxu0 0
    %1171 = vmatprep.subr.bf16.mxu0 0
    %1172 = vmatpush2.bf16.msra.mxu0 0
    %1173 = vmatprep.subr.bf16.mxu0 0
    %1174 = vmatpush2.bf16.msra.mxu0 0
    %1175 = vmatprep.subr.bf16.mxu0 0
    %1176 = vmatpush2.bf16.msra.mxu0 0
    %1177 = vmatprep.subr.bf16.mxu0 0
    %1178 = vmatpush2.bf16.msra.mxu0 0
    %1179 = vmatprep.mubr.bf16.mxu0 0
    %1180 = vmatmul.mubr.bf16.gmra.mxu0 %v210
    %v1181 = vpop.f32.mrf.mxu0
    %v1182 = vadd.f32 0.0, %v1181
    %v1183 = vpop.f32.mrf.mxu0
    %v1184 = vadd.f32 0.0, %v1183
    %v1185 = vpop.f32.mrf.mxu0
    %v1186 = vadd.f32 0.0, %v1185
    %v1187 = vpop.f32.mrf.mxu0
    %v1188 = vadd.f32 0.0, %v1187
    %1189 = vdwg.mxu0
    %1190 = vmatprep.subr.bf16.mxu0 %v783
    %1191 = vmatpush1.bf16.msra.mxu0 %v782
    %1192 = vmatprep.subr.bf16.mxu0 %v765
    %1193 = vmatpush1.bf16.msra.mxu0 %v764
    %1194 = vmatprep.subr.bf16.mxu0 %v747
    %1195 = vmatpush1.bf16.msra.mxu0 %v746
    %1196 = vmatprep.subr.bf16.mxu0 %v729
    %1197 = vmatpush1.bf16.msra.mxu0 %v728
    %1198 = vmatprep.subr.bf16.mxu0 %v711
    %1199 = vmatpush1.bf16.msra.mxu0 %v710
    %1200 = vmatprep.subr.bf16.mxu0 %v693
    %1201 = vmatpush1.bf16.msra.mxu0 %v692
    %1202 = vmatprep.subr.bf16.mxu0 %v675
    %1203 = vmatpush1.bf16.msra.mxu0 %v674
    %1204 = vmatprep.subr.bf16.mxu0 %v657
    %1205 = vmatpush1.bf16.msra.mxu0 %v656
    %1206 = vmatprep.subr.bf16.mxu0 0
    %1207 = vmatpush2.bf16.msra.mxu0 0
    %1208 = vmatprep.subr.bf16.mxu0 0
    %1209 = vmatpush2.bf16.msra.mxu0 0
    %1210 = vmatprep.subr.bf16.mxu0 0
    %1211 = vmatpush2.bf16.msra.mxu0 0
    %1212 = vmatprep.subr.bf16.mxu0 0
    %1213 = vmatpush2.bf16.msra.mxu0 0
    %1214 = vmatprep.subr.bf16.mxu0 0
    %1215 = vmatpush2.bf16.msra.mxu0 0
    %1216 = vmatprep.subr.bf16.mxu0 0
    %1217 = vmatpush2.bf16.msra.mxu0 0
    %1218 = vmatprep.subr.bf16.mxu0 0
    %1219 = vmatpush2.bf16.msra.mxu0 0
    %1220 = vmatprep.subr.bf16.mxu0 0
    %1221 = vmatpush2.bf16.msra.mxu0 0
    %1222 = vmatprep.mubr.bf16.mxu0 0
    %1223 = vmatmul.mubr.bf16.gmra.mxu0 %v210
    %v1224 = vpop.f32.mrf.mxu0
    %v1225 = vadd.f32 0.0, %v1224
    %v1226 = vpop.f32.mrf.mxu0
    %v1227 = vadd.f32 0.0, %v1226
    %v1228 = vpop.f32.mrf.mxu0
    %v1229 = vadd.f32 0.0, %v1228
    %v1230 = vpop.f32.mrf.mxu0
    %v1231 = vadd.f32 0.0, %v1230
    %1232 = vdwg.mxu0
    %1233 = vmatprep.subr.bf16.mxu0 %v785
    %1234 = vmatpush1.bf16.msra.mxu0 %v784
    %1235 = vmatprep.subr.bf16.mxu0 %v767
    %1236 = vmatpush1.bf16.msra.mxu0 %v766
    %1237 = vmatprep.subr.bf16.mxu0 %v749
    %1238 = vmatpush1.bf16.msra.mxu0 %v748
    %1239 = vmatprep.subr.bf16.mxu0 %v731
    %1240 = vmatpush1.bf16.msra.mxu0 %v730
    %1241 = vmatprep.subr.bf16.mxu0 %v713
    %1242 = vmatpush1.bf16.msra.mxu0 %v712
    %1243 = vmatprep.subr.bf16.mxu0 %v695
    %1244 = vmatpush1.bf16.msra.mxu0 %v694
    %1245 = vmatprep.subr.bf16.mxu0 %v677
    %1246 = vmatpush1.bf16.msra.mxu0 %v676
    %1247 = vmatprep.subr.bf16.mxu0 %v659
    %1248 = vmatpush1.bf16.msra.mxu0 %v658
    %1249 = vmatprep.subr.bf16.mxu0 0
    %1250 = vmatpush2.bf16.msra.mxu0 0
    %1251 = vmatprep.subr.bf16.mxu0 0
    %1252 = vmatpush2.bf16.msra.mxu0 0
    %1253 = vmatprep.subr.bf16.mxu0 0
    %1254 = vmatpush2.bf16.msra.mxu0 0
    %1255 = vmatprep.subr.bf16.mxu0 0
    %1256 = vmatpush2.bf16.msra.mxu0 0
    %1257 = vmatprep.subr.bf16.mxu0 0
    %1258 = vmatpush2.bf16.msra.mxu0 0
    %1259 = vmatprep.subr.bf16.mxu0 0
    %1260 = vmatpush2.bf16.msra.mxu0 0
    %1261 = vmatprep.subr.bf16.mxu0 0
    %1262 = vmatpush2.bf16.msra.mxu0 0
    %1263 = vmatprep.subr.bf16.mxu0 0
    %1264 = vmatpush2.bf16.msra.mxu0 0
    %1265 = vmatprep.mubr.bf16.mxu0 0
    %1266 = vmatmul.mubr.bf16.gmra.mxu0 %v210
    %v1267 = vpop.f32.mrf.mxu0
    %v1268 = vadd.f32 0.0, %v1267
    %v1269 = vpop.f32.mrf.mxu0
    %v1270 = vadd.f32 0.0, %v1269
    %v1271 = vpop.f32.mrf.mxu0
    %v1272 = vadd.f32 0.0, %v1271
    %v1273 = vpop.f32.mrf.mxu0
    %v1274 = vadd.f32 0.0, %v1273
    %1275 = vdwg.mxu0
    %1276 = vmatprep.subr.bf16.mxu0 %v787
    %1277 = vmatpush1.bf16.msra.mxu0 %v786
    %1278 = vmatprep.subr.bf16.mxu0 %v769
    %1279 = vmatpush1.bf16.msra.mxu0 %v768
    %1280 = vmatprep.subr.bf16.mxu0 %v751
    %1281 = vmatpush1.bf16.msra.mxu0 %v750
    %1282 = vmatprep.subr.bf16.mxu0 %v733
    %1283 = vmatpush1.bf16.msra.mxu0 %v732
    %1284 = vmatprep.subr.bf16.mxu0 %v715
    %1285 = vmatpush1.bf16.msra.mxu0 %v714
    %1286 = vmatprep.subr.bf16.mxu0 %v697
    %1287 = vmatpush1.bf16.msra.mxu0 %v696
    %1288 = vmatprep.subr.bf16.mxu0 %v679
    %1289 = vmatpush1.bf16.msra.mxu0 %v678
    %1290 = vmatprep.subr.bf16.mxu0 %v661
    %1291 = vmatpush1.bf16.msra.mxu0 %v660
    %1292 = vmatprep.subr.bf16.mxu0 0
    %1293 = vmatpush2.bf16.msra.mxu0 0
    %1294 = vmatprep.subr.bf16.mxu0 0
    %1295 = vmatpush2.bf16.msra.mxu0 0
    %1296 = vmatprep.subr.bf16.mxu0 0
    %1297 = vmatpush2.bf16.msra.mxu0 0
    %1298 = vmatprep.subr.bf16.mxu0 0
    %1299 = vmatpush2.bf16.msra.mxu0 0
    %1300 = vmatprep.subr.bf16.mxu0 0
    %1301 = vmatpush2.bf16.msra.mxu0 0
    %1302 = vmatprep.subr.bf16.mxu0 0
    %1303 = vmatpush2.bf16.msra.mxu0 0
    %1304 = vmatprep.subr.bf16.mxu0 0
    %1305 = vmatpush2.bf16.msra.mxu0 0
    %1306 = vmatprep.subr.bf16.mxu0 0
    %1307 = vmatpush2.bf16.msra.mxu0 0
    %1308 = vmatprep.mubr.bf16.mxu0 0
    %1309 = vmatmul.mubr.bf16.gmra.mxu0 %v210
    %v1310 = vpop.f32.mrf.mxu0
    %v1311 = vadd.f32 0.0, %v1310
    %v1312 = vpop.f32.mrf.mxu0
    %v1313 = vadd.f32 0.0, %v1312
    %v1314 = vpop.f32.mrf.mxu0
    %v1315 = vadd.f32 0.0, %v1314
    %v1316 = vpop.f32.mrf.mxu0
    %v1317 = vadd.f32 0.0, %v1316
    %1318 = vdwg.mxu0
    %v1319 = vpack.c.bf16 %v971, %v967
    %v1320 = vpack.c.bf16 %v973, %v969
    %v1321 = vpack.c.bf16 %v1014, %v1010
    %v1322 = vpack.c.bf16 %v1016, %v1012
    %v1323 = vpack.c.bf16 %v1057, %v1053
    %v1324 = vpack.c.bf16 %v1059, %v1055
    %v1325 = vpack.c.bf16 %v1100, %v1096
    %v1326 = vpack.c.bf16 %v1102, %v1098
    %v1327 = vpack.c.bf16 %v1143, %v1139
    %v1328 = vpack.c.bf16 %v1145, %v1141
    %v1329 = vpack.c.bf16 %v1186, %v1182
    %v1330 = vpack.c.bf16 %v1188, %v1184
    %v1331 = vpack.c.bf16 %v1229, %v1225
    %v1332 = vpack.c.bf16 %v1231, %v1227
    %v1333 = vpack.c.bf16 %v1272, %v1268
    %v1334 = vpack.c.bf16 %v1274, %v1270
    %v1335 = vpack.c.bf16 %v1315, %v1311
    %v1336 = vpack.c.bf16 %v1317, %v1313
    %v1355 = vunpack.c.l.b16 %v1319
    %v1356 = vunpack.c.l.b16 %v1320
    %v1357 = vunpack.c.l.b16 %v1321
    %v1358 = vunpack.c.l.b16 %v1322
    %v1359 = vunpack.c.l.b16 %v1323
    %v1360 = vunpack.c.l.b16 %v1324
    %v1361 = vunpack.c.l.b16 %v1325
    %v1362 = vunpack.c.l.b16 %v1326
    %v1363 = vunpack.c.l.b16 %v1327
    %v1364 = vunpack.c.l.b16 %v1328
    %v1365 = vunpack.c.l.b16 %v1329
    %v1366 = vunpack.c.l.b16 %v1330
    %v1367 = vunpack.c.l.b16 %v1331
    %v1368 = vunpack.c.l.b16 %v1332
    %v1369 = vunpack.c.l.b16 %v1333
    %v1370 = vunpack.c.l.b16 %v1334
    %v1371 = vunpack.c.l.b16 %v1335
    %v1372 = vunpack.c.l.b16 %v1336
    %v1373 = vunpack.c.h.b16 %v1319
    %v1374 = vunpack.c.h.b16 %v1320
    %v1375 = vunpack.c.h.b16 %v1321
    %v1376 = vunpack.c.h.b16 %v1322
    %v1377 = vunpack.c.h.b16 %v1323
    %v1378 = vunpack.c.h.b16 %v1324
    %v1379 = vunpack.c.h.b16 %v1325
    %v1380 = vunpack.c.h.b16 %v1326
    %v1381 = vunpack.c.h.b16 %v1327
    %v1382 = vunpack.c.h.b16 %v1328
    %v1383 = vunpack.c.h.b16 %v1329
    %v1384 = vunpack.c.h.b16 %v1330
    %v1385 = vunpack.c.h.b16 %v1331
    %v1386 = vunpack.c.h.b16 %v1332
    %v1387 = vunpack.c.h.b16 %v1333
    %v1388 = vunpack.c.h.b16 %v1334
    %v1389 = vunpack.c.h.b16 %v1335
    %v1390 = vunpack.c.h.b16 %v1336
    %v1391 = vpack.c.b16 %v1356, %v1355
    %v1392 = vpack.c.b16 %v1358, %v1357
    %v1393 = vpack.c.b16 %v1360, %v1359
    %v1394 = vpack.c.b16 %v1362, %v1361
    %v1395 = vpack.c.b16 %v1364, %v1363
    %v1396 = vpack.c.b16 %v1366, %v1365
    %v1397 = vpack.c.b16 %v1368, %v1367
    %v1398 = vpack.c.b16 %v1370, %v1369
    %v1399 = vpack.c.b16 %v1372, %v1371
    %v1400 = vpack.c.b16 %v1374, %v1373
    %v1401 = vpack.c.b16 %v1376, %v1375
    %v1402 = vpack.c.b16 %v1378, %v1377
    %v1403 = vpack.c.b16 %v1380, %v1379
    %v1404 = vpack.c.b16 %v1382, %v1381
    %v1405 = vpack.c.b16 %v1384, %v1383
    %v1406 = vpack.c.b16 %v1386, %v1385
    %v1407 = vpack.c.b16 %v1388, %v1387
    %v1408 = vpack.c.b16 %v1390, %v1389
    %1427 = vst [vmem:[#allocation2] sm:$0xff] %v1391
    %1428 = vst [vmem:[#allocation2 + $0x8] sm:$0xff] %v1392
    %1429 = vst [vmem:[#allocation2 + $0x10] sm:$0xff] %v1393
    %1430 = vst [vmem:[#allocation2 + $0x18] sm:$0xff] %v1394
    %1431 = vst [vmem:[#allocation2 + $0x20] sm:$0xff] %v1395
    %1432 = vst [vmem:[#allocation2 + $0x28] sm:$0xff] %v1396
    %1433 = vst [vmem:[#allocation2 + $0x30] sm:$0xff] %v1397
    %1434 = vst [vmem:[#allocation2 + $0x38] sm:$0xff] %v1398
    %1435 = vst [vmem:[#allocation2 + $0x40] sm:$0xff] %v1399
    %1436 = vst [vmem:[#allocation2 + $0x48] sm:$0xff] %v1400
    %1437 = vst [vmem:[#allocation2 + $0x50] sm:$0xff] %v1401
    %1438 = vst [vmem:[#allocation2 + $0x58] sm:$0xff] %v1402
    %1439 = vst [vmem:[#allocation2 + $0x60] sm:$0xff] %v1403
    %1440 = vst [vmem:[#allocation2 + $0x68] sm:$0xff] %v1404
    %1441 = vst [vmem:[#allocation2 + $0x70] sm:$0xff] %v1405
    %1442 = vst [vmem:[#allocation2 + $0x78] sm:$0xff] %v1406
    %1443 = vst [vmem:[#allocation2 + $0x80] sm:$0xff] %v1407
    %1444 = vst [vmem:[#allocation2 + $0x88] sm:$0xff] %v1408
    %v1445 = vld [vmem:[#allocation2] sm:$0xf]
    %v1446 = vld [vmem:[#allocation2 + $0x18] sm:$0xf]
    %v1447 = vld [vmem:[#allocation2 + $0x30] sm:$0xf]
    %1448 = vmatprep.subr.bf16.mxu0 0
    %1449 = vmatpush1.bf16.xpose.msra.mxu0 0
    %1450 = vmatprep.subr.bf16.mxu0 0
    %1451 = vmatpush1.bf16.xpose.msra.mxu0 0
    %1452 = vmatprep.subr.bf16.mxu0 0
    %1453 = vmatpush1.bf16.xpose.msra.mxu0 0
    %1454 = vmatprep.subr.bf16.mxu0 0
    %1455 = vmatpush1.bf16.xpose.msra.mxu0 0
    %1456 = vmatprep.subr.bf16.mxu0 0
    %1457 = vmatpush1.bf16.xpose.msra.mxu0 0
    %1458 = vmatprep.subr.bf16.mxu0 0
    %1459 = vmatpush1.bf16.xpose.msra.mxu0 0
    %1460 = vmatprep.subr.bf16.mxu0 0
    %1461 = vmatpush1.bf16.xpose.msra.mxu0 0
    %1462 = vmatprep.subr.bf16.mxu0 0
    %1463 = vmatpush1.bf16.xpose.msra.mxu0 %v1445
    %1464 = vmatprep.subr.bf16.mxu0 0
    %1465 = vmatpush2.bf16.xpose.msra.mxu0 0
    %1466 = vmatprep.subr.bf16.mxu0 0
    %1467 = vmatpush2.bf16.xpose.msra.mxu0 0
    %1468 = vmatprep.subr.bf16.mxu0 0
    %1469 = vmatpush2.bf16.xpose.msra.mxu0 0
    %1470 = vmatprep.subr.bf16.mxu0 0
    %1471 = vmatpush2.bf16.xpose.msra.mxu0 0
    %1472 = vmatprep.subr.bf16.mxu0 0
    %1473 = vmatpush2.bf16.xpose.msra.mxu0 0
    %1474 = vmatprep.subr.bf16.mxu0 0
    %1475 = vmatpush2.bf16.xpose.msra.mxu0 0
    %1476 = vmatprep.subr.bf16.mxu0 0
    %1477 = vmatpush2.bf16.xpose.msra.mxu0 0
    %1478 = vmatprep.subr.bf16.mxu0 0
    %1479 = vmatpush2.bf16.xpose.msra.mxu0 0
    %1480 = vmatprep.mubr.bf16.mxu0 0
    %1481 = vmatmul.mubr.bf16.gmra.mxu0 %v1446
    %v1482 = vpop.f32.mrf.mxu0
    %v1483 = vadd.f32 0.0, %v1482
    %v1484 = vpop.f32.mrf.mxu0
    %v1485 = vpop.f32.mrf.mxu0
    %v1486 = vpop.f32.mrf.mxu0
    %1487 = vdwg.mxu0
    %vm1488 = vcmask 64512
    %v1489 = vsel %vm1488, %v1483, -inf
    %1490 = vmax.xlane.f32.xlu0 %v1489
    %v1491 = vpop.xlane.xlu0 %1490
    %v1492 = vsub.f32 %v1483, %v1491
    %v1493 = vmul.f32 %v1492, 1.442695
    %v1494 = vpow.pop %v1493
    %v1495 = vsel %vm1488, %v1494, 0.0
    %1496 = vadd.xlane.f32.xlu0 %v1495
    %v1497 = vpop.xlane.xlu0 %1496
    %v1498 = vrcp.pop %v1497
    %v1499 = vmul.f32 %v1494, %v1498
    %v1500 = vpack.c.bf16 %v1499, %v1499
    %v1502 = vsel %vm1488, %v1500, 0
    %vm1504 = vcmask 1043456
    %v1506 = vsel %vm1504, %v1447, 0
    %1508 = vmatprep.subr.bf16.mxu0 0
    %1509 = vmatpush1.bf16.msra.mxu0 0
    %1510 = vmatprep.subr.bf16.mxu0 0
    %1511 = vmatpush1.bf16.msra.mxu0 0
    %1512 = vmatprep.subr.bf16.mxu0 0
    %1513 = vmatpush1.bf16.msra.mxu0 0
    %1514 = vmatprep.subr.bf16.mxu0 0
    %1515 = vmatpush1.bf16.msra.mxu0 0
    %1516 = vmatprep.subr.bf16.mxu0 0
    %1517 = vmatpush1.bf16.msra.mxu0 0
    %1518 = vmatprep.subr.bf16.mxu0 0
    %1519 = vmatpush1.bf16.msra.mxu0 0
    %1520 = vmatprep.subr.bf16.mxu0 0
    %1521 = vmatpush1.bf16.msra.mxu0 0
    %1522 = vmatprep.subr.bf16.mxu0 0
    %1523 = vmatpush1.bf16.msra.mxu0 %v1506
    %1524 = vmatprep.subr.bf16.mxu0 0
    %1525 = vmatpush2.bf16.msra.mxu0 0
    %1526 = vmatprep.subr.bf16.mxu0 0
    %1527 = vmatpush2.bf16.msra.mxu0 0
    %1528 = vmatprep.subr.bf16.mxu0 0
    %1529 = vmatpush2.bf16.msra.mxu0 0
    %1530 = vmatprep.subr.bf16.mxu0 0
    %1531 = vmatpush2.bf16.msra.mxu0 0
    %1532 = vmatprep.subr.bf16.mxu0 0
    %1533 = vmatpush2.bf16.msra.mxu0 0
    %1534 = vmatprep.subr.bf16.mxu0 0
    %1535 = vmatpush2.bf16.msra.mxu0 0
    %1536 = vmatprep.subr.bf16.mxu0 0
    %1537 = vmatpush2.bf16.msra.mxu0 0
    %1538 = vmatprep.subr.bf16.mxu0 0
    %1539 = vmatpush2.bf16.msra.mxu0 0
    %1540 = vmatprep.mubr.bf16.mxu0 0
    %1541 = vmatmul.mubr.bf16.gmra.mxu0 %v1502
    %v1542 = vpop.f32.mrf.mxu0
    %v1543 = vadd.f32 0.0, %v1542
    %v1544 = vpop.f32.mrf.mxu0
    %v1545 = vpop.f32.mrf.mxu0
    %v1546 = vpop.f32.mrf.mxu0
    %1547 = vdwg.mxu0
    %v1548 = vpack.c.bf16 %v1543, %v1543
    %1549 = vst [vmem:[#allocation3] sm:$0xf] %v1548
    %v1550 = vld [vmem:[#allocation2 + $0x4] sm:$0xf]
    %v1551 = vld [vmem:[#allocation2 + $0x1c] sm:$0xf]
    %v1552 = vld [vmem:[#allocation2 + $0x34] sm:$0xf]
    %1553 = vmatprep.subr.bf16.mxu0 0
    %1554 = vmatpush1.bf16.xpose.msra.mxu0 0
    %1555 = vmatprep.subr.bf16.mxu0 0
    %1556 = vmatpush1.bf16.xpose.msra.mxu0 0
    %1557 = vmatprep.subr.bf16.mxu0 0
    %1558 = vmatpush1.bf16.xpose.msra.mxu0 0
    %1559 = vmatprep.subr.bf16.mxu0 0
    %1560 = vmatpush1.bf16.xpose.msra.mxu0 0
    %1561 = vmatprep.subr.bf16.mxu0 0
    %1562 = vmatpush1.bf16.xpose.msra.mxu0 0
    %1563 = vmatprep.subr.bf16.mxu0 0
    %1564 = vmatpush1.bf16.xpose.msra.mxu0 0
    %1565 = vmatprep.subr.bf16.mxu0 0
    %1566 = vmatpush1.bf16.xpose.msra.mxu0 0
    %1567 = vmatprep.subr.bf16.mxu0 0
    %1568 = vmatpush1.bf16.xpose.msra.mxu0 %v1550
    %1569 = vmatprep.subr.bf16.mxu0 0
    %1570 = vmatpush2.bf16.xpose.msra.mxu0 0
    %1571 = vmatprep.subr.bf16.mxu0 0
    %1572 = vmatpush2.bf16.xpose.msra.mxu0 0
    %1573 = vmatprep.subr.bf16.mxu0 0
    %1574 = vmatpush2.bf16.xpose.msra.mxu0 0
    %1575 = vmatprep.subr.bf16.mxu0 0
    %1576 = vmatpush2.bf16.xpose.msra.mxu0 0
    %1577 = vmatprep.subr.bf16.mxu0 0
    %1578 = vmatpush2.bf16.xpose.msra.mxu0 0
    %1579 = vmatprep.subr.bf16.mxu0 0
    %1580 = vmatpush2.bf16.xpose.msra.mxu0 0
    %1581 = vmatprep.subr.bf16.mxu0 0
    %1582 = vmatpush2.bf16.xpose.msra.mxu0 0
    %1583 = vmatprep.subr.bf16.mxu0 0
    %1584 = vmatpush2.bf16.xpose.msra.mxu0 0
    %1585 = vmatprep.mubr.bf16.mxu0 0
    %1586 = vmatmul.mubr.bf16.gmra.mxu0 %v1551
    %v1587 = vpop.f32.mrf.mxu0
    %v1588 = vadd.f32 0.0, %v1587
    %v1589 = vpop.f32.mrf.mxu0
    %v1590 = vpop.f32.mrf.mxu0
    %v1591 = vpop.f32.mrf.mxu0
    %1592 = vdwg.mxu0
    %v1593 = vsel %vm1488, %v1588, -inf
    %1594 = vmax.xlane.f32.xlu0 %v1593
    %v1595 = vpop.xlane.xlu0 %1594
    %v1596 = vsub.f32 %v1588, %v1595
    %v1597 = vmul.f32 %v1596, 1.442695
    %v1598 = vpow.pop %v1597
    %v1599 = vsel %vm1488, %v1598, 0.0
    %1600 = vadd.xlane.f32.xlu0 %v1599
    %v1601 = vpop.xlane.xlu0 %1600
    %v1602 = vrcp.pop %v1601
    %v1603 = vmul.f32 %v1598, %v1602
    %v1604 = vpack.c.bf16 %v1603, %v1603
    %v1606 = vsel %vm1488, %v1604, 0
    %v1609 = vsel %vm1504, %v1552, 0
    %1611 = vmatprep.subr.bf16.mxu0 0
    %1612 = vmatpush1.bf16.msra.mxu0 0
    %1613 = vmatprep.subr.bf16.mxu0 0
    %1614 = vmatpush1.bf16.msra.mxu0 0
    %1615 = vmatprep.subr.bf16.mxu0 0
    %1616 = vmatpush1.bf16.msra.mxu0 0
    %1617 = vmatprep.subr.bf16.mxu0 0
    %1618 = vmatpush1.bf16.msra.mxu0 0
    %1619 = vmatprep.subr.bf16.mxu0 0
    %1620 = vmatpush1.bf16.msra.mxu0 0
    %1621 = vmatprep.subr.bf16.mxu0 0
    %1622 = vmatpush1.bf16.msra.mxu0 0
    %1623 = vmatprep.subr.bf16.mxu0 0
    %1624 = vmatpush1.bf16.msra.mxu0 0
    %1625 = vmatprep.subr.bf16.mxu0 0
    %1626 = vmatpush1.bf16.msra.mxu0 %v1609
    %1627 = vmatprep.subr.bf16.mxu0 0
    %1628 = vmatpush2.bf16.msra.mxu0 0
    %1629 = vmatprep.subr.bf16.mxu0 0
    %1630 = vmatpush2.bf16.msra.mxu0 0
    %1631 = vmatprep.subr.bf16.mxu0 0
    %1632 = vmatpush2.bf16.msra.mxu0 0
    %1633 = vmatprep.subr.bf16.mxu0 0
    %1634 = vmatpush2.bf16.msra.mxu0 0
    %1635 = vmatprep.subr.bf16.mxu0 0
    %1636 = vmatpush2.bf16.msra.mxu0 0
    %1637 = vmatprep.subr.bf16.mxu0 0
    %1638 = vmatpush2.bf16.msra.mxu0 0
    %1639 = vmatprep.subr.bf16.mxu0 0
    %1640 = vmatpush2.bf16.msra.mxu0 0
    %1641 = vmatprep.subr.bf16.mxu0 0
    %1642 = vmatpush2.bf16.msra.mxu0 0
    %1643 = vmatprep.mubr.bf16.mxu0 0
    %1644 = vmatmul.mubr.bf16.gmra.mxu0 %v1606
    %v1645 = vpop.f32.mrf.mxu0
    %v1646 = vadd.f32 0.0, %v1645
    %v1647 = vpop.f32.mrf.mxu0
    %v1648 = vpop.f32.mrf.mxu0
    %v1649 = vpop.f32.mrf.mxu0
    %1650 = vdwg.mxu0
    %v1651 = vpack.c.bf16 %v1646, %v1646
    %1652 = vst [vmem:[#allocation3 + $0x4] sm:$0xf] %v1651
    %v1653 = vld [vmem:[#allocation2 + $0x8] sm:$0xf]
    %v1654 = vld [vmem:[#allocation2 + $0x20] sm:$0xf]
    %v1655 = vld [vmem:[#allocation2 + $0x38] sm:$0xf]
    %1656 = vmatprep.subr.bf16.mxu0 0
    %1657 = vmatpush1.bf16.xpose.msra.mxu0 0
    %1658 = vmatprep.subr.bf16.mxu0 0
    %1659 = vmatpush1.bf16.xpose.msra.mxu0 0
    %1660 = vmatprep.subr.bf16.mxu0 0
    %1661 = vmatpush1.bf16.xpose.msra.mxu0 0
    %1662 = vmatprep.subr.bf16.mxu0 0
    %1663 = vmatpush1.bf16.xpose.msra.mxu0 0
    %1664 = vmatprep.subr.bf16.mxu0 0
    %1665 = vmatpush1.bf16.xpose.msra.mxu0 0
    %1666 = vmatprep.subr.bf16.mxu0 0
    %1667 = vmatpush1.bf16.xpose.msra.mxu0 0
    %1668 = vmatprep.subr.bf16.mxu0 0
    %1669 = vmatpush1.bf16.xpose.msra.mxu0 0
    %1670 = vmatprep.subr.bf16.mxu0 0
    %1671 = vmatpush1.bf16.xpose.msra.mxu0 %v1653
    %1672 = vmatprep.subr.bf16.mxu0 0
    %1673 = vmatpush2.bf16.xpose.msra.mxu0 0
    %1674 = vmatprep.subr.bf16.mxu0 0
    %1675 = vmatpush2.bf16.xpose.msra.mxu0 0
    %1676 = vmatprep.subr.bf16.mxu0 0
    %1677 = vmatpush2.bf16.xpose.msra.mxu0 0
    %1678 = vmatprep.subr.bf16.mxu0 0
    %1679 = vmatpush2.bf16.xpose.msra.mxu0 0
    %1680 = vmatprep.subr.bf16.mxu0 0
    %1681 = vmatpush2.bf16.xpose.msra.mxu0 0
    %1682 = vmatprep.subr.bf16.mxu0 0
    %1683 = vmatpush2.bf16.xpose.msra.mxu0 0
    %1684 = vmatprep.subr.bf16.mxu0 0
    %1685 = vmatpush2.bf16.xpose.msra.mxu0 0
    %1686 = vmatprep.subr.bf16.mxu0 0
    %1687 = vmatpush2.bf16.xpose.msra.mxu0 0
    %1688 = vmatprep.mubr.bf16.mxu0 0
    %1689 = vmatmul.mubr.bf16.gmra.mxu0 %v1654
    %v1690 = vpop.f32.mrf.mxu0
    %v1691 = vadd.f32 0.0, %v1690
    %v1692 = vpop.f32.mrf.mxu0
    %v1693 = vpop.f32.mrf.mxu0
    %v1694 = vpop.f32.mrf.mxu0
    %1695 = vdwg.mxu0
    %v1696 = vsel %vm1488, %v1691, -inf
    %1697 = vmax.xlane.f32.xlu0 %v1696
    %v1698 = vpop.xlane.xlu0 %1697
    %v1699 = vsub.f32 %v1691, %v1698
    %v1700 = vmul.f32 %v1699, 1.442695
    %v1701 = vpow.pop %v1700
    %v1702 = vsel %vm1488, %v1701, 0.0
    %1703 = vadd.xlane.f32.xlu0 %v1702
    %v1704 = vpop.xlane.xlu0 %1703
    %v1705 = vrcp.pop %v1704
    %v1706 = vmul.f32 %v1701, %v1705
    %v1707 = vpack.c.bf16 %v1706, %v1706
    %v1709 = vsel %vm1488, %v1707, 0
    %v1712 = vsel %vm1504, %v1655, 0
    %1714 = vmatprep.subr.bf16.mxu0 0
    %1715 = vmatpush1.bf16.msra.mxu0 0
    %1716 = vmatprep.subr.bf16.mxu0 0
    %1717 = vmatpush1.bf16.msra.mxu0 0
    %1718 = vmatprep.subr.bf16.mxu0 0
    %1719 = vmatpush1.bf16.msra.mxu0 0
    %1720 = vmatprep.subr.bf16.mxu0 0
    %1721 = vmatpush1.bf16.msra.mxu0 0
    %1722 = vmatprep.subr.bf16.mxu0 0
    %1723 = vmatpush1.bf16.msra.mxu0 0
    %1724 = vmatprep.subr.bf16.mxu0 0
    %1725 = vmatpush1.bf16.msra.mxu0 0
    %1726 = vmatprep.subr.bf16.mxu0 0
    %1727 = vmatpush1.bf16.msra.mxu0 0
    %1728 = vmatprep.subr.bf16.mxu0 0
    %1729 = vmatpush1.bf16.msra.mxu0 %v1712
    %1730 = vmatprep.subr.bf16.mxu0 0
    %1731 = vmatpush2.bf16.msra.mxu0 0
    %1732 = vmatprep.subr.bf16.mxu0 0
    %1733 = vmatpush2.bf16.msra.mxu0 0
    %1734 = vmatprep.subr.bf16.mxu0 0
    %1735 = vmatpush2.bf16.msra.mxu0 0
    %1736 = vmatprep.subr.bf16.mxu0 0
    %1737 = vmatpush2.bf16.msra.mxu0 0
    %1738 = vmatprep.subr.bf16.mxu0 0
    %1739 = vmatpush2.bf16.msra.mxu0 0
    %1740 = vmatprep.subr.bf16.mxu0 0
    %1741 = vmatpush2.bf16.msra.mxu0 0
    %1742 = vmatprep.subr.bf16.mxu0 0
    %1743 = vmatpush2.bf16.msra.mxu0 0
    %1744 = vmatprep.subr.bf16.mxu0 0
    %1745 = vmatpush2.bf16.msra.mxu0 0
    %1746 = vmatprep.mubr.bf16.mxu0 0
    %1747 = vmatmul.mubr.bf16.gmra.mxu0 %v1709
    %v1748 = vpop.f32.mrf.mxu0
    %v1749 = vadd.f32 0.0, %v1748
    %v1750 = vpop.f32.mrf.mxu0
    %v1751 = vpop.f32.mrf.mxu0
    %v1752 = vpop.f32.mrf.mxu0
    %1753 = vdwg.mxu0
    %v1754 = vpack.c.bf16 %v1749, %v1749
    %1755 = vst [vmem:[#allocation3 + $0x8] sm:$0xf] %v1754
    %v1756 = vld [vmem:[#allocation2 + $0xc] sm:$0xf]
    %v1757 = vld [vmem:[#allocation2 + $0x24] sm:$0xf]
    %v1758 = vld [vmem:[#allocation2 + $0x3c] sm:$0xf]
    %1759 = vmatprep.subr.bf16.mxu0 0
    %1760 = vmatpush1.bf16.xpose.msra.mxu0 0
    %1761 = vmatprep.subr.bf16.mxu0 0
    %1762 = vmatpush1.bf16.xpose.msra.mxu0 0
    %1763 = vmatprep.subr.bf16.mxu0 0
    %1764 = vmatpush1.bf16.xpose.msra.mxu0 0
    %1765 = vmatprep.subr.bf16.mxu0 0
    %1766 = vmatpush1.bf16.xpose.msra.mxu0 0
    %1767 = vmatprep.subr.bf16.mxu0 0
    %1768 = vmatpush1.bf16.xpose.msra.mxu0 0
    %1769 = vmatprep.subr.bf16.mxu0 0
    %1770 = vmatpush1.bf16.xpose.msra.mxu0 0
    %1771 = vmatprep.subr.bf16.mxu0 0
    %1772 = vmatpush1.bf16.xpose.msra.mxu0 0
    %1773 = vmatprep.subr.bf16.mxu0 0
    %1774 = vmatpush1.bf16.xpose.msra.mxu0 %v1756
    %1775 = vmatprep.subr.bf16.mxu0 0
    %1776 = vmatpush2.bf16.xpose.msra.mxu0 0
    %1777 = vmatprep.subr.bf16.mxu0 0
    %1778 = vmatpush2.bf16.xpose.msra.mxu0 0
    %1779 = vmatprep.subr.bf16.mxu0 0
    %1780 = vmatpush2.bf16.xpose.msra.mxu0 0
    %1781 = vmatprep.subr.bf16.mxu0 0
    %1782 = vmatpush2.bf16.xpose.msra.mxu0 0
    %1783 = vmatprep.subr.bf16.mxu0 0
    %1784 = vmatpush2.bf16.xpose.msra.mxu0 0
    %1785 = vmatprep.subr.bf16.mxu0 0
    %1786 = vmatpush2.bf16.xpose.msra.mxu0 0
    %1787 = vmatprep.subr.bf16.mxu0 0
    %1788 = vmatpush2.bf16.xpose.msra.mxu0 0
    %1789 = vmatprep.subr.bf16.mxu0 0
    %1790 = vmatpush2.bf16.xpose.msra.mxu0 0
    %1791 = vmatprep.mubr.bf16.mxu0 0
    %1792 = vmatmul.mubr.bf16.gmra.mxu0 %v1757
    %v1793 = vpop.f32.mrf.mxu0
    %v1794 = vadd.f32 0.0, %v1793
    %v1795 = vpop.f32.mrf.mxu0
    %v1796 = vpop.f32.mrf.mxu0
    %v1797 = vpop.f32.mrf.mxu0
    %1798 = vdwg.mxu0
    %v1799 = vsel %vm1488, %v1794, -inf
    %1800 = vmax.xlane.f32.xlu0 %v1799
    %v1801 = vpop.xlane.xlu0 %1800
    %v1802 = vsub.f32 %v1794, %v1801
    %v1803 = vmul.f32 %v1802, 1.442695
    %v1804 = vpow.pop %v1803
    %v1805 = vsel %vm1488, %v1804, 0.0
    %1806 = vadd.xlane.f32.xlu0 %v1805
    %v1807 = vpop.xlane.xlu0 %1806
    %v1808 = vrcp.pop %v1807
    %v1809 = vmul.f32 %v1804, %v1808
    %v1810 = vpack.c.bf16 %v1809, %v1809
    %v1812 = vsel %vm1488, %v1810, 0
    %v1815 = vsel %vm1504, %v1758, 0
    %1817 = vmatprep.subr.bf16.mxu0 0
    %1818 = vmatpush1.bf16.msra.mxu0 0
    %1819 = vmatprep.subr.bf16.mxu0 0
    %1820 = vmatpush1.bf16.msra.mxu0 0
    %1821 = vmatprep.subr.bf16.mxu0 0
    %1822 = vmatpush1.bf16.msra.mxu0 0
    %1823 = vmatprep.subr.bf16.mxu0 0
    %1824 = vmatpush1.bf16.msra.mxu0 0
    %1825 = vmatprep.subr.bf16.mxu0 0
    %1826 = vmatpush1.bf16.msra.mxu0 0
    %1827 = vmatprep.subr.bf16.mxu0 0
    %1828 = vmatpush1.bf16.msra.mxu0 0
    %1829 = vmatprep.subr.bf16.mxu0 0
    %1830 = vmatpush1.bf16.msra.mxu0 0
    %1831 = vmatprep.subr.bf16.mxu0 0
    %1832 = vmatpush1.bf16.msra.mxu0 %v1815
    %1833 = vmatprep.subr.bf16.mxu0 0
    %1834 = vmatpush2.bf16.msra.mxu0 0
    %1835 = vmatprep.subr.bf16.mxu0 0
    %1836 = vmatpush2.bf16.msra.mxu0 0
    %1837 = vmatprep.subr.bf16.mxu0 0
    %1838 = vmatpush2.bf16.msra.mxu0 0
    %1839 = vmatprep.subr.bf16.mxu0 0
    %1840 = vmatpush2.bf16.msra.mxu0 0
    %1841 = vmatprep.subr.bf16.mxu0 0
    %1842 = vmatpush2.bf16.msra.mxu0 0
    %1843 = vmatprep.subr.bf16.mxu0 0
    %1844 = vmatpush2.bf16.msra.mxu0 0
    %1845 = vmatprep.subr.bf16.mxu0 0
    %1846 = vmatpush2.bf16.msra.mxu0 0
    %1847 = vmatprep.subr.bf16.mxu0 0
    %1848 = vmatpush2.bf16.msra.mxu0 0
    %1849 = vmatprep.mubr.bf16.mxu0 0
    %1850 = vmatmul.mubr.bf16.gmra.mxu0 %v1812
    %v1851 = vpop.f32.mrf.mxu0
    %v1852 = vadd.f32 0.0, %v1851
    %v1853 = vpop.f32.mrf.mxu0
    %v1854 = vpop.f32.mrf.mxu0
    %v1855 = vpop.f32.mrf.mxu0
    %1856 = vdwg.mxu0
    %v1857 = vpack.c.bf16 %v1852, %v1852
    %1858 = vst [vmem:[#allocation3 + $0xc] sm:$0xf] %v1857
    %v1859 = vld [vmem:[#allocation2 + $0x10] sm:$0xf]
    %v1860 = vld [vmem:[#allocation2 + $0x28] sm:$0xf]
    %v1861 = vld [vmem:[#allocation2 + $0x40] sm:$0xf]
    %1862 = vmatprep.subr.bf16.mxu0 0
    %1863 = vmatpush1.bf16.xpose.msra.mxu0 0
    %1864 = vmatprep.subr.bf16.mxu0 0
    %1865 = vmatpush1.bf16.xpose.msra.mxu0 0
    %1866 = vmatprep.subr.bf16.mxu0 0
    %1867 = vmatpush1.bf16.xpose.msra.mxu0 0
    %1868 = vmatprep.subr.bf16.mxu0 0
    %1869 = vmatpush1.bf16.xpose.msra.mxu0 0
    %1870 = vmatprep.subr.bf16.mxu0 0
    %1871 = vmatpush1.bf16.xpose.msra.mxu0 0
    %1872 = vmatprep.subr.bf16.mxu0 0
    %1873 = vmatpush1.bf16.xpose.msra.mxu0 0
    %1874 = vmatprep.subr.bf16.mxu0 0
    %1875 = vmatpush1.bf16.xpose.msra.mxu0 0
    %1876 = vmatprep.subr.bf16.mxu0 0
    %1877 = vmatpush1.bf16.xpose.msra.mxu0 %v1859
    %1878 = vmatprep.subr.bf16.mxu0 0
    %1879 = vmatpush2.bf16.xpose.msra.mxu0 0
    %1880 = vmatprep.subr.bf16.mxu0 0
    %1881 = vmatpush2.bf16.xpose.msra.mxu0 0
    %1882 = vmatprep.subr.bf16.mxu0 0
    %1883 = vmatpush2.bf16.xpose.msra.mxu0 0
    %1884 = vmatprep.subr.bf16.mxu0 0
    %1885 = vmatpush2.bf16.xpose.msra.mxu0 0
    %1886 = vmatprep.subr.bf16.mxu0 0
    %1887 = vmatpush2.bf16.xpose.msra.mxu0 0
    %1888 = vmatprep.subr.bf16.mxu0 0
    %1889 = vmatpush2.bf16.xpose.msra.mxu0 0
    %1890 = vmatprep.subr.bf16.mxu0 0
    %1891 = vmatpush2.bf16.xpose.msra.mxu0 0
    %1892 = vmatprep.subr.bf16.mxu0 0
    %1893 = vmatpush2.bf16.xpose.msra.mxu0 0
    %1894 = vmatprep.mubr.bf16.mxu0 0
    %1895 = vmatmul.mubr.bf16.gmra.mxu0 %v1860
    %v1896 = vpop.f32.mrf.mxu0
    %v1897 = vadd.f32 0.0, %v1896
    %v1898 = vpop.f32.mrf.mxu0
    %v1899 = vpop.f32.mrf.mxu0
    %v1900 = vpop.f32.mrf.mxu0
    %1901 = vdwg.mxu0
    %v1902 = vsel %vm1488, %v1897, -inf
    %1903 = vmax.xlane.f32.xlu0 %v1902
    %v1904 = vpop.xlane.xlu0 %1903
    %v1905 = vsub.f32 %v1897, %v1904
    %v1906 = vmul.f32 %v1905, 1.442695
    %v1907 = vpow.pop %v1906
    %v1908 = vsel %vm1488, %v1907, 0.0
    %1909 = vadd.xlane.f32.xlu0 %v1908
    %v1910 = vpop.xlane.xlu0 %1909
    %v1911 = vrcp.pop %v1910
    %v1912 = vmul.f32 %v1907, %v1911
    %v1913 = vpack.c.bf16 %v1912, %v1912
    %v1915 = vsel %vm1488, %v1913, 0
    %v1918 = vsel %vm1504, %v1861, 0
    %1920 = vmatprep.subr.bf16.mxu0 0
    %1921 = vmatpush1.bf16.msra.mxu0 0
    %1922 = vmatprep.subr.bf16.mxu0 0
    %1923 = vmatpush1.bf16.msra.mxu0 0
    %1924 = vmatprep.subr.bf16.mxu0 0
    %1925 = vmatpush1.bf16.msra.mxu0 0
    %1926 = vmatprep.subr.bf16.mxu0 0
    %1927 = vmatpush1.bf16.msra.mxu0 0
    %1928 = vmatprep.subr.bf16.mxu0 0
    %1929 = vmatpush1.bf16.msra.mxu0 0
    %1930 = vmatprep.subr.bf16.mxu0 0
    %1931 = vmatpush1.bf16.msra.mxu0 0
    %1932 = vmatprep.subr.bf16.mxu0 0
    %1933 = vmatpush1.bf16.msra.mxu0 0
    %1934 = vmatprep.subr.bf16.mxu0 0
    %1935 = vmatpush1.bf16.msra.mxu0 %v1918
    %1936 = vmatprep.subr.bf16.mxu0 0
    %1937 = vmatpush2.bf16.msra.mxu0 0
    %1938 = vmatprep.subr.bf16.mxu0 0
    %1939 = vmatpush2.bf16.msra.mxu0 0
    %1940 = vmatprep.subr.bf16.mxu0 0
    %1941 = vmatpush2.bf16.msra.mxu0 0
    %1942 = vmatprep.subr.bf16.mxu0 0
    %1943 = vmatpush2.bf16.msra.mxu0 0
    %1944 = vmatprep.subr.bf16.mxu0 0
    %1945 = vmatpush2.bf16.msra.mxu0 0
    %1946 = vmatprep.subr.bf16.mxu0 0
    %1947 = vmatpush2.bf16.msra.mxu0 0
    %1948 = vmatprep.subr.bf16.mxu0 0
    %1949 = vmatpush2.bf16.msra.mxu0 0
    %1950 = vmatprep.subr.bf16.mxu0 0
    %1951 = vmatpush2.bf16.msra.mxu0 0
    %1952 = vmatprep.mubr.bf16.mxu0 0
    %1953 = vmatmul.mubr.bf16.gmra.mxu0 %v1915
    %v1954 = vpop.f32.mrf.mxu0
    %v1955 = vadd.f32 0.0, %v1954
    %v1956 = vpop.f32.mrf.mxu0
    %v1957 = vpop.f32.mrf.mxu0
    %v1958 = vpop.f32.mrf.mxu0
    %1959 = vdwg.mxu0
    %v1960 = vpack.c.bf16 %v1955, %v1955
    %1961 = vst [vmem:[#allocation3 + $0x10] sm:$0xf] %v1960
    %v1962 = vld [vmem:[#allocation2 + $0x14] sm:$0xf]
    %v1963 = vld [vmem:[#allocation2 + $0x2c] sm:$0xf]
    %v1964 = vld [vmem:[#allocation2 + $0x44] sm:$0xf]
    %1965 = vmatprep.subr.bf16.mxu0 0
    %1966 = vmatpush1.bf16.xpose.msra.mxu0 0
    %1967 = vmatprep.subr.bf16.mxu0 0
    %1968 = vmatpush1.bf16.xpose.msra.mxu0 0
    %1969 = vmatprep.subr.bf16.mxu0 0
    %1970 = vmatpush1.bf16.xpose.msra.mxu0 0
    %1971 = vmatprep.subr.bf16.mxu0 0
    %1972 = vmatpush1.bf16.xpose.msra.mxu0 0
    %1973 = vmatprep.subr.bf16.mxu0 0
    %1974 = vmatpush1.bf16.xpose.msra.mxu0 0
    %1975 = vmatprep.subr.bf16.mxu0 0
    %1976 = vmatpush1.bf16.xpose.msra.mxu0 0
    %1977 = vmatprep.subr.bf16.mxu0 0
    %1978 = vmatpush1.bf16.xpose.msra.mxu0 0
    %1979 = vmatprep.subr.bf16.mxu0 0
    %1980 = vmatpush1.bf16.xpose.msra.mxu0 %v1962
    %1981 = vmatprep.subr.bf16.mxu0 0
    %1982 = vmatpush2.bf16.xpose.msra.mxu0 0
    %1983 = vmatprep.subr.bf16.mxu0 0
    %1984 = vmatpush2.bf16.xpose.msra.mxu0 0
    %1985 = vmatprep.subr.bf16.mxu0 0
    %1986 = vmatpush2.bf16.xpose.msra.mxu0 0
    %1987 = vmatprep.subr.bf16.mxu0 0
    %1988 = vmatpush2.bf16.xpose.msra.mxu0 0
    %1989 = vmatprep.subr.bf16.mxu0 0
    %1990 = vmatpush2.bf16.xpose.msra.mxu0 0
    %1991 = vmatprep.subr.bf16.mxu0 0
    %1992 = vmatpush2.bf16.xpose.msra.mxu0 0
    %1993 = vmatprep.subr.bf16.mxu0 0
    %1994 = vmatpush2.bf16.xpose.msra.mxu0 0
    %1995 = vmatprep.subr.bf16.mxu0 0
    %1996 = vmatpush2.bf16.xpose.msra.mxu0 0
    %1997 = vmatprep.mubr.bf16.mxu0 0
    %1998 = vmatmul.mubr.bf16.gmra.mxu0 %v1963
    %v1999 = vpop.f32.mrf.mxu0
    %v2000 = vadd.f32 0.0, %v1999
    %v2001 = vpop.f32.mrf.mxu0
    %v2002 = vpop.f32.mrf.mxu0
    %v2003 = vpop.f32.mrf.mxu0
    %2004 = vdwg.mxu0
    %v2005 = vsel %vm1488, %v2000, -inf
    %2006 = vmax.xlane.f32.xlu0 %v2005
    %v2007 = vpop.xlane.xlu0 %2006
    %v2008 = vsub.f32 %v2000, %v2007
    %v2009 = vmul.f32 %v2008, 1.442695
    %v2010 = vpow.pop %v2009
    %v2011 = vsel %vm1488, %v2010, 0.0
    %2012 = vadd.xlane.f32.xlu0 %v2011
    %v2013 = vpop.xlane.xlu0 %2012
    %v2014 = vrcp.pop %v2013
    %v2015 = vmul.f32 %v2010, %v2014
    %v2016 = vpack.c.bf16 %v2015, %v2015
    %v2018 = vsel %vm1488, %v2016, 0
    %v2021 = vsel %vm1504, %v1964, 0
    %2023 = vmatprep.subr.bf16.mxu0 0
    %2024 = vmatpush1.bf16.msra.mxu0 0
    %2025 = vmatprep.subr.bf16.mxu0 0
    %2026 = vmatpush1.bf16.msra.mxu0 0
    %2027 = vmatprep.subr.bf16.mxu0 0
    %2028 = vmatpush1.bf16.msra.mxu0 0
    %2029 = vmatprep.subr.bf16.mxu0 0
    %2030 = vmatpush1.bf16.msra.mxu0 0
    %2031 = vmatprep.subr.bf16.mxu0 0
    %2032 = vmatpush1.bf16.msra.mxu0 0
    %2033 = vmatprep.subr.bf16.mxu0 0
    %2034 = vmatpush1.bf16.msra.mxu0 0
    %2035 = vmatprep.subr.bf16.mxu0 0
    %2036 = vmatpush1.bf16.msra.mxu0 0
    %2037 = vmatprep.subr.bf16.mxu0 0
    %2038 = vmatpush1.bf16.msra.mxu0 %v2021
    %2039 = vmatprep.subr.bf16.mxu0 0
    %2040 = vmatpush2.bf16.msra.mxu0 0
    %2041 = vmatprep.subr.bf16.mxu0 0
    %2042 = vmatpush2.bf16.msra.mxu0 0
    %2043 = vmatprep.subr.bf16.mxu0 0
    %2044 = vmatpush2.bf16.msra.mxu0 0
    %2045 = vmatprep.subr.bf16.mxu0 0
    %2046 = vmatpush2.bf16.msra.mxu0 0
    %2047 = vmatprep.subr.bf16.mxu0 0
    %2048 = vmatpush2.bf16.msra.mxu0 0
    %2049 = vmatprep.subr.bf16.mxu0 0
    %2050 = vmatpush2.bf16.msra.mxu0 0
    %2051 = vmatprep.subr.bf16.mxu0 0
    %2052 = vmatpush2.bf16.msra.mxu0 0
    %2053 = vmatprep.subr.bf16.mxu0 0
    %2054 = vmatpush2.bf16.msra.mxu0 0
    %2055 = vmatprep.mubr.bf16.mxu0 0
    %2056 = vmatmul.mubr.bf16.gmra.mxu0 %v2018
    %v2057 = vpop.f32.mrf.mxu0
    %v2058 = vadd.f32 0.0, %v2057
    %v2059 = vpop.f32.mrf.mxu0
    %v2060 = vpop.f32.mrf.mxu0
    %v2061 = vpop.f32.mrf.mxu0
    %2062 = vdwg.mxu0
    %v2063 = vpack.c.bf16 %v2058, %v2058
    %2064 = vst [vmem:[#allocation3 + $0x14] sm:$0xf] %v2063
    %v2065 = vld [vmem:[#allocation2 + $0x48] sm:$0xf]
    %v2066 = vld [vmem:[#allocation2 + $0x60] sm:$0xf]
    %v2067 = vld [vmem:[#allocation2 + $0x78] sm:$0xf]
    %2068 = vmatprep.subr.bf16.mxu0 0
    %2069 = vmatpush1.bf16.xpose.msra.mxu0 0
    %2070 = vmatprep.subr.bf16.mxu0 0
    %2071 = vmatpush1.bf16.xpose.msra.mxu0 0
    %2072 = vmatprep.subr.bf16.mxu0 0
    %2073 = vmatpush1.bf16.xpose.msra.mxu0 0
    %2074 = vmatprep.subr.bf16.mxu0 0
    %2075 = vmatpush1.bf16.xpose.msra.mxu0 0
    %2076 = vmatprep.subr.bf16.mxu0 0
    %2077 = vmatpush1.bf16.xpose.msra.mxu0 0
    %2078 = vmatprep.subr.bf16.mxu0 0
    %2079 = vmatpush1.bf16.xpose.msra.mxu0 0
    %2080 = vmatprep.subr.bf16.mxu0 0
    %2081 = vmatpush1.bf16.xpose.msra.mxu0 0
    %2082 = vmatprep.subr.bf16.mxu0 0
    %2083 = vmatpush1.bf16.xpose.msra.mxu0 %v2065
    %2084 = vmatprep.subr.bf16.mxu0 0
    %2085 = vmatpush2.bf16.xpose.msra.mxu0 0
    %2086 = vmatprep.subr.bf16.mxu0 0
    %2087 = vmatpush2.bf16.xpose.msra.mxu0 0
    %2088 = vmatprep.subr.bf16.mxu0 0
    %2089 = vmatpush2.bf16.xpose.msra.mxu0 0
    %2090 = vmatprep.subr.bf16.mxu0 0
    %2091 = vmatpush2.bf16.xpose.msra.mxu0 0
    %2092 = vmatprep.subr.bf16.mxu0 0
    %2093 = vmatpush2.bf16.xpose.msra.mxu0 0
    %2094 = vmatprep.subr.bf16.mxu0 0
    %2095 = vmatpush2.bf16.xpose.msra.mxu0 0
    %2096 = vmatprep.subr.bf16.mxu0 0
    %2097 = vmatpush2.bf16.xpose.msra.mxu0 0
    %2098 = vmatprep.subr.bf16.mxu0 0
    %2099 = vmatpush2.bf16.xpose.msra.mxu0 0
    %2100 = vmatprep.mubr.bf16.mxu0 0
    %2101 = vmatmul.mubr.bf16.gmra.mxu0 %v2066
    %v2102 = vpop.f32.mrf.mxu0
    %v2103 = vadd.f32 0.0, %v2102
    %v2104 = vpop.f32.mrf.mxu0
    %v2105 = vpop.f32.mrf.mxu0
    %v2106 = vpop.f32.mrf.mxu0
    %2107 = vdwg.mxu0
    %v2108 = vsel %vm1488, %v2103, -inf
    %2109 = vmax.xlane.f32.xlu0 %v2108
    %v2110 = vpop.xlane.xlu0 %2109
    %v2111 = vsub.f32 %v2103, %v2110
    %v2112 = vmul.f32 %v2111, 1.442695
    %v2113 = vpow.pop %v2112
    %v2114 = vsel %vm1488, %v2113, 0.0
    %2115 = vadd.xlane.f32.xlu0 %v2114
    %v2116 = vpop.xlane.xlu0 %2115
    %v2117 = vrcp.pop %v2116
    %v2118 = vmul.f32 %v2113, %v2117
    %v2119 = vpack.c.bf16 %v2118, %v2118
    %v2121 = vsel %vm1488, %v2119, 0
    %v2124 = vsel %vm1504, %v2067, 0
    %2126 = vmatprep.subr.bf16.mxu0 0
    %2127 = vmatpush1.bf16.msra.mxu0 0
    %2128 = vmatprep.subr.bf16.mxu0 0
    %2129 = vmatpush1.bf16.msra.mxu0 0
    %2130 = vmatprep.subr.bf16.mxu0 0
    %2131 = vmatpush1.bf16.msra.mxu0 0
    %2132 = vmatprep.subr.bf16.mxu0 0
    %2133 = vmatpush1.bf16.msra.mxu0 0
    %2134 = vmatprep.subr.bf16.mxu0 0
    %2135 = vmatpush1.bf16.msra.mxu0 0
    %2136 = vmatprep.subr.bf16.mxu0 0
    %2137 = vmatpush1.bf16.msra.mxu0 0
    %2138 = vmatprep.subr.bf16.mxu0 0
    %2139 = vmatpush1.bf16.msra.mxu0 0
    %2140 = vmatprep.subr.bf16.mxu0 0
    %2141 = vmatpush1.bf16.msra.mxu0 %v2124
    %2142 = vmatprep.subr.bf16.mxu0 0
    %2143 = vmatpush2.bf16.msra.mxu0 0
    %2144 = vmatprep.subr.bf16.mxu0 0
    %2145 = vmatpush2.bf16.msra.mxu0 0
    %2146 = vmatprep.subr.bf16.mxu0 0
    %2147 = vmatpush2.bf16.msra.mxu0 0
    %2148 = vmatprep.subr.bf16.mxu0 0
    %2149 = vmatpush2.bf16.msra.mxu0 0
    %2150 = vmatprep.subr.bf16.mxu0 0
    %2151 = vmatpush2.bf16.msra.mxu0 0
    %2152 = vmatprep.subr.bf16.mxu0 0
    %2153 = vmatpush2.bf16.msra.mxu0 0
    %2154 = vmatprep.subr.bf16.mxu0 0
    %2155 = vmatpush2.bf16.msra.mxu0 0
    %2156 = vmatprep.subr.bf16.mxu0 0
    %2157 = vmatpush2.bf16.msra.mxu0 0
    %2158 = vmatprep.mubr.bf16.mxu0 0
    %2159 = vmatmul.mubr.bf16.gmra.mxu0 %v2121
    %v2160 = vpop.f32.mrf.mxu0
    %v2161 = vadd.f32 0.0, %v2160
    %v2162 = vpop.f32.mrf.mxu0
    %v2163 = vpop.f32.mrf.mxu0
    %v2164 = vpop.f32.mrf.mxu0
    %2165 = vdwg.mxu0
    %v2166 = vpack.c.bf16 %v2161, %v2161
    %2167 = vst [vmem:[#allocation3 + $0x18] sm:$0xf] %v2166
    %v2168 = vld [vmem:[#allocation2 + $0x4c] sm:$0xf]
    %v2169 = vld [vmem:[#allocation2 + $0x64] sm:$0xf]
    %v2170 = vld [vmem:[#allocation2 + $0x7c] sm:$0xf]
    %2171 = vmatprep.subr.bf16.mxu0 0
    %2172 = vmatpush1.bf16.xpose.msra.mxu0 0
    %2173 = vmatprep.subr.bf16.mxu0 0
    %2174 = vmatpush1.bf16.xpose.msra.mxu0 0
    %2175 = vmatprep.subr.bf16.mxu0 0
    %2176 = vmatpush1.bf16.xpose.msra.mxu0 0
    %2177 = vmatprep.subr.bf16.mxu0 0
    %2178 = vmatpush1.bf16.xpose.msra.mxu0 0
    %2179 = vmatprep.subr.bf16.mxu0 0
    %2180 = vmatpush1.bf16.xpose.msra.mxu0 0
    %2181 = vmatprep.subr.bf16.mxu0 0
    %2182 = vmatpush1.bf16.xpose.msra.mxu0 0
    %2183 = vmatprep.subr.bf16.mxu0 0
    %2184 = vmatpush1.bf16.xpose.msra.mxu0 0
    %2185 = vmatprep.subr.bf16.mxu0 0
    %2186 = vmatpush1.bf16.xpose.msra.mxu0 %v2168
    %2187 = vmatprep.subr.bf16.mxu0 0
    %2188 = vmatpush2.bf16.xpose.msra.mxu0 0
    %2189 = vmatprep.subr.bf16.mxu0 0
    %2190 = vmatpush2.bf16.xpose.msra.mxu0 0
    %2191 = vmatprep.subr.bf16.mxu0 0
    %2192 = vmatpush2.bf16.xpose.msra.mxu0 0
    %2193 = vmatprep.subr.bf16.mxu0 0
    %2194 = vmatpush2.bf16.xpose.msra.mxu0 0
    %2195 = vmatprep.subr.bf16.mxu0 0
    %2196 = vmatpush2.bf16.xpose.msra.mxu0 0
    %2197 = vmatprep.subr.bf16.mxu0 0
    %2198 = vmatpush2.bf16.xpose.msra.mxu0 0
    %2199 = vmatprep.subr.bf16.mxu0 0
    %2200 = vmatpush2.bf16.xpose.msra.mxu0 0
    %2201 = vmatprep.subr.bf16.mxu0 0
    %2202 = vmatpush2.bf16.xpose.msra.mxu0 0
    %2203 = vmatprep.mubr.bf16.mxu0 0
    %2204 = vmatmul.mubr.bf16.gmra.mxu0 %v2169
    %v2205 = vpop.f32.mrf.mxu0
    %v2206 = vadd.f32 0.0, %v2205
    %v2207 = vpop.f32.mrf.mxu0
    %v2208 = vpop.f32.mrf.mxu0
    %v2209 = vpop.f32.mrf.mxu0
    %2210 = vdwg.mxu0
    %v2211 = vsel %vm1488, %v2206, -inf
    %2212 = vmax.xlane.f32.xlu0 %v2211
    %v2213 = vpop.xlane.xlu0 %2212
    %v2214 = vsub.f32 %v2206, %v2213
    %v2215 = vmul.f32 %v2214, 1.442695
    %v2216 = vpow.pop %v2215
    %v2217 = vsel %vm1488, %v2216, 0.0
    %2218 = vadd.xlane.f32.xlu0 %v2217
    %v2219 = vpop.xlane.xlu0 %2218
    %v2220 = vrcp.pop %v2219
    %v2221 = vmul.f32 %v2216, %v2220
    %v2222 = vpack.c.bf16 %v2221, %v2221
    %v2224 = vsel %vm1488, %v2222, 0
    %v2227 = vsel %vm1504, %v2170, 0
    %2229 = vmatprep.subr.bf16.mxu0 0
    %2230 = vmatpush1.bf16.msra.mxu0 0
    %2231 = vmatprep.subr.bf16.mxu0 0
    %2232 = vmatpush1.bf16.msra.mxu0 0
    %2233 = vmatprep.subr.bf16.mxu0 0
    %2234 = vmatpush1.bf16.msra.mxu0 0
    %2235 = vmatprep.subr.bf16.mxu0 0
    %2236 = vmatpush1.bf16.msra.mxu0 0
    %2237 = vmatprep.subr.bf16.mxu0 0
    %2238 = vmatpush1.bf16.msra.mxu0 0
    %2239 = vmatprep.subr.bf16.mxu0 0
    %2240 = vmatpush1.bf16.msra.mxu0 0
    %2241 = vmatprep.subr.bf16.mxu0 0
    %2242 = vmatpush1.bf16.msra.mxu0 0
    %2243 = vmatprep.subr.bf16.mxu0 0
    %2244 = vmatpush1.bf16.msra.mxu0 %v2227
    %2245 = vmatprep.subr.bf16.mxu0 0
    %2246 = vmatpush2.bf16.msra.mxu0 0
    %2247 = vmatprep.subr.bf16.mxu0 0
    %2248 = vmatpush2.bf16.msra.mxu0 0
    %2249 = vmatprep.subr.bf16.mxu0 0
    %2250 = vmatpush2.bf16.msra.mxu0 0
    %2251 = vmatprep.subr.bf16.mxu0 0
    %2252 = vmatpush2.bf16.msra.mxu0 0
    %2253 = vmatprep.subr.bf16.mxu0 0
    %2254 = vmatpush2.bf16.msra.mxu0 0
    %2255 = vmatprep.subr.bf16.mxu0 0
    %2256 = vmatpush2.bf16.msra.mxu0 0
    %2257 = vmatprep.subr.bf16.mxu0 0
    %2258 = vmatpush2.bf16.msra.mxu0 0
    %2259 = vmatprep.subr.bf16.mxu0 0
    %2260 = vmatpush2.bf16.msra.mxu0 0
    %2261 = vmatprep.mubr.bf16.mxu0 0
    %2262 = vmatmul.mubr.bf16.gmra.mxu0 %v2224
    %v2263 = vpop.f32.mrf.mxu0
    %v2264 = vadd.f32 0.0, %v2263
    %v2265 = vpop.f32.mrf.mxu0
    %v2266 = vpop.f32.mrf.mxu0
    %v2267 = vpop.f32.mrf.mxu0
    %2268 = vdwg.mxu0
    %v2269 = vpack.c.bf16 %v2264, %v2264
    %2270 = vst [vmem:[#allocation3 + $0x1c] sm:$0xf] %v2269
    %v2271 = vld [vmem:[#allocation2 + $0x50] sm:$0xf]
    %v2272 = vld [vmem:[#allocation2 + $0x68] sm:$0xf]
    %v2273 = vld [vmem:[#allocation2 + $0x80] sm:$0xf]
    %2274 = vmatprep.subr.bf16.mxu0 0
    %2275 = vmatpush1.bf16.xpose.msra.mxu0 0
    %2276 = vmatprep.subr.bf16.mxu0 0
    %2277 = vmatpush1.bf16.xpose.msra.mxu0 0
    %2278 = vmatprep.subr.bf16.mxu0 0
    %2279 = vmatpush1.bf16.xpose.msra.mxu0 0
    %2280 = vmatprep.subr.bf16.mxu0 0
    %2281 = vmatpush1.bf16.xpose.msra.mxu0 0
    %2282 = vmatprep.subr.bf16.mxu0 0
    %2283 = vmatpush1.bf16.xpose.msra.mxu0 0
    %2284 = vmatprep.subr.bf16.mxu0 0
    %2285 = vmatpush1.bf16.xpose.msra.mxu0 0
    %2286 = vmatprep.subr.bf16.mxu0 0
    %2287 = vmatpush1.bf16.xpose.msra.mxu0 0
    %2288 = vmatprep.subr.bf16.mxu0 0
    %2289 = vmatpush1.bf16.xpose.msra.mxu0 %v2271
    %2290 = vmatprep.subr.bf16.mxu0 0
    %2291 = vmatpush2.bf16.xpose.msra.mxu0 0
    %2292 = vmatprep.subr.bf16.mxu0 0
    %2293 = vmatpush2.bf16.xpose.msra.mxu0 0
    %2294 = vmatprep.subr.bf16.mxu0 0
    %2295 = vmatpush2.bf16.xpose.msra.mxu0 0
    %2296 = vmatprep.subr.bf16.mxu0 0
    %2297 = vmatpush2.bf16.xpose.msra.mxu0 0
    %2298 = vmatprep.subr.bf16.mxu0 0
    %2299 = vmatpush2.bf16.xpose.msra.mxu0 0
    %2300 = vmatprep.subr.bf16.mxu0 0
    %2301 = vmatpush2.bf16.xpose.msra.mxu0 0
    %2302 = vmatprep.subr.bf16.mxu0 0
    %2303 = vmatpush2.bf16.xpose.msra.mxu0 0
    %2304 = vmatprep.subr.bf16.mxu0 0
    %2305 = vmatpush2.bf16.xpose.msra.mxu0 0
    %2306 = vmatprep.mubr.bf16.mxu0 0
    %2307 = vmatmul.mubr.bf16.gmra.mxu0 %v2272
    %v2308 = vpop.f32.mrf.mxu0
    %v2309 = vadd.f32 0.0, %v2308
    %v2310 = vpop.f32.mrf.mxu0
    %v2311 = vpop.f32.mrf.mxu0
    %v2312 = vpop.f32.mrf.mxu0
    %2313 = vdwg.mxu0
    %v2314 = vsel %vm1488, %v2309, -inf
    %2315 = vmax.xlane.f32.xlu0 %v2314
    %v2316 = vpop.xlane.xlu0 %2315
    %v2317 = vsub.f32 %v2309, %v2316
    %v2318 = vmul.f32 %v2317, 1.442695
    %v2319 = vpow.pop %v2318
    %v2320 = vsel %vm1488, %v2319, 0.0
    %2321 = vadd.xlane.f32.xlu0 %v2320
    %v2322 = vpop.xlane.xlu0 %2321
    %v2323 = vrcp.pop %v2322
    %v2324 = vmul.f32 %v2319, %v2323
    %v2325 = vpack.c.bf16 %v2324, %v2324
    %v2327 = vsel %vm1488, %v2325, 0
    %v2330 = vsel %vm1504, %v2273, 0
    %2332 = vmatprep.subr.bf16.mxu0 0
    %2333 = vmatpush1.bf16.msra.mxu0 0
    %2334 = vmatprep.subr.bf16.mxu0 0
    %2335 = vmatpush1.bf16.msra.mxu0 0
    %2336 = vmatprep.subr.bf16.mxu0 0
    %2337 = vmatpush1.bf16.msra.mxu0 0
    %2338 = vmatprep.subr.bf16.mxu0 0
    %2339 = vmatpush1.bf16.msra.mxu0 0
    %2340 = vmatprep.subr.bf16.mxu0 0
    %2341 = vmatpush1.bf16.msra.mxu0 0
    %2342 = vmatprep.subr.bf16.mxu0 0
    %2343 = vmatpush1.bf16.msra.mxu0 0
    %2344 = vmatprep.subr.bf16.mxu0 0
    %2345 = vmatpush1.bf16.msra.mxu0 0
    %2346 = vmatprep.subr.bf16.mxu0 0
    %2347 = vmatpush1.bf16.msra.mxu0 %v2330
    %2348 = vmatprep.subr.bf16.mxu0 0
    %2349 = vmatpush2.bf16.msra.mxu0 0
    %2350 = vmatprep.subr.bf16.mxu0 0
    %2351 = vmatpush2.bf16.msra.mxu0 0
    %2352 = vmatprep.subr.bf16.mxu0 0
    %2353 = vmatpush2.bf16.msra.mxu0 0
    %2354 = vmatprep.subr.bf16.mxu0 0
    %2355 = vmatpush2.bf16.msra.mxu0 0
    %2356 = vmatprep.subr.bf16.mxu0 0
    %2357 = vmatpush2.bf16.msra.mxu0 0
    %2358 = vmatprep.subr.bf16.mxu0 0
    %2359 = vmatpush2.bf16.msra.mxu0 0
    %2360 = vmatprep.subr.bf16.mxu0 0
    %2361 = vmatpush2.bf16.msra.mxu0 0
    %2362 = vmatprep.subr.bf16.mxu0 0
    %2363 = vmatpush2.bf16.msra.mxu0 0
    %2364 = vmatprep.mubr.bf16.mxu0 0
    %2365 = vmatmul.mubr.bf16.gmra.mxu0 %v2327
    %v2366 = vpop.f32.mrf.mxu0
    %v2367 = vadd.f32 0.0, %v2366
    %v2368 = vpop.f32.mrf.mxu0
    %v2369 = vpop.f32.mrf.mxu0
    %v2370 = vpop.f32.mrf.mxu0
    %2371 = vdwg.mxu0
    %v2372 = vpack.c.bf16 %v2367, %v2367
    %2373 = vst [vmem:[#allocation3 + $0x20] sm:$0xf] %v2372
    %v2374 = vld [vmem:[#allocation2 + $0x54] sm:$0xf]
    %v2375 = vld [vmem:[#allocation2 + $0x6c] sm:$0xf]
    %v2376 = vld [vmem:[#allocation2 + $0x84] sm:$0xf]
    %2377 = vmatprep.subr.bf16.mxu0 0
    %2378 = vmatpush1.bf16.xpose.msra.mxu0 0
    %2379 = vmatprep.subr.bf16.mxu0 0
    %2380 = vmatpush1.bf16.xpose.msra.mxu0 0
    %2381 = vmatprep.subr.bf16.mxu0 0
    %2382 = vmatpush1.bf16.xpose.msra.mxu0 0
    %2383 = vmatprep.subr.bf16.mxu0 0
    %2384 = vmatpush1.bf16.xpose.msra.mxu0 0
    %2385 = vmatprep.subr.bf16.mxu0 0
    %2386 = vmatpush1.bf16.xpose.msra.mxu0 0
    %2387 = vmatprep.subr.bf16.mxu0 0
    %2388 = vmatpush1.bf16.xpose.msra.mxu0 0
    %2389 = vmatprep.subr.bf16.mxu0 0
    %2390 = vmatpush1.bf16.xpose.msra.mxu0 0
    %2391 = vmatprep.subr.bf16.mxu0 0
    %2392 = vmatpush1.bf16.xpose.msra.mxu0 %v2374
    %2393 = vmatprep.subr.bf16.mxu0 0
    %2394 = vmatpush2.bf16.xpose.msra.mxu0 0
    %2395 = vmatprep.subr.bf16.mxu0 0
    %2396 = vmatpush2.bf16.xpose.msra.mxu0 0
    %2397 = vmatprep.subr.bf16.mxu0 0
    %2398 = vmatpush2.bf16.xpose.msra.mxu0 0
    %2399 = vmatprep.subr.bf16.mxu0 0
    %2400 = vmatpush2.bf16.xpose.msra.mxu0 0
    %2401 = vmatprep.subr.bf16.mxu0 0
    %2402 = vmatpush2.bf16.xpose.msra.mxu0 0
    %2403 = vmatprep.subr.bf16.mxu0 0
    %2404 = vmatpush2.bf16.xpose.msra.mxu0 0
    %2405 = vmatprep.subr.bf16.mxu0 0
    %2406 = vmatpush2.bf16.xpose.msra.mxu0 0
    %2407 = vmatprep.subr.bf16.mxu0 0
    %2408 = vmatpush2.bf16.xpose.msra.mxu0 0
    %2409 = vmatprep.mubr.bf16.mxu0 0
    %2410 = vmatmul.mubr.bf16.gmra.mxu0 %v2375
    %v2411 = vpop.f32.mrf.mxu0
    %v2412 = vadd.f32 0.0, %v2411
    %v2413 = vpop.f32.mrf.mxu0
    %v2414 = vpop.f32.mrf.mxu0
    %v2415 = vpop.f32.mrf.mxu0
    %2416 = vdwg.mxu0
    %v2417 = vsel %vm1488, %v2412, -inf
    %2418 = vmax.xlane.f32.xlu0 %v2417
    %v2419 = vpop.xlane.xlu0 %2418
    %v2420 = vsub.f32 %v2412, %v2419
    %v2421 = vmul.f32 %v2420, 1.442695
    %v2422 = vpow.pop %v2421
    %v2423 = vsel %vm1488, %v2422, 0.0
    %2424 = vadd.xlane.f32.xlu0 %v2423
    %v2425 = vpop.xlane.xlu0 %2424
    %v2426 = vrcp.pop %v2425
    %v2427 = vmul.f32 %v2422, %v2426
    %v2428 = vpack.c.bf16 %v2427, %v2427
    %v2430 = vsel %vm1488, %v2428, 0
    %v2433 = vsel %vm1504, %v2376, 0
    %2435 = vmatprep.subr.bf16.mxu0 0
    %2436 = vmatpush1.bf16.msra.mxu0 0
    %2437 = vmatprep.subr.bf16.mxu0 0
    %2438 = vmatpush1.bf16.msra.mxu0 0
    %2439 = vmatprep.subr.bf16.mxu0 0
    %2440 = vmatpush1.bf16.msra.mxu0 0
    %2441 = vmatprep.subr.bf16.mxu0 0
    %2442 = vmatpush1.bf16.msra.mxu0 0
    %2443 = vmatprep.subr.bf16.mxu0 0
    %2444 = vmatpush1.bf16.msra.mxu0 0
    %2445 = vmatprep.subr.bf16.mxu0 0
    %2446 = vmatpush1.bf16.msra.mxu0 0
    %2447 = vmatprep.subr.bf16.mxu0 0
    %2448 = vmatpush1.bf16.msra.mxu0 0
    %2449 = vmatprep.subr.bf16.mxu0 0
    %2450 = vmatpush1.bf16.msra.mxu0 %v2433
    %2451 = vmatprep.subr.bf16.mxu0 0
    %2452 = vmatpush2.bf16.msra.mxu0 0
    %2453 = vmatprep.subr.bf16.mxu0 0
    %2454 = vmatpush2.bf16.msra.mxu0 0
    %2455 = vmatprep.subr.bf16.mxu0 0
    %2456 = vmatpush2.bf16.msra.mxu0 0
    %2457 = vmatprep.subr.bf16.mxu0 0
    %2458 = vmatpush2.bf16.msra.mxu0 0
    %2459 = vmatprep.subr.bf16.mxu0 0
    %2460 = vmatpush2.bf16.msra.mxu0 0
    %2461 = vmatprep.subr.bf16.mxu0 0
    %2462 = vmatpush2.bf16.msra.mxu0 0
    %2463 = vmatprep.subr.bf16.mxu0 0
    %2464 = vmatpush2.bf16.msra.mxu0 0
    %2465 = vmatprep.subr.bf16.mxu0 0
    %2466 = vmatpush2.bf16.msra.mxu0 0
    %2467 = vmatprep.mubr.bf16.mxu0 0
    %2468 = vmatmul.mubr.bf16.gmra.mxu0 %v2430
    %v2469 = vpop.f32.mrf.mxu0
    %v2470 = vadd.f32 0.0, %v2469
    %v2471 = vpop.f32.mrf.mxu0
    %v2472 = vpop.f32.mrf.mxu0
    %v2473 = vpop.f32.mrf.mxu0
    %2474 = vdwg.mxu0
    %v2475 = vpack.c.bf16 %v2470, %v2470
    %2476 = vst [vmem:[#allocation3 + $0x24] sm:$0xf] %v2475
    %v2477 = vld [vmem:[#allocation2 + $0x58] sm:$0xf]
    %v2478 = vld [vmem:[#allocation2 + $0x70] sm:$0xf]
    %v2479 = vld [vmem:[#allocation2 + $0x88] sm:$0xf]
    %2480 = vmatprep.subr.bf16.mxu0 0
    %2481 = vmatpush1.bf16.xpose.msra.mxu0 0
    %2482 = vmatprep.subr.bf16.mxu0 0
    %2483 = vmatpush1.bf16.xpose.msra.mxu0 0
    %2484 = vmatprep.subr.bf16.mxu0 0
    %2485 = vmatpush1.bf16.xpose.msra.mxu0 0
    %2486 = vmatprep.subr.bf16.mxu0 0
    %2487 = vmatpush1.bf16.xpose.msra.mxu0 0
    %2488 = vmatprep.subr.bf16.mxu0 0
    %2489 = vmatpush1.bf16.xpose.msra.mxu0 0
    %2490 = vmatprep.subr.bf16.mxu0 0
    %2491 = vmatpush1.bf16.xpose.msra.mxu0 0
    %2492 = vmatprep.subr.bf16.mxu0 0
    %2493 = vmatpush1.bf16.xpose.msra.mxu0 0
    %2494 = vmatprep.subr.bf16.mxu0 0
    %2495 = vmatpush1.bf16.xpose.msra.mxu0 %v2477
    %2496 = vmatprep.subr.bf16.mxu0 0
    %2497 = vmatpush2.bf16.xpose.msra.mxu0 0
    %2498 = vmatprep.subr.bf16.mxu0 0
    %2499 = vmatpush2.bf16.xpose.msra.mxu0 0
    %2500 = vmatprep.subr.bf16.mxu0 0
    %2501 = vmatpush2.bf16.xpose.msra.mxu0 0
    %2502 = vmatprep.subr.bf16.mxu0 0
    %2503 = vmatpush2.bf16.xpose.msra.mxu0 0
    %2504 = vmatprep.subr.bf16.mxu0 0
    %2505 = vmatpush2.bf16.xpose.msra.mxu0 0
    %2506 = vmatprep.subr.bf16.mxu0 0
    %2507 = vmatpush2.bf16.xpose.msra.mxu0 0
    %2508 = vmatprep.subr.bf16.mxu0 0
    %2509 = vmatpush2.bf16.xpose.msra.mxu0 0
    %2510 = vmatprep.subr.bf16.mxu0 0
    %2511 = vmatpush2.bf16.xpose.msra.mxu0 0
    %2512 = vmatprep.mubr.bf16.mxu0 0
    %2513 = vmatmul.mubr.bf16.gmra.mxu0 %v2478
    %v2514 = vpop.f32.mrf.mxu0
    %v2515 = vadd.f32 0.0, %v2514
    %v2516 = vpop.f32.mrf.mxu0
    %v2517 = vpop.f32.mrf.mxu0
    %v2518 = vpop.f32.mrf.mxu0
    %2519 = vdwg.mxu0
    %v2520 = vsel %vm1488, %v2515, -inf
    %2521 = vmax.xlane.f32.xlu0 %v2520
    %v2522 = vpop.xlane.xlu0 %2521
    %v2523 = vsub.f32 %v2515, %v2522
    %v2524 = vmul.f32 %v2523, 1.442695
    %v2525 = vpow.pop %v2524
    %v2526 = vsel %vm1488, %v2525, 0.0
    %2527 = vadd.xlane.f32.xlu0 %v2526
    %v2528 = vpop.xlane.xlu0 %2527
    %v2529 = vrcp.pop %v2528
    %v2530 = vmul.f32 %v2525, %v2529
    %v2531 = vpack.c.bf16 %v2530, %v2530
    %v2533 = vsel %vm1488, %v2531, 0
    %v2536 = vsel %vm1504, %v2479, 0
    %2538 = vmatprep.subr.bf16.mxu0 0
    %2539 = vmatpush1.bf16.msra.mxu0 0
    %2540 = vmatprep.subr.bf16.mxu0 0
    %2541 = vmatpush1.bf16.msra.mxu0 0
    %2542 = vmatprep.subr.bf16.mxu0 0
    %2543 = vmatpush1.bf16.msra.mxu0 0
    %2544 = vmatprep.subr.bf16.mxu0 0
    %2545 = vmatpush1.bf16.msra.mxu0 0
    %2546 = vmatprep.subr.bf16.mxu0 0
    %2547 = vmatpush1.bf16.msra.mxu0 0
    %2548 = vmatprep.subr.bf16.mxu0 0
    %2549 = vmatpush1.bf16.msra.mxu0 0
    %2550 = vmatprep.subr.bf16.mxu0 0
    %2551 = vmatpush1.bf16.msra.mxu0 0
    %2552 = vmatprep.subr.bf16.mxu0 0
    %2553 = vmatpush1.bf16.msra.mxu0 %v2536
    %2554 = vmatprep.subr.bf16.mxu0 0
    %2555 = vmatpush2.bf16.msra.mxu0 0
    %2556 = vmatprep.subr.bf16.mxu0 0
    %2557 = vmatpush2.bf16.msra.mxu0 0
    %2558 = vmatprep.subr.bf16.mxu0 0
    %2559 = vmatpush2.bf16.msra.mxu0 0
    %2560 = vmatprep.subr.bf16.mxu0 0
    %2561 = vmatpush2.bf16.msra.mxu0 0
    %2562 = vmatprep.subr.bf16.mxu0 0
    %2563 = vmatpush2.bf16.msra.mxu0 0
    %2564 = vmatprep.subr.bf16.mxu0 0
    %2565 = vmatpush2.bf16.msra.mxu0 0
    %2566 = vmatprep.subr.bf16.mxu0 0
    %2567 = vmatpush2.bf16.msra.mxu0 0
    %2568 = vmatprep.subr.bf16.mxu0 0
    %2569 = vmatpush2.bf16.msra.mxu0 0
    %2570 = vmatprep.mubr.bf16.mxu0 0
    %2571 = vmatmul.mubr.bf16.gmra.mxu0 %v2533
    %v2572 = vpop.f32.mrf.mxu0
    %v2573 = vadd.f32 0.0, %v2572
    %v2574 = vpop.f32.mrf.mxu0
    %v2575 = vpop.f32.mrf.mxu0
    %v2576 = vpop.f32.mrf.mxu0
    %2577 = vdwg.mxu0
    %v2578 = vpack.c.bf16 %v2573, %v2573
    %2579 = vst [vmem:[#allocation3 + $0x28] sm:$0xf] %v2578
    %v2580 = vld [vmem:[#allocation2 + $0x5c] sm:$0xf]
    %v2581 = vld [vmem:[#allocation2 + $0x74] sm:$0xf]
    %v2582 = vld [vmem:[#allocation2 + $0x8c] sm:$0xf]
    %2583 = vmatprep.subr.bf16.mxu0 0
    %2584 = vmatpush1.bf16.xpose.msra.mxu0 0
    %2585 = vmatprep.subr.bf16.mxu0 0
    %2586 = vmatpush1.bf16.xpose.msra.mxu0 0
    %2587 = vmatprep.subr.bf16.mxu0 0
    %2588 = vmatpush1.bf16.xpose.msra.mxu0 0
    %2589 = vmatprep.subr.bf16.mxu0 0
    %2590 = vmatpush1.bf16.xpose.msra.mxu0 0
    %2591 = vmatprep.subr.bf16.mxu0 0
    %2592 = vmatpush1.bf16.xpose.msra.mxu0 0
    %2593 = vmatprep.subr.bf16.mxu0 0
    %2594 = vmatpush1.bf16.xpose.msra.mxu0 0
    %2595 = vmatprep.subr.bf16.mxu0 0
    %2596 = vmatpush1.bf16.xpose.msra.mxu0 0
    %2597 = vmatprep.subr.bf16.mxu0 0
    %2598 = vmatpush1.bf16.xpose.msra.mxu0 %v2580
    %2599 = vmatprep.subr.bf16.mxu0 0
    %2600 = vmatpush2.bf16.xpose.msra.mxu0 0
    %2601 = vmatprep.subr.bf16.mxu0 0
    %2602 = vmatpush2.bf16.xpose.msra.mxu0 0
    %2603 = vmatprep.subr.bf16.mxu0 0
    %2604 = vmatpush2.bf16.xpose.msra.mxu0 0
    %2605 = vmatprep.subr.bf16.mxu0 0
    %2606 = vmatpush2.bf16.xpose.msra.mxu0 0
    %2607 = vmatprep.subr.bf16.mxu0 0
    %2608 = vmatpush2.bf16.xpose.msra.mxu0 0
    %2609 = vmatprep.subr.bf16.mxu0 0
    %2610 = vmatpush2.bf16.xpose.msra.mxu0 0
    %2611 = vmatprep.subr.bf16.mxu0 0
    %2612 = vmatpush2.bf16.xpose.msra.mxu0 0
    %2613 = vmatprep.subr.bf16.mxu0 0
    %2614 = vmatpush2.bf16.xpose.msra.mxu0 0
    %2615 = vmatprep.mubr.bf16.mxu0 0
    %2616 = vmatmul.mubr.bf16.gmra.mxu0 %v2581
    %v2617 = vpop.f32.mrf.mxu0
    %v2618 = vadd.f32 0.0, %v2617
    %v2619 = vpop.f32.mrf.mxu0
    %v2620 = vpop.f32.mrf.mxu0
    %v2621 = vpop.f32.mrf.mxu0
    %2622 = vdwg.mxu0
    %v2623 = vsel %vm1488, %v2618, -inf
    %2624 = vmax.xlane.f32.xlu0 %v2623
    %v2625 = vpop.xlane.xlu0 %2624
    %v2626 = vsub.f32 %v2618, %v2625
    %v2627 = vmul.f32 %v2626, 1.442695
    %v2628 = vpow.pop %v2627
    %v2629 = vsel %vm1488, %v2628, 0.0
    %2630 = vadd.xlane.f32.xlu0 %v2629
    %v2631 = vpop.xlane.xlu0 %2630
    %v2632 = vrcp.pop %v2631
    %v2633 = vmul.f32 %v2628, %v2632
    %v2634 = vpack.c.bf16 %v2633, %v2633
    %v2636 = vsel %vm1488, %v2634, 0
    %v2639 = vsel %vm1504, %v2582, 0
    %2641 = vmatprep.subr.bf16.mxu0 0
    %2642 = vmatpush1.bf16.msra.mxu0 0
    %2643 = vmatprep.subr.bf16.mxu0 0
    %2644 = vmatpush1.bf16.msra.mxu0 0
    %2645 = vmatprep.subr.bf16.mxu0 0
    %2646 = vmatpush1.bf16.msra.mxu0 0
    %2647 = vmatprep.subr.bf16.mxu0 0
    %2648 = vmatpush1.bf16.msra.mxu0 0
    %2649 = vmatprep.subr.bf16.mxu0 0
    %2650 = vmatpush1.bf16.msra.mxu0 0
    %2651 = vmatprep.subr.bf16.mxu0 0
    %2652 = vmatpush1.bf16.msra.mxu0 0
    %2653 = vmatprep.subr.bf16.mxu0 0
    %2654 = vmatpush1.bf16.msra.mxu0 0
    %2655 = vmatprep.subr.bf16.mxu0 0
    %2656 = vmatpush1.bf16.msra.mxu0 %v2639
    %2657 = vmatprep.subr.bf16.mxu0 0
    %2658 = vmatpush2.bf16.msra.mxu0 0
    %2659 = vmatprep.subr.bf16.mxu0 0
    %2660 = vmatpush2.bf16.msra.mxu0 0
    %2661 = vmatprep.subr.bf16.mxu0 0
    %2662 = vmatpush2.bf16.msra.mxu0 0
    %2663 = vmatprep.subr.bf16.mxu0 0
    %2664 = vmatpush2.bf16.msra.mxu0 0
    %2665 = vmatprep.subr.bf16.mxu0 0
    %2666 = vmatpush2.bf16.msra.mxu0 0
    %2667 = vmatprep.subr.bf16.mxu0 0
    %2668 = vmatpush2.bf16.msra.mxu0 0
    %2669 = vmatprep.subr.bf16.mxu0 0
    %2670 = vmatpush2.bf16.msra.mxu0 0
    %2671 = vmatprep.subr.bf16.mxu0 0
    %2672 = vmatpush2.bf16.msra.mxu0 0
    %2673 = vmatprep.mubr.bf16.mxu0 0
    %2674 = vmatmul.mubr.bf16.gmra.mxu0 %v2636
    %v2675 = vpop.f32.mrf.mxu0
    %v2676 = vadd.f32 0.0, %v2675
    %v2677 = vpop.f32.mrf.mxu0
    %v2678 = vpop.f32.mrf.mxu0
    %v2679 = vpop.f32.mrf.mxu0
    %2680 = vdwg.mxu0
    %v2681 = vpack.c.bf16 %v2676, %v2676
    %2682 = vst [vmem:[#allocation3 + $0x2c] sm:$0xf] %v2681
    %v2683 = vld [vmem:[#allocation3] sm:$0xff]
    %v2684 = vld [vmem:[#allocation3 + $0x8] sm:$0xff]
    %v2685 = vld [vmem:[#allocation3 + $0x10] sm:$0xff]
    %v2686 = vld [vmem:[#allocation3 + $0x18] sm:$0xff]
    %v2687 = vld [vmem:[#allocation3 + $0x20] sm:$0xff]
    %v2688 = vld [vmem:[#allocation3 + $0x28] sm:$0xff]
    %v2689 = vld [vmem:[#allocation9] sm:$0xf]
    %v2690 = vld [vmem:[#allocation9 + $0x4] sm:$0xf]
    %v2691 = vld [vmem:[#allocation9 + $0x8] sm:$0xf]
    %v2692 = vld [vmem:[#allocation9 + $0xc] sm:$0xf]
    %v2693 = vld [vmem:[#allocation9 + $0x10] sm:$0xf]
    %v2694 = vld [vmem:[#allocation9 + $0x14] sm:$0xf]
    %v2695 = vld [vmem:[#allocation9 + $0x18] sm:$0xf]
    %v2696 = vld [vmem:[#allocation9 + $0x1c] sm:$0xf]
    %v2697 = vld [vmem:[#allocation9 + $0x20] sm:$0xf]
    %v2698 = vld [vmem:[#allocation9 + $0x24] sm:$0xf]
    %v2699 = vld [vmem:[#allocation9 + $0x28] sm:$0xf]
    %v2700 = vld [vmem:[#allocation9 + $0x2c] sm:$0xf]
    %v2701 = vld [vmem:[#allocation9 + $0x30] sm:$0xf]
    %v2702 = vld [vmem:[#allocation9 + $0x34] sm:$0xf]
    %v2703 = vld [vmem:[#allocation9 + $0x38] sm:$0xf]
    %v2704 = vld [vmem:[#allocation9 + $0x3c] sm:$0xf]
    %v2705 = vld [vmem:[#allocation9 + $0x40] sm:$0xf]
    %v2706 = vld [vmem:[#allocation9 + $0x44] sm:$0xf]
    %v2707 = vld [vmem:[#allocation9 + $0x48] sm:$0xf]
    %v2708 = vld [vmem:[#allocation9 + $0x4c] sm:$0xf]
    %v2709 = vld [vmem:[#allocation9 + $0x50] sm:$0xf]
    %v2710 = vld [vmem:[#allocation9 + $0x54] sm:$0xf]
    %v2711 = vld [vmem:[#allocation9 + $0x58] sm:$0xf]
    %v2712 = vld [vmem:[#allocation9 + $0x5c] sm:$0xf]
    %v2713 = vld [vmem:[#allocation9 + $0x60] sm:$0xf]
    %v2714 = vld [vmem:[#allocation9 + $0x64] sm:$0xf]
    %v2715 = vld [vmem:[#allocation9 + $0x68] sm:$0xf]
    %v2716 = vld [vmem:[#allocation9 + $0x6c] sm:$0xf]
    %v2717 = vld [vmem:[#allocation9 + $0x70] sm:$0xf]
    %v2718 = vld [vmem:[#allocation9 + $0x74] sm:$0xf]
    %v2719 = vld [vmem:[#allocation9 + $0x78] sm:$0xf]
    %v2720 = vld [vmem:[#allocation9 + $0x7c] sm:$0xf]
    %v2721 = vld [vmem:[#allocation9 + $0x80] sm:$0xf]
    %v2722 = vld [vmem:[#allocation9 + $0x84] sm:$0xf]
    %v2723 = vld [vmem:[#allocation9 + $0x88] sm:$0xf]
    %v2724 = vld [vmem:[#allocation9 + $0x8c] sm:$0xf]
    %v2725 = vld [vmem:[#allocation9 + $0x90] sm:$0xf]
    %v2726 = vld [vmem:[#allocation9 + $0x94] sm:$0xf]
    %v2727 = vld [vmem:[#allocation9 + $0x98] sm:$0xf]
    %v2728 = vld [vmem:[#allocation9 + $0x9c] sm:$0xf]
    %v2729 = vld [vmem:[#allocation9 + $0xa0] sm:$0xf]
    %v2730 = vld [vmem:[#allocation9 + $0xa4] sm:$0xf]
    %v2731 = vld [vmem:[#allocation9 + $0xa8] sm:$0xf]
    %v2732 = vld [vmem:[#allocation9 + $0xac] sm:$0xf]
    %v2733 = vld [vmem:[#allocation9 + $0xb0] sm:$0xf]
    %v2734 = vld [vmem:[#allocation9 + $0xb4] sm:$0xf]
    %v2735 = vld [vmem:[#allocation9 + $0xb8] sm:$0xf]
    %v2736 = vld [vmem:[#allocation9 + $0xbc] sm:$0xf]
    %v2737 = vld [vmem:[#allocation9 + $0xc0] sm:$0xf]
    %v2738 = vld [vmem:[#allocation9 + $0xc4] sm:$0xf]
    %v2739 = vld [vmem:[#allocation9 + $0xc8] sm:$0xf]
    %v2740 = vld [vmem:[#allocation9 + $0xcc] sm:$0xf]
    %v2741 = vld [vmem:[#allocation9 + $0xd0] sm:$0xf]
    %v2742 = vld [vmem:[#allocation9 + $0xd4] sm:$0xf]
    %v2743 = vld [vmem:[#allocation9 + $0xd8] sm:$0xf]
    %v2744 = vld [vmem:[#allocation9 + $0xdc] sm:$0xf]
    %v2745 = vld [vmem:[#allocation9 + $0xe0] sm:$0xf]
    %v2746 = vld [vmem:[#allocation9 + $0xe4] sm:$0xf]
    %v2747 = vld [vmem:[#allocation9 + $0xe8] sm:$0xf]
    %v2748 = vld [vmem:[#allocation9 + $0xec] sm:$0xf]
    %v2749 = vld [vmem:[#allocation9 + $0xf0] sm:$0xf]
    %v2750 = vld [vmem:[#allocation9 + $0xf4] sm:$0xf]
    %v2751 = vld [vmem:[#allocation9 + $0xf8] sm:$0xf]
    %v2752 = vld [vmem:[#allocation9 + $0xfc] sm:$0xf]
    %v2753 = vld [vmem:[#allocation9 + $0x100] sm:$0xf]
    %v2754 = vld [vmem:[#allocation9 + $0x104] sm:$0xf]
    %v2755 = vld [vmem:[#allocation9 + $0x108] sm:$0xf]
    %v2756 = vld [vmem:[#allocation9 + $0x10c] sm:$0xf]
    %v2757 = vld [vmem:[#allocation9 + $0x110] sm:$0xf]
    %v2758 = vld [vmem:[#allocation9 + $0x114] sm:$0xf]
    %v2759 = vld [vmem:[#allocation9 + $0x118] sm:$0xf]
    %v2760 = vld [vmem:[#allocation9 + $0x11c] sm:$0xf]
    %v2761 = vld [vmem:[#allocation9 + $0x120] sm:$0xf]
    %v2762 = vld [vmem:[#allocation9 + $0x124] sm:$0xf]
    %v2763 = vld [vmem:[#allocation9 + $0x128] sm:$0xf]
    %v2764 = vld [vmem:[#allocation9 + $0x12c] sm:$0xf]
    %v2765 = vld [vmem:[#allocation9 + $0x130] sm:$0xf]
    %v2766 = vld [vmem:[#allocation9 + $0x134] sm:$0xf]
    %v2767 = vld [vmem:[#allocation9 + $0x138] sm:$0xf]
    %v2768 = vld [vmem:[#allocation9 + $0x13c] sm:$0xf]
    %v2769 = vld [vmem:[#allocation9 + $0x140] sm:$0xf]
    %v2770 = vld [vmem:[#allocation9 + $0x144] sm:$0xf]
    %v2771 = vld [vmem:[#allocation9 + $0x148] sm:$0xf]
    %v2772 = vld [vmem:[#allocation9 + $0x14c] sm:$0xf]
    %v2773 = vld [vmem:[#allocation9 + $0x150] sm:$0xf]
    %v2774 = vld [vmem:[#allocation9 + $0x154] sm:$0xf]
    %v2775 = vld [vmem:[#allocation9 + $0x158] sm:$0xf]
    %v2776 = vld [vmem:[#allocation9 + $0x15c] sm:$0xf]
    %v2777 = vld [vmem:[#allocation9 + $0x160] sm:$0xf]
    %v2778 = vld [vmem:[#allocation9 + $0x164] sm:$0xf]
    %v2779 = vld [vmem:[#allocation9 + $0x168] sm:$0xf]
    %v2780 = vld [vmem:[#allocation9 + $0x16c] sm:$0xf]
    %v2781 = vld [vmem:[#allocation9 + $0x170] sm:$0xf]
    %v2782 = vld [vmem:[#allocation9 + $0x174] sm:$0xf]
    %v2783 = vld [vmem:[#allocation9 + $0x178] sm:$0xf]
    %v2784 = vld [vmem:[#allocation9 + $0x17c] sm:$0xf]
    %v2785 = vld [vmem:[%s3] sm:$0x1]
    %v2787 = vlaneseq
    %v2788 = vshrl.u32 %v2787, 7
    %v2789 = vsub.s32 0, %v2788
    %v2790 = vrot.slane %v2785, %v2789
    %v2798 = vunpack.c.l.b16 %v2683
    %v2799 = vunpack.c.h.b16 %v2683
    %v2800 = vunpack.c.l.b16 %v2684
    %v2801 = vunpack.c.h.b16 %v2684
    %v2802 = vunpack.c.l.b16 %v2685
    %v2803 = vunpack.c.h.b16 %v2685
    %v2804 = vunpack.c.l.b16 %v2686
    %v2805 = vunpack.c.h.b16 %v2686
    %v2806 = vunpack.c.l.b16 %v2687
    %v2807 = vunpack.c.h.b16 %v2687
    %v2808 = vunpack.c.l.b16 %v2688
    %v2809 = vunpack.c.h.b16 %v2688
    %v2810 = vpack.c.b16 %v2804, %v2798
    %v2811 = vpack.c.b16 %v2805, %v2799
    %v2812 = vpack.c.b16 %v2806, %v2800
    %v2813 = vpack.c.b16 %v2807, %v2801
    %v2814 = vpack.c.b16 %v2808, %v2802
    %v2815 = vpack.c.b16 %v2809, %v2803
    %v2918 = vunpack.c.l.b16 %v2689
    %v2919 = vunpack.c.l.b16 %v2690
    %v2920 = vunpack.c.l.b16 %v2691
    %v2921 = vunpack.c.l.b16 %v2692
    %v2922 = vunpack.c.l.b16 %v2693
    %v2923 = vunpack.c.l.b16 %v2694
    %v2924 = vunpack.c.l.b16 %v2695
    %v2925 = vunpack.c.l.b16 %v2696
    %v2926 = vunpack.c.l.b16 %v2697
    %v2927 = vunpack.c.l.b16 %v2698
    %v2928 = vunpack.c.l.b16 %v2699
    %v2929 = vunpack.c.l.b16 %v2700
    %v2930 = vunpack.c.l.b16 %v2701
    %v2931 = vunpack.c.l.b16 %v2702
    %v2932 = vunpack.c.l.b16 %v2703
    %v2933 = vunpack.c.l.b16 %v2704
    %v2934 = vunpack.c.l.b16 %v2705
    %v2935 = vunpack.c.l.b16 %v2706
    %v2936 = vunpack.c.l.b16 %v2707
    %v2937 = vunpack.c.l.b16 %v2708
    %v2938 = vunpack.c.l.b16 %v2709
    %v2939 = vunpack.c.l.b16 %v2710
    %v2940 = vunpack.c.l.b16 %v2711
    %v2941 = vunpack.c.l.b16 %v2712
    %v2942 = vunpack.c.l.b16 %v2713
    %v2943 = vunpack.c.l.b16 %v2714
    %v2944 = vunpack.c.l.b16 %v2715
    %v2945 = vunpack.c.l.b16 %v2716
    %v2946 = vunpack.c.l.b16 %v2717
    %v2947 = vunpack.c.l.b16 %v2718
    %v2948 = vunpack.c.l.b16 %v2719
    %v2949 = vunpack.c.l.b16 %v2720
    %v2950 = vunpack.c.l.b16 %v2721
    %v2951 = vunpack.c.l.b16 %v2722
    %v2952 = vunpack.c.l.b16 %v2723
    %v2953 = vunpack.c.l.b16 %v2724
    %v2954 = vunpack.c.l.b16 %v2725
    %v2955 = vunpack.c.l.b16 %v2726
    %v2956 = vunpack.c.l.b16 %v2727
    %v2957 = vunpack.c.l.b16 %v2728
    %v2958 = vunpack.c.l.b16 %v2729
    %v2959 = vunpack.c.l.b16 %v2730
    %v2960 = vunpack.c.l.b16 %v2731
    %v2961 = vunpack.c.l.b16 %v2732
    %v2962 = vunpack.c.l.b16 %v2733
    %v2963 = vunpack.c.l.b16 %v2734
    %v2964 = vunpack.c.l.b16 %v2735
    %v2965 = vunpack.c.l.b16 %v2736
    %v2966 = vunpack.c.l.b16 %v2737
    %v2967 = vunpack.c.l.b16 %v2738
    %v2968 = vunpack.c.l.b16 %v2739
    %v2969 = vunpack.c.l.b16 %v2740
    %v2970 = vunpack.c.l.b16 %v2741
    %v2971 = vunpack.c.l.b16 %v2742
    %v2972 = vunpack.c.l.b16 %v2743
    %v2973 = vunpack.c.l.b16 %v2744
    %v2974 = vunpack.c.l.b16 %v2745
    %v2975 = vunpack.c.l.b16 %v2746
    %v2976 = vunpack.c.l.b16 %v2747
    %v2977 = vunpack.c.l.b16 %v2748
    %v2978 = vunpack.c.l.b16 %v2749
    %v2979 = vunpack.c.l.b16 %v2750
    %v2980 = vunpack.c.l.b16 %v2751
    %v2981 = vunpack.c.l.b16 %v2752
    %v2982 = vunpack.c.l.b16 %v2753
    %v2983 = vunpack.c.l.b16 %v2754
    %v2984 = vunpack.c.l.b16 %v2755
    %v2985 = vunpack.c.l.b16 %v2756
    %v2986 = vunpack.c.l.b16 %v2757
    %v2987 = vunpack.c.l.b16 %v2758
    %v2988 = vunpack.c.l.b16 %v2759
    %v2989 = vunpack.c.l.b16 %v2760
    %v2990 = vunpack.c.l.b16 %v2761
    %v2991 = vunpack.c.l.b16 %v2762
    %v2992 = vunpack.c.l.b16 %v2763
    %v2993 = vunpack.c.l.b16 %v2764
    %v2994 = vunpack.c.l.b16 %v2765
    %v2995 = vunpack.c.l.b16 %v2766
    %v2996 = vunpack.c.l.b16 %v2767
    %v2997 = vunpack.c.l.b16 %v2768
    %v2998 = vunpack.c.l.b16 %v2769
    %v2999 = vunpack.c.l.b16 %v2770
    %v3000 = vunpack.c.l.b16 %v2771
    %v3001 = vunpack.c.l.b16 %v2772
    %v3002 = vunpack.c.l.b16 %v2773
    %v3003 = vunpack.c.l.b16 %v2774
    %v3004 = vunpack.c.l.b16 %v2775
    %v3005 = vunpack.c.l.b16 %v2776
    %v3006 = vunpack.c.l.b16 %v2777
    %v3007 = vunpack.c.l.b16 %v2778
    %v3008 = vunpack.c.l.b16 %v2779
    %v3009 = vunpack.c.l.b16 %v2780
    %v3010 = vunpack.c.l.b16 %v2781
    %v3011 = vunpack.c.l.b16 %v2782
    %v3012 = vunpack.c.l.b16 %v2783
    %v3013 = vunpack.c.l.b16 %v2784
    %v3014 = vpack.c.b16 %v2919, %v2918
    %v3015 = vpack.c.b16 %v2921, %v2920
    %v3016 = vpack.c.b16 %v2923, %v2922
    %v3017 = vpack.c.b16 %v2925, %v2924
    %v3018 = vpack.c.b16 %v2927, %v2926
    %v3019 = vpack.c.b16 %v2929, %v2928
    %v3020 = vpack.c.b16 %v2931, %v2930
    %v3021 = vpack.c.b16 %v2933, %v2932
    %v3022 = vpack.c.b16 %v2935, %v2934
    %v3023 = vpack.c.b16 %v2937, %v2936
    %v3024 = vpack.c.b16 %v2939, %v2938
    %v3025 = vpack.c.b16 %v2941, %v2940
    %v3026 = vpack.c.b16 %v2943, %v2942
    %v3027 = vpack.c.b16 %v2945, %v2944
    %v3028 = vpack.c.b16 %v2947, %v2946
    %v3029 = vpack.c.b16 %v2949, %v2948
    %v3030 = vpack.c.b16 %v2951, %v2950
    %v3031 = vpack.c.b16 %v2953, %v2952
    %v3032 = vpack.c.b16 %v2955, %v2954
    %v3033 = vpack.c.b16 %v2957, %v2956
    %v3034 = vpack.c.b16 %v2959, %v2958
    %v3035 = vpack.c.b16 %v2961, %v2960
    %v3036 = vpack.c.b16 %v2963, %v2962
    %v3037 = vpack.c.b16 %v2965, %v2964
    %v3038 = vpack.c.b16 %v2967, %v2966
    %v3039 = vpack.c.b16 %v2969, %v2968
    %v3040 = vpack.c.b16 %v2971, %v2970
    %v3041 = vpack.c.b16 %v2973, %v2972
    %v3042 = vpack.c.b16 %v2975, %v2974
    %v3043 = vpack.c.b16 %v2977, %v2976
    %v3044 = vpack.c.b16 %v2979, %v2978
    %v3045 = vpack.c.b16 %v2981, %v2980
    %v3046 = vpack.c.b16 %v2983, %v2982
    %v3047 = vpack.c.b16 %v2985, %v2984
    %v3048 = vpack.c.b16 %v2987, %v2986
    %v3049 = vpack.c.b16 %v2989, %v2988
    %v3050 = vpack.c.b16 %v2991, %v2990
    %v3051 = vpack.c.b16 %v2993, %v2992
    %v3052 = vpack.c.b16 %v2995, %v2994
    %v3053 = vpack.c.b16 %v2997, %v2996
    %v3054 = vpack.c.b16 %v2999, %v2998
    %v3055 = vpack.c.b16 %v3001, %v3000
    %v3056 = vpack.c.b16 %v3003, %v3002
    %v3057 = vpack.c.b16 %v3005, %v3004
    %v3058 = vpack.c.b16 %v3007, %v3006
    %v3059 = vpack.c.b16 %v3009, %v3008
    %v3060 = vpack.c.b16 %v3011, %v3010
    %v3061 = vpack.c.b16 %v3013, %v3012
    %3110 = vmatprep.subr.bf16.mxu0 0
    %3111 = vmatpush1.bf16.msra.mxu0 %v3021
    %3112 = vmatprep.subr.bf16.mxu0 0
    %3113 = vmatpush1.bf16.msra.mxu0 %v3020
    %3114 = vmatprep.subr.bf16.mxu0 0
    %3115 = vmatpush1.bf16.msra.mxu0 %v3019
    %3116 = vmatprep.subr.bf16.mxu0 0
    %3117 = vmatpush1.bf16.msra.mxu0 %v3018
    %3118 = vmatprep.subr.bf16.mxu0 0
    %3119 = vmatpush1.bf16.msra.mxu0 %v3017
    %3120 = vmatprep.subr.bf16.mxu0 0
    %3121 = vmatpush1.bf16.msra.mxu0 %v3016
    %3122 = vmatprep.subr.bf16.mxu0 0
    %3123 = vmatpush1.bf16.msra.mxu0 %v3015
    %3124 = vmatprep.subr.bf16.mxu0 0
    %3125 = vmatpush1.bf16.msra.mxu0 %v3014
    %3126 = vmatprep.subr.bf16.mxu0 0
    %3127 = vmatpush2.bf16.msra.mxu0 %v3029
    %3128 = vmatprep.subr.bf16.mxu0 0
    %3129 = vmatpush2.bf16.msra.mxu0 %v3028
    %3130 = vmatprep.subr.bf16.mxu0 0
    %3131 = vmatpush2.bf16.msra.mxu0 %v3027
    %3132 = vmatprep.subr.bf16.mxu0 0
    %3133 = vmatpush2.bf16.msra.mxu0 %v3026
    %3134 = vmatprep.subr.bf16.mxu0 0
    %3135 = vmatpush2.bf16.msra.mxu0 %v3025
    %3136 = vmatprep.subr.bf16.mxu0 0
    %3137 = vmatpush2.bf16.msra.mxu0 %v3024
    %3138 = vmatprep.subr.bf16.mxu0 0
    %3139 = vmatpush2.bf16.msra.mxu0 %v3023
    %3140 = vmatprep.subr.bf16.mxu0 0
    %3141 = vmatpush2.bf16.msra.mxu0 %v3022
    %3142 = vmatprep.mubr.bf16.mxu0 %v2811
    %3143 = vmatmul.mubr.bf16.gmra.mxu0 %v2810
    %v3144 = vpop.f32.mrf.mxu0
    %v3145 = vadd.f32 %v2790, %v3144
    %v3146 = vpop.f32.mrf.mxu0
    %v3147 = vpop.f32.mrf.mxu0
    %v3148 = vadd.f32 %v2790, %v3147
    %v3149 = vpop.f32.mrf.mxu0
    %3150 = vdwg.mxu0
    %3151 = vmatprep.subr.bf16.mxu0 0
    %3152 = vmatpush1.bf16.msra.mxu0 %v3037
    %3153 = vmatprep.subr.bf16.mxu0 0
    %3154 = vmatpush1.bf16.msra.mxu0 %v3036
    %3155 = vmatprep.subr.bf16.mxu0 0
    %3156 = vmatpush1.bf16.msra.mxu0 %v3035
    %3157 = vmatprep.subr.bf16.mxu0 0
    %3158 = vmatpush1.bf16.msra.mxu0 %v3034
    %3159 = vmatprep.subr.bf16.mxu0 0
    %3160 = vmatpush1.bf16.msra.mxu0 %v3033
    %3161 = vmatprep.subr.bf16.mxu0 0
    %3162 = vmatpush1.bf16.msra.mxu0 %v3032
    %3163 = vmatprep.subr.bf16.mxu0 0
    %3164 = vmatpush1.bf16.msra.mxu0 %v3031
    %3165 = vmatprep.subr.bf16.mxu0 0
    %3166 = vmatpush1.bf16.msra.mxu0 %v3030
    %3167 = vmatprep.subr.bf16.mxu0 0
    %3168 = vmatpush2.bf16.msra.mxu0 %v3045
    %3169 = vmatprep.subr.bf16.mxu0 0
    %3170 = vmatpush2.bf16.msra.mxu0 %v3044
    %3171 = vmatprep.subr.bf16.mxu0 0
    %3172 = vmatpush2.bf16.msra.mxu0 %v3043
    %3173 = vmatprep.subr.bf16.mxu0 0
    %3174 = vmatpush2.bf16.msra.mxu0 %v3042
    %3175 = vmatprep.subr.bf16.mxu0 0
    %3176 = vmatpush2.bf16.msra.mxu0 %v3041
    %3177 = vmatprep.subr.bf16.mxu0 0
    %3178 = vmatpush2.bf16.msra.mxu0 %v3040
    %3179 = vmatprep.subr.bf16.mxu0 0
    %3180 = vmatpush2.bf16.msra.mxu0 %v3039
    %3181 = vmatprep.subr.bf16.mxu0 0
    %3182 = vmatpush2.bf16.msra.mxu0 %v3038
    %3183 = vmatprep.mubr.bf16.mxu0 %v2813
    %3184 = vmatmul.mubr.bf16.gmra.mxu0 %v2812
    %v3185 = vpop.f32.mrf.mxu0
    %v3186 = vadd.f32 %v3145, %v3185
    %v3187 = vpop.f32.mrf.mxu0
    %v3188 = vpop.f32.mrf.mxu0
    %v3189 = vadd.f32 %v3148, %v3188
    %v3190 = vpop.f32.mrf.mxu0
    %3191 = vdwg.mxu0
    %3192 = vmatprep.subr.bf16.mxu0 0
    %3193 = vmatpush1.bf16.msra.mxu0 %v3053
    %3194 = vmatprep.subr.bf16.mxu0 0
    %3195 = vmatpush1.bf16.msra.mxu0 %v3052
    %3196 = vmatprep.subr.bf16.mxu0 0
    %3197 = vmatpush1.bf16.msra.mxu0 %v3051
    %3198 = vmatprep.subr.bf16.mxu0 0
    %3199 = vmatpush1.bf16.msra.mxu0 %v3050
    %3200 = vmatprep.subr.bf16.mxu0 0
    %3201 = vmatpush1.bf16.msra.mxu0 %v3049
    %3202 = vmatprep.subr.bf16.mxu0 0
    %3203 = vmatpush1.bf16.msra.mxu0 %v3048
    %3204 = vmatprep.subr.bf16.mxu0 0
    %3205 = vmatpush1.bf16.msra.mxu0 %v3047
    %3206 = vmatprep.subr.bf16.mxu0 0
    %3207 = vmatpush1.bf16.msra.mxu0 %v3046
    %3208 = vmatprep.subr.bf16.mxu0 0
    %3209 = vmatpush2.bf16.msra.mxu0 %v3061
    %3210 = vmatprep.subr.bf16.mxu0 0
    %3211 = vmatpush2.bf16.msra.mxu0 %v3060
    %3212 = vmatprep.subr.bf16.mxu0 0
    %3213 = vmatpush2.bf16.msra.mxu0 %v3059
    %3214 = vmatprep.subr.bf16.mxu0 0
    %3215 = vmatpush2.bf16.msra.mxu0 %v3058
    %3216 = vmatprep.subr.bf16.mxu0 0
    %3217 = vmatpush2.bf16.msra.mxu0 %v3057
    %3218 = vmatprep.subr.bf16.mxu0 0
    %3219 = vmatpush2.bf16.msra.mxu0 %v3056
    %3220 = vmatprep.subr.bf16.mxu0 0
    %3221 = vmatpush2.bf16.msra.mxu0 %v3055
    %3222 = vmatprep.subr.bf16.mxu0 0
    %3223 = vmatpush2.bf16.msra.mxu0 %v3054
    %3224 = vmatprep.mubr.bf16.mxu0 %v2815
    %3225 = vmatmul.mubr.bf16.gmra.mxu0 %v2814
    %v3226 = vpop.f32.mrf.mxu0
    %v3227 = vadd.f32 %v3186, %v3226
    %v3228 = vpop.f32.mrf.mxu0
    %v3229 = vpop.f32.mrf.mxu0
    %v3230 = vadd.f32 %v3189, %v3229
    %v3231 = vpop.f32.mrf.mxu0
    %3232 = vdwg.mxu0
    %3233 = vst [vmem:[#allocation10] sm:$0xff] %v3227
    %3234 = vst [vmem:[#allocation10 + $0x8] sm:$0xff] %v3230
    // Predicated region
    $region30: #{tpu_custom_call.1} parent=1 // pred_check
      _
    $region31: #{tpu_custom_call.1} parent=1 // pred_check_branch
      %3236 = sbr.rel (0) target = $region33
    $region32: #{tpu_custom_call.1} parent=1 // pred_region
      %s3238 = ssub.s32 256, 256
      %3239 = vsyncadd [#allocation6], %s3238
      %s3240 = sshll.u32 [#allocation10], 4
      %s3241 = int_to_ptr.vmem [resolvable:$true] %s3240
      %3246 = dma.vmem_to_hbm [thread:$0]  %s3241, 256, %s4, [#allocation6], 128, 128, 8
    $region33: #{tpu_custom_call.1} parent=1 // pred_fallthru
      _
    // Predicated region
    $region34: #{tpu_custom_call.1} parent=1 // pred_check
      _
    $region35: #{tpu_custom_call.1} parent=1 // pred_check_branch
      %3248 = sbr.rel (0) target = $region37
    $region36: #{tpu_custom_call.1} parent=1 // pred_region
      %3249 = dma.done [#allocation6], 256
    $region37: #{tpu_custom_call.1} parent=1 // pred_fallthru
      _
    %3250 = vsyncpa [#allocation5], 1
    %3251 = vsyncpa [#allocation8], 1
    %3252 = vsyncpa [#allocation6], 1

</llo_original>
